<compile_context>
chip_gen: v6e
topology: v6e:2x2x1
jax: 0.10.0
libtpu: 0.0.40
codegen_flags: <defaults>
</compile_context>

<pallas_src>
import functools

import jax
import jax.numpy as jnp
from jax.experimental import pallas as pl
from jax.experimental.pallas import tpu as pltpu


def _round_up(n, m):
    return ((n + m - 1) // m) * m


def _layer_norm_1pass(x, gamma, beta, eps=1e-5):
    """Single-pass LayerNorm: var = E[x^2] - E[x]^2, gamma fused into scale."""
    n = x.shape[-1]
    s = jnp.sum(x, axis=-1, keepdims=True)
    ss = jnp.sum(x * x, axis=-1, keepdims=True)
    mu = s * (1.0 / n)
    var = ss * (1.0 / n) - mu * mu
    inv = jax.lax.rsqrt(var + eps)
    return (x - mu) * (inv * gamma) + beta


def actor_kernel(state_ref, act_ref,
                 g1s_ref, g1a_ref, be1s_ref, be1a_ref,
                 w1s_ref, w1a_ref, b1_ref,
                 g2_ref, be2_ref, w2_ref, b2_ref,
                 g3_ref, be3_ref, w3_ref, b3_ref,
                 out_ref, *, phi, max_action, d0):
    st = state_ref[...]
    ac = act_ref[...]
    bf16 = jnp.bfloat16

    # ---- norm1 over the (virtual) concat [state, action]: combine stats
    s = jnp.sum(st, axis=-1, keepdims=True) + jnp.sum(ac, axis=-1, keepdims=True)
    ss = (jnp.sum(st * st, axis=-1, keepdims=True)
          + jnp.sum(ac * ac, axis=-1, keepdims=True))
    inv_n = 1.0 / d0
    mu = s * inv_n
    var = ss * inv_n - mu * mu
    inv = jax.lax.rsqrt(var + 1e-5)
    st_n = (st - mu) * (inv * g1s_ref[...]) + be1s_ref[...]
    ac_n = (ac - mu) * (inv * g1a_ref[...]) + be1a_ref[...]

    # ---- ln1 (split matmul over state/action halves) + relu
    h = (jnp.dot(st_n.astype(bf16), w1s_ref[...],
                 preferred_element_type=jnp.float32)
         + jnp.dot(ac_n.astype(bf16), w1a_ref[...],
                   preferred_element_type=jnp.float32)
         + b1_ref[...])
    h = jnp.maximum(h, 0.0)

    # ---- norm2 -> ln2 -> relu
    h = _layer_norm_1pass(h, g2_ref[...], be2_ref[...])
    h = jnp.dot(h.astype(bf16), w2_ref[...],
                preferred_element_type=jnp.float32) + b2_ref[...]
    h = jnp.maximum(h, 0.0)

    # ---- norm3 -> ln3 -> tanh -> scale
    h = _layer_norm_1pass(h, g3_ref[...], be3_ref[...])
    h = jnp.dot(h.astype(bf16), w3_ref[...],
                preferred_element_type=jnp.float32) + b3_ref[...]
    h = (phi * max_action) * jnp.tanh(h)

    # ---- residual add with action + clamp
    out_ref[...] = jnp.clip(h + ac, -max_action, max_action)


def actor_forward(state, action, params, *, max_action, phi=0.05, block_m=256):
    B, state_dim = state.shape
    _, action_dim = action.shape
    d0 = state_dim + action_dim

    # batch tile: multiple of 8 (sublane), capped by block_m; grid handles the rest
    bm = min(block_m, _round_up(B, 8))
    grid = (pl.cdiv(B, bm),)

    # split norm1 / ln1 params across the virtual concat [state, action];
    # matmul weights shipped as bf16 (halves weight DMA, f32 accumulation)
    g1s = params["g1"][:, :state_dim]
    g1a = params["g1"][:, state_dim:]
    be1s = params["be1"][:, :state_dim]
    be1a = params["be1"][:, state_dim:]
    w1s = params["w1"][:state_dim].astype(jnp.bfloat16)
    w1a = params["w1"][state_dim:].astype(jnp.bfloat16)
    w2 = params["w2"].astype(jnp.bfloat16)
    w3 = params["w3"].astype(jnp.bfloat16)

    operands = (state, action,
                g1s, g1a, be1s, be1a, w1s, w1a, params["b1"],
                params["g2"], params["be2"], w2, params["b2"],
                params["g3"], params["be3"], w3, params["b3"])

    def stream(feat):
        return pl.BlockSpec((bm, feat), lambda i: (i, 0))

    def resident(x):
        # same block every grid step -> stays in VMEM, no re-DMA
        return pl.BlockSpec(x.shape, lambda i: (0, 0))

    in_specs = ([stream(state_dim), stream(action_dim)]
                + [resident(x) for x in operands[2:]])
    # TODO(synk): output last dim is action_dim (<128) -> masked stores; bytes
    # are tiny here so a lane-padded output slab is not worth the extra slice.
    out_specs = pl.BlockSpec((bm, action_dim), lambda i: (i, 0))

    kernel = functools.partial(actor_kernel, phi=phi, max_action=max_action, d0=d0)

    return pl.pallas_call(
        kernel,
        out_shape=jax.ShapeDtypeStruct((B, action_dim), jnp.float32),
        grid_spec=pltpu.PrefetchScalarGridSpec(
            num_scalar_prefetch=0,
            grid=grid,
            in_specs=in_specs,
            out_specs=out_specs,
        ),
        compiler_params=pltpu.CompilerParams(
            dimension_semantics=("parallel",),      # megacore / v7x dual-TC
            vmem_limit_bytes=32 * 1024 * 1024,      # explicit for v5e/v7x
        ),
    )(*operands)


def init_params(key, state_dim, action_dim, hidden=256):
    d0 = state_dim + action_dim
    ks = jax.random.split(key, 6)

    def linear(kw, kb, fan_in, fan_out):
        bound = 1.0 / jnp.sqrt(fan_in)
        w = jax.random.uniform(kw, (fan_in, fan_out), jnp.float32, -bound, bound)
        b = jax.random.uniform(kb, (1, fan_out), jnp.float32, -bound, bound)
        return w, b

    w1, b1 = linear(ks[0], ks[1], d0, hidden)
    w2, b2 = linear(ks[2], ks[3], hidden, hidden)
    w3, b3 = linear(ks[4], ks[5], hidden, action_dim)

    return {
        "w1": w1, "b1": b1, "w2": w2, "b2": b2, "w3": w3, "b3": b3,
        # LayerNorm: gamma=1, beta=0 (PyTorch default init)
        "g1": jnp.ones((1, d0), jnp.float32), "be1": jnp.zeros((1, d0), jnp.float32),
        "g2": jnp.ones((1, hidden), jnp.float32), "be2": jnp.zeros((1, hidden), jnp.float32),
        "g3": jnp.ones((1, hidden), jnp.float32), "be3": jnp.zeros((1, hidden), jnp.float32),
    }


def _layer_norm_ref(x, gamma, beta, eps=1e-5):
    # classic two-pass form (independent of the in-kernel single-pass version)
    mu = jnp.mean(x, axis=-1, keepdims=True)
    var = jnp.mean((x - mu) ** 2, axis=-1, keepdims=True)
    return (x - mu) * jax.lax.rsqrt(var + eps) * gamma + beta


def actor_reference(state, action, params, *, max_action, phi=0.05):
    # pure-JAX f32 reference, mirrors the PyTorch module
    sa = jnp.concatenate([state, action], axis=1)
    a = _layer_norm_ref(sa, params["g1"], params["be1"])
    a = jnp.maximum(a @ params["w1"] + params["b1"], 0.0)
    a = _layer_norm_ref(a, params["g2"], params["be2"])
    a = jnp.maximum(a @ params["w2"] + params["b2"], 0.0)
    a = _layer_norm_ref(a, params["g3"], params["be3"])
    a = phi * max_action * jnp.tanh(a @ params["w3"] + params["b3"])
    return jnp.clip(a + action, -max_action, max_action)


if __name__ == "__main__":
    state_dim, action_dim = 16, 8
    max_action, phi = 1.0, 0.05

    key = jax.random.PRNGKey(0)
    k_params, k_data = jax.random.split(key)
    params = init_params(k_params, state_dim, action_dim)

    # B=512: two full 256-row tiles (exercises the pipelined grid).
    # B=100: single padded partial tile (exercises padding path).
    for B in (512, 100):
        ks, ka = jax.random.split(jax.random.fold_in(k_data, B))
        state = jax.random.normal(ks, (B, state_dim), jnp.float32)
        action = jnp.tanh(jax.random.normal(ka, (B, action_dim), jnp.float32))

        out = jax.block_until_ready(
            actor_forward(state, action, params, max_action=max_action, phi=phi))
        ref = actor_reference(state, action, params, max_action=max_action, phi=phi)

        assert out.shape == (B, action_dim)
        # bf16 MXU operands (f32 accumulation) -> loosened tolerance
        max_err = float(jnp.max(jnp.abs(out - ref)))
        assert jnp.allclose(out, ref, atol=1e-2, rtol=1e-2), max_err

    print("KERNEL_OK")
</pallas_src>

<mosaic_0001>
module attributes {stable_mosaic.version = 11 : i64} {
  func.func @actor_kernel(%arg0: i32, %arg1: memref<256x16xf32, #tpu.memory_space<vmem>>, %arg2: memref<256x8xf32, #tpu.memory_space<vmem>>, %arg3: memref<1x16xf32, #tpu.memory_space<vmem>>, %arg4: memref<1x8xf32, #tpu.memory_space<vmem>>, %arg5: memref<1x16xf32, #tpu.memory_space<vmem>>, %arg6: memref<1x8xf32, #tpu.memory_space<vmem>>, %arg7: memref<16x256xbf16, #tpu.memory_space<vmem>>, %arg8: memref<8x256xbf16, #tpu.memory_space<vmem>>, %arg9: memref<1x256xf32, #tpu.memory_space<vmem>>, %arg10: memref<1x256xf32, #tpu.memory_space<vmem>>, %arg11: memref<1x256xf32, #tpu.memory_space<vmem>>, %arg12: memref<256x256xbf16, #tpu.memory_space<vmem>>, %arg13: memref<1x256xf32, #tpu.memory_space<vmem>>, %arg14: memref<1x256xf32, #tpu.memory_space<vmem>>, %arg15: memref<1x256xf32, #tpu.memory_space<vmem>>, %arg16: memref<256x8xbf16, #tpu.memory_space<vmem>>, %arg17: memref<1x8xf32, #tpu.memory_space<vmem>>, %arg18: memref<256x8xf32, #tpu.memory_space<vmem>>) attributes {dimension_semantics = [#tpu.dimension_semantics<parallel>], iteration_bounds = array<i64: 2>, scalar_prefetch = 0 : i64, scratch_operands = 0 : i64, tpu.core_type = #tpu.core_type<tc>, window_params = [{transform_indices = @transform_0, window_bounds = array<i64: 256, 16>}, {transform_indices = @transform_1, window_bounds = array<i64: 256, 8>}, {pipeline_mode = #tpu.pipeline_mode<synchronous>, transform_indices = @transform_2, window_bounds = array<i64: 1, 16>}, {pipeline_mode = #tpu.pipeline_mode<synchronous>, transform_indices = @transform_3, window_bounds = array<i64: 1, 8>}, {pipeline_mode = #tpu.pipeline_mode<synchronous>, transform_indices = @transform_4, window_bounds = array<i64: 1, 16>}, {pipeline_mode = #tpu.pipeline_mode<synchronous>, transform_indices = @transform_5, window_bounds = array<i64: 1, 8>}, {pipeline_mode = #tpu.pipeline_mode<synchronous>, transform_indices = @transform_6, window_bounds = array<i64: 16, 256>}, {pipeline_mode = #tpu.pipeline_mode<synchronous>, transform_indices = @transform_7, window_bounds = array<i64: 8, 256>}, {pipeline_mode = #tpu.pipeline_mode<synchronous>, transform_indices = @transform_8, window_bounds = array<i64: 1, 256>}, {pipeline_mode = #tpu.pipeline_mode<synchronous>, transform_indices = @transform_9, window_bounds = array<i64: 1, 256>}, {pipeline_mode = #tpu.pipeline_mode<synchronous>, transform_indices = @transform_10, window_bounds = array<i64: 1, 256>}, {pipeline_mode = #tpu.pipeline_mode<synchronous>, transform_indices = @transform_11, window_bounds = array<i64: 256, 256>}, {pipeline_mode = #tpu.pipeline_mode<synchronous>, transform_indices = @transform_12, window_bounds = array<i64: 1, 256>}, {pipeline_mode = #tpu.pipeline_mode<synchronous>, transform_indices = @transform_13, window_bounds = array<i64: 1, 256>}, {pipeline_mode = #tpu.pipeline_mode<synchronous>, transform_indices = @transform_14, window_bounds = array<i64: 1, 256>}, {pipeline_mode = #tpu.pipeline_mode<synchronous>, transform_indices = @transform_15, window_bounds = array<i64: 256, 8>}, {pipeline_mode = #tpu.pipeline_mode<synchronous>, transform_indices = @transform_16, window_bounds = array<i64: 1, 8>}, {transform_indices = @transform_17, window_bounds = array<i64: 256, 8>}]} {
    %c0 = arith.constant 0 : index
    %c0_0 = arith.constant 0 : index
    %0 = vector.load %arg1[%c0, %c0_0] : memref<256x16xf32, #tpu.memory_space<vmem>>, vector<256x16xf32>
    %c0_1 = arith.constant 0 : index
    %c0_2 = arith.constant 0 : index
    %1 = vector.load %arg2[%c0_1, %c0_2] : memref<256x8xf32, #tpu.memory_space<vmem>>, vector<256x8xf32>
    %cst = arith.constant dense<0.000000e+00> : vector<256xf32>
    %2 = vector.multi_reduction <add>, %0, %cst [1] : vector<256x16xf32> to vector<256xf32>
    %3 = vector.shape_cast %2 : vector<256xf32> to vector<256x1xf32>
    %cst_3 = arith.constant dense<0.000000e+00> : vector<256xf32>
    %4 = vector.multi_reduction <add>, %1, %cst_3 [1] : vector<256x8xf32> to vector<256xf32>
    %5 = vector.shape_cast %4 : vector<256xf32> to vector<256x1xf32>
    %6 = arith.addf %3, %5 : vector<256x1xf32>
    %7 = arith.mulf %0, %0 : vector<256x16xf32>
    %cst_4 = arith.constant dense<0.000000e+00> : vector<256xf32>
    %8 = vector.multi_reduction <add>, %7, %cst_4 [1] : vector<256x16xf32> to vector<256xf32>
    %9 = vector.shape_cast %8 : vector<256xf32> to vector<256x1xf32>
    %10 = arith.mulf %1, %1 : vector<256x8xf32>
    %cst_5 = arith.constant dense<0.000000e+00> : vector<256xf32>
    %11 = vector.multi_reduction <add>, %10, %cst_5 [1] : vector<256x8xf32> to vector<256xf32>
    %12 = vector.shape_cast %11 : vector<256xf32> to vector<256x1xf32>
    %13 = arith.addf %9, %12 : vector<256x1xf32>
    %cst_6 = arith.constant 0.0416666679 : f32
    %14 = vector.broadcast %cst_6 : f32 to vector<256x1xf32>
    %15 = arith.mulf %6, %14 : vector<256x1xf32>
    %cst_7 = arith.constant 0.0416666679 : f32
    %16 = vector.broadcast %cst_7 : f32 to vector<256x1xf32>
    %17 = arith.mulf %13, %16 : vector<256x1xf32>
    %18 = arith.mulf %15, %15 : vector<256x1xf32>
    %19 = arith.subf %17, %18 : vector<256x1xf32>
    %cst_8 = arith.constant 9.99999974E-6 : f32
    %20 = vector.broadcast %cst_8 : f32 to vector<256x1xf32>
    %21 = arith.addf %19, %20 : vector<256x1xf32>
    %22 = math.rsqrt %21 : vector<256x1xf32>
    %23 = vector.broadcast %15 : vector<256x1xf32> to vector<256x16xf32>
    %24 = arith.subf %0, %23 : vector<256x16xf32>
    %c0_9 = arith.constant 0 : index
    %c0_10 = arith.constant 0 : index
    %25 = vector.load %arg3[%c0_9, %c0_10] : memref<1x16xf32, #tpu.memory_space<vmem>>, vector<1x16xf32>
    %26 = vector.broadcast %22 : vector<256x1xf32> to vector<256x16xf32>
    %27 = vector.broadcast %25 : vector<1x16xf32> to vector<256x16xf32>
    %28 = arith.mulf %26, %27 : vector<256x16xf32>
    %29 = arith.mulf %24, %28 : vector<256x16xf32>
    %c0_11 = arith.constant 0 : index
    %c0_12 = arith.constant 0 : index
    %30 = vector.load %arg5[%c0_11, %c0_12] : memref<1x16xf32, #tpu.memory_space<vmem>>, vector<1x16xf32>
    %31 = vector.broadcast %30 : vector<1x16xf32> to vector<256x16xf32>
    %32 = arith.addf %29, %31 : vector<256x16xf32>
    %33 = vector.broadcast %15 : vector<256x1xf32> to vector<256x8xf32>
    %34 = arith.subf %1, %33 : vector<256x8xf32>
    %c0_13 = arith.constant 0 : index
    %c0_14 = arith.constant 0 : index
    %35 = vector.load %arg4[%c0_13, %c0_14] : memref<1x8xf32, #tpu.memory_space<vmem>>, vector<1x8xf32>
    %36 = vector.broadcast %22 : vector<256x1xf32> to vector<256x8xf32>
    %37 = vector.broadcast %35 : vector<1x8xf32> to vector<256x8xf32>
    %38 = arith.mulf %36, %37 : vector<256x8xf32>
    %39 = arith.mulf %34, %38 : vector<256x8xf32>
    %c0_15 = arith.constant 0 : index
    %c0_16 = arith.constant 0 : index
    %40 = vector.load %arg6[%c0_15, %c0_16] : memref<1x8xf32, #tpu.memory_space<vmem>>, vector<1x8xf32>
    %41 = vector.broadcast %40 : vector<1x8xf32> to vector<256x8xf32>
    %42 = arith.addf %39, %41 : vector<256x8xf32>
    %43 = arith.truncf %32 : vector<256x16xf32> to vector<256x16xbf16>
    %c0_17 = arith.constant 0 : index
    %c0_18 = arith.constant 0 : index
    %44 = vector.load %arg7[%c0_17, %c0_18] : memref<16x256xbf16, #tpu.memory_space<vmem>>, vector<16x256xbf16>
    %cst_19 = arith.constant dense<0.000000e+00> : vector<256x256xf32>
    %45 = tpu.matmul %43, %44, %cst_19 {dimension_numbers = #tpu.dot_dimension_numbers<[1], [0], [0], [1], [0, 0, 1, 1], [], []>} : vector<256x16xbf16>, vector<16x256xbf16>, vector<256x256xf32> -> vector<256x256xf32>
    %46 = arith.truncf %42 : vector<256x8xf32> to vector<256x8xbf16>
    %c0_20 = arith.constant 0 : index
    %c0_21 = arith.constant 0 : index
    %47 = vector.load %arg8[%c0_20, %c0_21] : memref<8x256xbf16, #tpu.memory_space<vmem>>, vector<8x256xbf16>
    %cst_22 = arith.constant dense<0.000000e+00> : vector<256x256xf32>
    %48 = tpu.matmul %46, %47, %cst_22 {dimension_numbers = #tpu.dot_dimension_numbers<[1], [0], [0], [1], [0, 0, 1, 1], [], []>} : vector<256x8xbf16>, vector<8x256xbf16>, vector<256x256xf32> -> vector<256x256xf32>
    %49 = arith.addf %45, %48 : vector<256x256xf32>
    %c0_23 = arith.constant 0 : index
    %c0_24 = arith.constant 0 : index
    %50 = vector.load %arg9[%c0_23, %c0_24] : memref<1x256xf32, #tpu.memory_space<vmem>>, vector<1x256xf32>
    %51 = vector.broadcast %50 : vector<1x256xf32> to vector<256x256xf32>
    %52 = arith.addf %49, %51 : vector<256x256xf32>
    %cst_25 = arith.constant 0.000000e+00 : f32
    %53 = vector.broadcast %cst_25 : f32 to vector<256x256xf32>
    %54 = arith.maximumf %52, %53 : vector<256x256xf32>
    %c0_26 = arith.constant 0 : index
    %c0_27 = arith.constant 0 : index
    %55 = vector.load %arg10[%c0_26, %c0_27] : memref<1x256xf32, #tpu.memory_space<vmem>>, vector<1x256xf32>
    %c0_28 = arith.constant 0 : index
    %c0_29 = arith.constant 0 : index
    %56 = vector.load %arg11[%c0_28, %c0_29] : memref<1x256xf32, #tpu.memory_space<vmem>>, vector<1x256xf32>
    %cst_30 = arith.constant dense<0.000000e+00> : vector<256xf32>
    %57 = vector.multi_reduction <add>, %54, %cst_30 [1] : vector<256x256xf32> to vector<256xf32>
    %58 = vector.shape_cast %57 : vector<256xf32> to vector<256x1xf32>
    %59 = arith.mulf %54, %54 : vector<256x256xf32>
    %cst_31 = arith.constant dense<0.000000e+00> : vector<256xf32>
    %60 = vector.multi_reduction <add>, %59, %cst_31 [1] : vector<256x256xf32> to vector<256xf32>
    %61 = vector.shape_cast %60 : vector<256xf32> to vector<256x1xf32>
    %cst_32 = arith.constant 3.906250e-03 : f32
    %62 = vector.broadcast %cst_32 : f32 to vector<256x1xf32>
    %63 = arith.mulf %58, %62 : vector<256x1xf32>
    %cst_33 = arith.constant 3.906250e-03 : f32
    %64 = vector.broadcast %cst_33 : f32 to vector<256x1xf32>
    %65 = arith.mulf %61, %64 : vector<256x1xf32>
    %66 = arith.mulf %63, %63 : vector<256x1xf32>
    %67 = arith.subf %65, %66 : vector<256x1xf32>
    %cst_34 = arith.constant 9.99999974E-6 : f32
    %68 = vector.broadcast %cst_34 : f32 to vector<256x1xf32>
    %69 = arith.addf %67, %68 : vector<256x1xf32>
    %70 = math.rsqrt %69 : vector<256x1xf32>
    %71 = vector.broadcast %63 : vector<256x1xf32> to vector<256x256xf32>
    %72 = arith.subf %54, %71 : vector<256x256xf32>
    %73 = vector.broadcast %70 : vector<256x1xf32> to vector<256x256xf32>
    %74 = vector.broadcast %55 : vector<1x256xf32> to vector<256x256xf32>
    %75 = arith.mulf %73, %74 : vector<256x256xf32>
    %76 = arith.mulf %72, %75 : vector<256x256xf32>
    %77 = vector.broadcast %56 : vector<1x256xf32> to vector<256x256xf32>
    %78 = arith.addf %76, %77 : vector<256x256xf32>
    %79 = arith.truncf %78 : vector<256x256xf32> to vector<256x256xbf16>
    %c0_35 = arith.constant 0 : index
    %c0_36 = arith.constant 0 : index
    %80 = vector.load %arg12[%c0_35, %c0_36] : memref<256x256xbf16, #tpu.memory_space<vmem>>, vector<256x256xbf16>
    %cst_37 = arith.constant dense<0.000000e+00> : vector<256x256xf32>
    %81 = tpu.matmul %79, %80, %cst_37 {dimension_numbers = #tpu.dot_dimension_numbers<[1], [0], [0], [1], [0, 0, 1, 1], [], []>} : vector<256x256xbf16>, vector<256x256xbf16>, vector<256x256xf32> -> vector<256x256xf32>
    %c0_38 = arith.constant 0 : index
    %c0_39 = arith.constant 0 : index
    %82 = vector.load %arg13[%c0_38, %c0_39] : memref<1x256xf32, #tpu.memory_space<vmem>>, vector<1x256xf32>
    %83 = vector.broadcast %82 : vector<1x256xf32> to vector<256x256xf32>
    %84 = arith.addf %81, %83 : vector<256x256xf32>
    %cst_40 = arith.constant 0.000000e+00 : f32
    %85 = vector.broadcast %cst_40 : f32 to vector<256x256xf32>
    %86 = arith.maximumf %84, %85 : vector<256x256xf32>
    %c0_41 = arith.constant 0 : index
    %c0_42 = arith.constant 0 : index
    %87 = vector.load %arg14[%c0_41, %c0_42] : memref<1x256xf32, #tpu.memory_space<vmem>>, vector<1x256xf32>
    %c0_43 = arith.constant 0 : index
    %c0_44 = arith.constant 0 : index
    %88 = vector.load %arg15[%c0_43, %c0_44] : memref<1x256xf32, #tpu.memory_space<vmem>>, vector<1x256xf32>
    %cst_45 = arith.constant dense<0.000000e+00> : vector<256xf32>
    %89 = vector.multi_reduction <add>, %86, %cst_45 [1] : vector<256x256xf32> to vector<256xf32>
    %90 = vector.shape_cast %89 : vector<256xf32> to vector<256x1xf32>
    %91 = arith.mulf %86, %86 : vector<256x256xf32>
    %cst_46 = arith.constant dense<0.000000e+00> : vector<256xf32>
    %92 = vector.multi_reduction <add>, %91, %cst_46 [1] : vector<256x256xf32> to vector<256xf32>
    %93 = vector.shape_cast %92 : vector<256xf32> to vector<256x1xf32>
    %cst_47 = arith.constant 3.906250e-03 : f32
    %94 = vector.broadcast %cst_47 : f32 to vector<256x1xf32>
    %95 = arith.mulf %90, %94 : vector<256x1xf32>
    %cst_48 = arith.constant 3.906250e-03 : f32
    %96 = vector.broadcast %cst_48 : f32 to vector<256x1xf32>
    %97 = arith.mulf %93, %96 : vector<256x1xf32>
    %98 = arith.mulf %95, %95 : vector<256x1xf32>
    %99 = arith.subf %97, %98 : vector<256x1xf32>
    %cst_49 = arith.constant 9.99999974E-6 : f32
    %100 = vector.broadcast %cst_49 : f32 to vector<256x1xf32>
    %101 = arith.addf %99, %100 : vector<256x1xf32>
    %102 = math.rsqrt %101 : vector<256x1xf32>
    %103 = vector.broadcast %95 : vector<256x1xf32> to vector<256x256xf32>
    %104 = arith.subf %86, %103 : vector<256x256xf32>
    %105 = vector.broadcast %102 : vector<256x1xf32> to vector<256x256xf32>
    %106 = vector.broadcast %87 : vector<1x256xf32> to vector<256x256xf32>
    %107 = arith.mulf %105, %106 : vector<256x256xf32>
    %108 = arith.mulf %104, %107 : vector<256x256xf32>
    %109 = vector.broadcast %88 : vector<1x256xf32> to vector<256x256xf32>
    %110 = arith.addf %108, %109 : vector<256x256xf32>
    %111 = arith.truncf %110 : vector<256x256xf32> to vector<256x256xbf16>
    %c0_50 = arith.constant 0 : index
    %c0_51 = arith.constant 0 : index
    %112 = vector.load %arg16[%c0_50, %c0_51] : memref<256x8xbf16, #tpu.memory_space<vmem>>, vector<256x8xbf16>
    %cst_52 = arith.constant dense<0.000000e+00> : vector<256x8xf32>
    %113 = tpu.matmul %111, %112, %cst_52 {dimension_numbers = #tpu.dot_dimension_numbers<[1], [0], [0], [1], [0, 0, 1, 1], [], []>} : vector<256x256xbf16>, vector<256x8xbf16>, vector<256x8xf32> -> vector<256x8xf32>
    %c0_53 = arith.constant 0 : index
    %c0_54 = arith.constant 0 : index
    %114 = vector.load %arg17[%c0_53, %c0_54] : memref<1x8xf32, #tpu.memory_space<vmem>>, vector<1x8xf32>
    %115 = vector.broadcast %114 : vector<1x8xf32> to vector<256x8xf32>
    %116 = arith.addf %113, %115 : vector<256x8xf32>
    %117 = math.tanh %116 : vector<256x8xf32>
    %cst_55 = arith.constant 5.000000e-02 : f32
    %118 = vector.broadcast %cst_55 : f32 to vector<256x8xf32>
    %119 = arith.mulf %118, %117 : vector<256x8xf32>
    %120 = arith.addf %119, %1 : vector<256x8xf32>
    %cst_56 = arith.constant -1.000000e+00 : f32
    %cst_57 = arith.constant 1.000000e+00 : f32
    %121 = vector.broadcast %cst_56 : f32 to vector<256x8xf32>
    %122 = arith.maximumf %121, %120 : vector<256x8xf32>
    %123 = vector.broadcast %cst_57 : f32 to vector<256x8xf32>
    %124 = arith.minimumf %123, %122 : vector<256x8xf32>
    %c0_58 = arith.constant 0 : index
    %c0_59 = arith.constant 0 : index
    %125 = vector.load %arg18[%c0_58, %c0_59] : memref<256x8xf32, #tpu.memory_space<vmem>>, vector<256x8xf32>
    tpu.vector_store %arg18[%c0_58, %c0_59], %124 {strides = array<i32>} : memref<256x8xf32, #tpu.memory_space<vmem>>, vector<256x8xf32>,
    return
  }
  func.func @transform_0(%arg0: i32) -> (i32, i32) {
    %c0_i32 = arith.constant 0 : i32
    %c0_i32_0 = arith.constant 0 : i32
    return %arg0, %c0_i32 : i32, i32
  }
  func.func @transform_1(%arg0: i32) -> (i32, i32) {
    %c0_i32 = arith.constant 0 : i32
    %c0_i32_0 = arith.constant 0 : i32
    return %arg0, %c0_i32 : i32, i32
  }
  func.func @transform_2(%arg0: i32) -> (i32, i32) {
    %c0_i32 = arith.constant 0 : i32
    %c0_i32_0 = arith.constant 0 : i32
    %c0_i32_1 = arith.constant 0 : i32
    return %c0_i32, %c0_i32_0 : i32, i32
  }
  func.func @transform_3(%arg0: i32) -> (i32, i32) {
    %c0_i32 = arith.constant 0 : i32
    %c0_i32_0 = arith.constant 0 : i32
    %c0_i32_1 = arith.constant 0 : i32
    return %c0_i32, %c0_i32_0 : i32, i32
  }
  func.func @transform_4(%arg0: i32) -> (i32, i32) {
    %c0_i32 = arith.constant 0 : i32
    %c0_i32_0 = arith.constant 0 : i32
    %c0_i32_1 = arith.constant 0 : i32
    return %c0_i32, %c0_i32_0 : i32, i32
  }
  func.func @transform_5(%arg0: i32) -> (i32, i32) {
    %c0_i32 = arith.constant 0 : i32
    %c0_i32_0 = arith.constant 0 : i32
    %c0_i32_1 = arith.constant 0 : i32
    return %c0_i32, %c0_i32_0 : i32, i32
  }
  func.func @transform_6(%arg0: i32) -> (i32, i32) {
    %c0_i32 = arith.constant 0 : i32
    %c0_i32_0 = arith.constant 0 : i32
    %c0_i32_1 = arith.constant 0 : i32
    return %c0_i32, %c0_i32_0 : i32, i32
  }
  func.func @transform_7(%arg0: i32) -> (i32, i32) {
    %c0_i32 = arith.constant 0 : i32
    %c0_i32_0 = arith.constant 0 : i32
    %c0_i32_1 = arith.constant 0 : i32
    return %c0_i32, %c0_i32_0 : i32, i32
  }
  func.func @transform_8(%arg0: i32) -> (i32, i32) {
    %c0_i32 = arith.constant 0 : i32
    %c0_i32_0 = arith.constant 0 : i32
    %c0_i32_1 = arith.constant 0 : i32
    return %c0_i32, %c0_i32_0 : i32, i32
  }
  func.func @transform_9(%arg0: i32) -> (i32, i32) {
    %c0_i32 = arith.constant 0 : i32
    %c0_i32_0 = arith.constant 0 : i32
    %c0_i32_1 = arith.constant 0 : i32
    return %c0_i32, %c0_i32_0 : i32, i32
  }
  func.func @transform_10(%arg0: i32) -> (i32, i32) {
    %c0_i32 = arith.constant 0 : i32
    %c0_i32_0 = arith.constant 0 : i32
    %c0_i32_1 = arith.constant 0 : i32
    return %c0_i32, %c0_i32_0 : i32, i32
  }
  func.func @transform_11(%arg0: i32) -> (i32, i32) {
    %c0_i32 = arith.constant 0 : i32
    %c0_i32_0 = arith.constant 0 : i32
    %c0_i32_1 = arith.constant 0 : i32
    return %c0_i32, %c0_i32_0 : i32, i32
  }
  func.func @transform_12(%arg0: i32) -> (i32, i32) {
    %c0_i32 = arith.constant 0 : i32
    %c0_i32_0 = arith.constant 0 : i32
    %c0_i32_1 = arith.constant 0 : i32
    return %c0_i32, %c0_i32_0 : i32, i32
  }
  func.func @transform_13(%arg0: i32) -> (i32, i32) {
    %c0_i32 = arith.constant 0 : i32
    %c0_i32_0 = arith.constant 0 : i32
    %c0_i32_1 = arith.constant 0 : i32
    return %c0_i32, %c0_i32_0 : i32, i32
  }
  func.func @transform_14(%arg0: i32) -> (i32, i32) {
    %c0_i32 = arith.constant 0 : i32
    %c0_i32_0 = arith.constant 0 : i32
    %c0_i32_1 = arith.constant 0 : i32
    return %c0_i32, %c0_i32_0 : i32, i32
  }
  func.func @transform_15(%arg0: i32) -> (i32, i32) {
    %c0_i32 = arith.constant 0 : i32
    %c0_i32_0 = arith.constant 0 : i32
    %c0_i32_1 = arith.constant 0 : i32
    return %c0_i32, %c0_i32_0 : i32, i32
  }
  func.func @transform_16(%arg0: i32) -> (i32, i32) {
    %c0_i32 = arith.constant 0 : i32
    %c0_i32_0 = arith.constant 0 : i32
    %c0_i32_1 = arith.constant 0 : i32
    return %c0_i32, %c0_i32_0 : i32, i32
  }
  func.func @transform_17(%arg0: i32) -> (i32, i32) {
    %c0_i32 = arith.constant 0 : i32
    %c0_i32_0 = arith.constant 0 : i32
    return %arg0, %c0_i32 : i32, i32
  }
}

</mosaic_0001>

<llo_original>
// kernel: tpu_custom_call.1
$region0: #{tpu_custom_call.1}
  #allocation0 [shape = 'u32[]', space=smem, size = 0x4, offset = 0x4, fixed_abs, tag = 'smem constant byte address 0x4 - core index']
  #allocation1 [shape = 'u32[144,128]{1,0:T(1,128)}', space=vmem, size = 0x12000, scoped, tag = 'internal scratch']
  %s0 = inlined_call_operand.vmem [shape: f32[512,16], index: 0, kind: input, shape index: {}]
  %s1 = inlined_call_operand.vmem [shape: f32[512,8], index: 1, kind: input, shape index: {}]
  %s2 = inlined_call_operand.vmem [shape: f32[1,16], index: 2, kind: input, shape index: {}]
  %s3 = inlined_call_operand.vmem [shape: f32[1,8], index: 3, kind: input, shape index: {}]
  %s4 = inlined_call_operand.vmem [shape: f32[1,16], index: 4, kind: input, shape index: {}]
  %s5 = inlined_call_operand.vmem [shape: f32[1,8], index: 5, kind: input, shape index: {}]
  %s6 = inlined_call_operand.vmem [shape: bf16[16,256], index: 6, kind: input, shape index: {}]
  %s7 = inlined_call_operand.vmem [shape: bf16[8,256], index: 7, kind: input, shape index: {}]
  %s8 = inlined_call_operand.vmem [shape: f32[1,256], index: 8, kind: input, shape index: {}]
  %s9 = inlined_call_operand.vmem [shape: f32[1,256], index: 9, kind: input, shape index: {}]
  %s10 = inlined_call_operand.vmem [shape: f32[1,256], index: 10, kind: input, shape index: {}]
  %s11 = inlined_call_operand.vmem [shape: bf16[256,256], index: 11, kind: input, shape index: {}]
  %s12 = inlined_call_operand.vmem [shape: f32[1,256], index: 12, kind: input, shape index: {}]
  %s13 = inlined_call_operand.vmem [shape: f32[1,256], index: 13, kind: input, shape index: {}]
  %s14 = inlined_call_operand.vmem [shape: f32[1,256], index: 14, kind: input, shape index: {}]
  %s15 = inlined_call_operand.vmem [shape: bf16[256,8], index: 15, kind: input, shape index: {}]
  %s16 = inlined_call_operand.vmem [shape: f32[1,8], index: 16, kind: input, shape index: {}]
  %s17 = inlined_call_operand.vmem [shape: f32[512,8], index: 17, kind: output, shape index: {}]
  %s18 = sld [smem:[#allocation0]]
  $region101: #{tpu_custom_call.1} parent=0
    _
  %s20 = ssub.s32 1, %s18
  %s21 = scalar_select 0, %s20, %s18
  loop: start=0, step=1, limit=4
  $region2: #{tpu_custom_call.1} parent=0 // loop_pre_header
    _
  $region3: #{tpu_custom_call.1} parent=0 // loop_header
    %s23 = sphi 0, %s27
    %p24 = scmp.ge.s32.totalorder %s23, 4
    %s33 = sphi 0, %s35
    %s36 = sphi 0, %s33
    %s37 = sphi 0, %s36
    %s53 = sphi 0, %s37
    %s59 = sphi 0, %s61
    %s62 = sphi 0, %s59
    %s63 = sphi 0, %s62
    %s79 = sphi 0, %s63
    %s83 = sphi 0, %s83
    %s85 = sphi 0, %s83
    %s86 = sphi 0, %s85
    %s100 = sphi 0, %s86
    %s104 = sphi 0, %s104
    %s106 = sphi 0, %s104
    %s107 = sphi 0, %s106
    %s121 = sphi 0, %s107
    %s125 = sphi 0, %s125
    %s127 = sphi 0, %s125
    %s128 = sphi 0, %s127
    %s142 = sphi 0, %s128
    %s146 = sphi 0, %s146
    %s148 = sphi 0, %s146
    %s149 = sphi 0, %s148
    %s163 = sphi 0, %s149
    %s167 = sphi 0, %s167
    %s169 = sphi 0, %s167
    %s170 = sphi 0, %s169
    %s184 = sphi 0, %s170
    %s188 = sphi 0, %s188
    %s190 = sphi 0, %s188
    %s191 = sphi 0, %s190
    %s205 = sphi 0, %s191
    %s209 = sphi 0, %s209
    %s211 = sphi 0, %s209
    %s212 = sphi 0, %s211
    %s226 = sphi 0, %s212
    %s230 = sphi 0, %s230
    %s232 = sphi 0, %s230
    %s233 = sphi 0, %s232
    %s247 = sphi 0, %s233
    %s251 = sphi 0, %s251
    %s253 = sphi 0, %s251
    %s254 = sphi 0, %s253
    %s268 = sphi 0, %s254
    %s272 = sphi 0, %s272
    %s274 = sphi 0, %s272
    %s275 = sphi 0, %s274
    %s289 = sphi 0, %s275
    %s293 = sphi 0, %s293
    %s295 = sphi 0, %s293
    %s296 = sphi 0, %s295
    %s310 = sphi 0, %s296
    %s314 = sphi 0, %s314
    %s316 = sphi 0, %s314
    %s317 = sphi 0, %s316
    %s331 = sphi 0, %s317
    %s335 = sphi 0, %s335
    %s337 = sphi 0, %s335
    %s338 = sphi 0, %s337
    %s352 = sphi 0, %s338
    %s356 = sphi 0, %s356
    %s358 = sphi 0, %s356
    %s359 = sphi 0, %s358
    %s373 = sphi 0, %s359
    %s377 = sphi 0, %s377
    %s379 = sphi 0, %s377
    %s380 = sphi 0, %s379
    %s394 = sphi 0, %s380
    %s400 = sphi 0, %s402
    %s403 = sphi 0, %s400
    %s404 = sphi 0, %s403
    %s420 = sphi 0, %s404
  $region4: #{tpu_custom_call.1} parent=0 // loop_header_branch
    %26 = sbr.rel (%p24) target = $region8
  $region5: #{tpu_custom_call.1} parent=0 // loop_body
    %s28 = ssub.s32 %s23, 1
    %s29 = ssub.s32 %s23, 2
    %s30 = sadd.s32 %s23, 1
    %s31 = ssub.s32 %s23, %s30
    %p32 = scmp.eq.s32.totalorder %s31, 0
    %s34 = sadd.s32 %s33, 1
    %s35 = scalar_select %p32, %s33, %s34
    %p38 = pneg %p32
    %p39 = scmp.eq.s32.totalorder %s23, 1
    %p40 = por %p38, %p39
    %p41 = scmp.ne.s32.totalorder %s33, %s36
    %p42 = scmp.eq.s32.totalorder %s23, 0
    %p43 = por %p41, %p42
    %p44 = scmp.ne.s32.totalorder %s33, %s36
    %p45 = scmp.eq.s32.totalorder %s28, 1
    %p46 = por %p44, %p45
    %p47 = scmp.ne.s32.totalorder %s36, %s37
    %p48 = scmp.eq.s32.totalorder %s28, 0
    %p49 = por %p47, %p48
    %p50 = scmp.ne.s32.totalorder %s36, %s37
    %p51 = scmp.eq.s32.totalorder %s29, 1
    %p52 = por %p50, %p51
    %p54 = scmp.ne.s32.totalorder %s37, %s53
    %p55 = scmp.eq.s32.totalorder %s29, 0
    %p56 = por %p54, %p55
    %s57 = ssub.s32 %s23, %s30
    %p58 = scmp.eq.s32.totalorder %s57, 0
    %s60 = sadd.s32 %s59, 1
    %s61 = scalar_select %p58, %s59, %s60
    %p64 = pneg %p58
    %p65 = scmp.eq.s32.totalorder %s23, 1
    %p66 = por %p64, %p65
    %p67 = scmp.ne.s32.totalorder %s59, %s62
    %p68 = scmp.eq.s32.totalorder %s23, 0
    %p69 = por %p67, %p68
    %p70 = scmp.ne.s32.totalorder %s59, %s62
    %p71 = scmp.eq.s32.totalorder %s28, 1
    %p72 = por %p70, %p71
    %p73 = scmp.ne.s32.totalorder %s62, %s63
    %p74 = scmp.eq.s32.totalorder %s28, 0
    %p75 = por %p73, %p74
    %p76 = scmp.ne.s32.totalorder %s62, %s63
    %p77 = scmp.eq.s32.totalorder %s29, 1
    %p78 = por %p76, %p77
    %p80 = scmp.ne.s32.totalorder %s63, %s79
    %p81 = scmp.eq.s32.totalorder %s29, 0
    %p82 = por %p80, %p81
    %s84 = sadd.s32 %s83, 1
    %p87 = scmp.eq.s32.totalorder %s23, 1
    %p88 = scmp.ne.s32.totalorder %s83, %s85
    %p89 = scmp.eq.s32.totalorder %s23, 0
    %p90 = por %p88, %p89
    %p91 = scmp.ne.s32.totalorder %s83, %s85
    %p92 = scmp.eq.s32.totalorder %s28, 1
    %p93 = por %p91, %p92
    %p94 = scmp.ne.s32.totalorder %s85, %s86
    %p95 = scmp.eq.s32.totalorder %s28, 0
    %p96 = por %p94, %p95
    %p97 = scmp.ne.s32.totalorder %s85, %s86
    %p98 = scmp.eq.s32.totalorder %s29, 1
    %p99 = por %p97, %p98
    %p101 = scmp.ne.s32.totalorder %s86, %s100
    %p102 = scmp.eq.s32.totalorder %s29, 0
    %p103 = por %p101, %p102
    %s105 = sadd.s32 %s104, 1
    %p108 = scmp.eq.s32.totalorder %s23, 1
    %p109 = scmp.ne.s32.totalorder %s104, %s106
    %p110 = scmp.eq.s32.totalorder %s23, 0
    %p111 = por %p109, %p110
    %p112 = scmp.ne.s32.totalorder %s104, %s106
    %p113 = scmp.eq.s32.totalorder %s28, 1
    %p114 = por %p112, %p113
    %p115 = scmp.ne.s32.totalorder %s106, %s107
    %p116 = scmp.eq.s32.totalorder %s28, 0
    %p117 = por %p115, %p116
    %p118 = scmp.ne.s32.totalorder %s106, %s107
    %p119 = scmp.eq.s32.totalorder %s29, 1
    %p120 = por %p118, %p119
    %p122 = scmp.ne.s32.totalorder %s107, %s121
    %p123 = scmp.eq.s32.totalorder %s29, 0
    %p124 = por %p122, %p123
    %s126 = sadd.s32 %s125, 1
    %p129 = scmp.eq.s32.totalorder %s23, 1
    %p130 = scmp.ne.s32.totalorder %s125, %s127
    %p131 = scmp.eq.s32.totalorder %s23, 0
    %p132 = por %p130, %p131
    %p133 = scmp.ne.s32.totalorder %s125, %s127
    %p134 = scmp.eq.s32.totalorder %s28, 1
    %p135 = por %p133, %p134
    %p136 = scmp.ne.s32.totalorder %s127, %s128
    %p137 = scmp.eq.s32.totalorder %s28, 0
    %p138 = por %p136, %p137
    %p139 = scmp.ne.s32.totalorder %s127, %s128
    %p140 = scmp.eq.s32.totalorder %s29, 1
    %p141 = por %p139, %p140
    %p143 = scmp.ne.s32.totalorder %s128, %s142
    %p144 = scmp.eq.s32.totalorder %s29, 0
    %p145 = por %p143, %p144
    %s147 = sadd.s32 %s146, 1
    %p150 = scmp.eq.s32.totalorder %s23, 1
    %p151 = scmp.ne.s32.totalorder %s146, %s148
    %p152 = scmp.eq.s32.totalorder %s23, 0
    %p153 = por %p151, %p152
    %p154 = scmp.ne.s32.totalorder %s146, %s148
    %p155 = scmp.eq.s32.totalorder %s28, 1
    %p156 = por %p154, %p155
    %p157 = scmp.ne.s32.totalorder %s148, %s149
    %p158 = scmp.eq.s32.totalorder %s28, 0
    %p159 = por %p157, %p158
    %p160 = scmp.ne.s32.totalorder %s148, %s149
    %p161 = scmp.eq.s32.totalorder %s29, 1
    %p162 = por %p160, %p161
    %p164 = scmp.ne.s32.totalorder %s149, %s163
    %p165 = scmp.eq.s32.totalorder %s29, 0
    %p166 = por %p164, %p165
    %s168 = sadd.s32 %s167, 1
    %p171 = scmp.eq.s32.totalorder %s23, 1
    %p172 = scmp.ne.s32.totalorder %s167, %s169
    %p173 = scmp.eq.s32.totalorder %s23, 0
    %p174 = por %p172, %p173
    %p175 = scmp.ne.s32.totalorder %s167, %s169
    %p176 = scmp.eq.s32.totalorder %s28, 1
    %p177 = por %p175, %p176
    %p178 = scmp.ne.s32.totalorder %s169, %s170
    %p179 = scmp.eq.s32.totalorder %s28, 0
    %p180 = por %p178, %p179
    %p181 = scmp.ne.s32.totalorder %s169, %s170
    %p182 = scmp.eq.s32.totalorder %s29, 1
    %p183 = por %p181, %p182
    %p185 = scmp.ne.s32.totalorder %s170, %s184
    %p186 = scmp.eq.s32.totalorder %s29, 0
    %p187 = por %p185, %p186
    %s189 = sadd.s32 %s188, 1
    %p192 = scmp.eq.s32.totalorder %s23, 1
    %p193 = scmp.ne.s32.totalorder %s188, %s190
    %p194 = scmp.eq.s32.totalorder %s23, 0
    %p195 = por %p193, %p194
    %p196 = scmp.ne.s32.totalorder %s188, %s190
    %p197 = scmp.eq.s32.totalorder %s28, 1
    %p198 = por %p196, %p197
    %p199 = scmp.ne.s32.totalorder %s190, %s191
    %p200 = scmp.eq.s32.totalorder %s28, 0
    %p201 = por %p199, %p200
    %p202 = scmp.ne.s32.totalorder %s190, %s191
    %p203 = scmp.eq.s32.totalorder %s29, 1
    %p204 = por %p202, %p203
    %p206 = scmp.ne.s32.totalorder %s191, %s205
    %p207 = scmp.eq.s32.totalorder %s29, 0
    %p208 = por %p206, %p207
    %s210 = sadd.s32 %s209, 1
    %p213 = scmp.eq.s32.totalorder %s23, 1
    %p214 = scmp.ne.s32.totalorder %s209, %s211
    %p215 = scmp.eq.s32.totalorder %s23, 0
    %p216 = por %p214, %p215
    %p217 = scmp.ne.s32.totalorder %s209, %s211
    %p218 = scmp.eq.s32.totalorder %s28, 1
    %p219 = por %p217, %p218
    %p220 = scmp.ne.s32.totalorder %s211, %s212
    %p221 = scmp.eq.s32.totalorder %s28, 0
    %p222 = por %p220, %p221
    %p223 = scmp.ne.s32.totalorder %s211, %s212
    %p224 = scmp.eq.s32.totalorder %s29, 1
    %p225 = por %p223, %p224
    %p227 = scmp.ne.s32.totalorder %s212, %s226
    %p228 = scmp.eq.s32.totalorder %s29, 0
    %p229 = por %p227, %p228
    %s231 = sadd.s32 %s230, 1
    %p234 = scmp.eq.s32.totalorder %s23, 1
    %p235 = scmp.ne.s32.totalorder %s230, %s232
    %p236 = scmp.eq.s32.totalorder %s23, 0
    %p237 = por %p235, %p236
    %p238 = scmp.ne.s32.totalorder %s230, %s232
    %p239 = scmp.eq.s32.totalorder %s28, 1
    %p240 = por %p238, %p239
    %p241 = scmp.ne.s32.totalorder %s232, %s233
    %p242 = scmp.eq.s32.totalorder %s28, 0
    %p243 = por %p241, %p242
    %p244 = scmp.ne.s32.totalorder %s232, %s233
    %p245 = scmp.eq.s32.totalorder %s29, 1
    %p246 = por %p244, %p245
    %p248 = scmp.ne.s32.totalorder %s233, %s247
    %p249 = scmp.eq.s32.totalorder %s29, 0
    %p250 = por %p248, %p249
    %s252 = sadd.s32 %s251, 1
    %p255 = scmp.eq.s32.totalorder %s23, 1
    %p256 = scmp.ne.s32.totalorder %s251, %s253
    %p257 = scmp.eq.s32.totalorder %s23, 0
    %p258 = por %p256, %p257
    %p259 = scmp.ne.s32.totalorder %s251, %s253
    %p260 = scmp.eq.s32.totalorder %s28, 1
    %p261 = por %p259, %p260
    %p262 = scmp.ne.s32.totalorder %s253, %s254
    %p263 = scmp.eq.s32.totalorder %s28, 0
    %p264 = por %p262, %p263
    %p265 = scmp.ne.s32.totalorder %s253, %s254
    %p266 = scmp.eq.s32.totalorder %s29, 1
    %p267 = por %p265, %p266
    %p269 = scmp.ne.s32.totalorder %s254, %s268
    %p270 = scmp.eq.s32.totalorder %s29, 0
    %p271 = por %p269, %p270
    %s273 = sadd.s32 %s272, 1
    %p276 = scmp.eq.s32.totalorder %s23, 1
    %p277 = scmp.ne.s32.totalorder %s272, %s274
    %p278 = scmp.eq.s32.totalorder %s23, 0
    %p279 = por %p277, %p278
    %p280 = scmp.ne.s32.totalorder %s272, %s274
    %p281 = scmp.eq.s32.totalorder %s28, 1
    %p282 = por %p280, %p281
    %p283 = scmp.ne.s32.totalorder %s274, %s275
    %p284 = scmp.eq.s32.totalorder %s28, 0
    %p285 = por %p283, %p284
    %p286 = scmp.ne.s32.totalorder %s274, %s275
    %p287 = scmp.eq.s32.totalorder %s29, 1
    %p288 = por %p286, %p287
    %p290 = scmp.ne.s32.totalorder %s275, %s289
    %p291 = scmp.eq.s32.totalorder %s29, 0
    %p292 = por %p290, %p291
    %s294 = sadd.s32 %s293, 1
    %p297 = scmp.eq.s32.totalorder %s23, 1
    %p298 = scmp.ne.s32.totalorder %s293, %s295
    %p299 = scmp.eq.s32.totalorder %s23, 0
    %p300 = por %p298, %p299
    %p301 = scmp.ne.s32.totalorder %s293, %s295
    %p302 = scmp.eq.s32.totalorder %s28, 1
    %p303 = por %p301, %p302
    %p304 = scmp.ne.s32.totalorder %s295, %s296
    %p305 = scmp.eq.s32.totalorder %s28, 0
    %p306 = por %p304, %p305
    %p307 = scmp.ne.s32.totalorder %s295, %s296
    %p308 = scmp.eq.s32.totalorder %s29, 1
    %p309 = por %p307, %p308
    %p311 = scmp.ne.s32.totalorder %s296, %s310
    %p312 = scmp.eq.s32.totalorder %s29, 0
    %p313 = por %p311, %p312
    %s315 = sadd.s32 %s314, 1
    %p318 = scmp.eq.s32.totalorder %s23, 1
    %p319 = scmp.ne.s32.totalorder %s314, %s316
    %p320 = scmp.eq.s32.totalorder %s23, 0
    %p321 = por %p319, %p320
    %p322 = scmp.ne.s32.totalorder %s314, %s316
    %p323 = scmp.eq.s32.totalorder %s28, 1
    %p324 = por %p322, %p323
    %p325 = scmp.ne.s32.totalorder %s316, %s317
    %p326 = scmp.eq.s32.totalorder %s28, 0
    %p327 = por %p325, %p326
    %p328 = scmp.ne.s32.totalorder %s316, %s317
    %p329 = scmp.eq.s32.totalorder %s29, 1
    %p330 = por %p328, %p329
    %p332 = scmp.ne.s32.totalorder %s317, %s331
    %p333 = scmp.eq.s32.totalorder %s29, 0
    %p334 = por %p332, %p333
    %s336 = sadd.s32 %s335, 1
    %p339 = scmp.eq.s32.totalorder %s23, 1
    %p340 = scmp.ne.s32.totalorder %s335, %s337
    %p341 = scmp.eq.s32.totalorder %s23, 0
    %p342 = por %p340, %p341
    %p343 = scmp.ne.s32.totalorder %s335, %s337
    %p344 = scmp.eq.s32.totalorder %s28, 1
    %p345 = por %p343, %p344
    %p346 = scmp.ne.s32.totalorder %s337, %s338
    %p347 = scmp.eq.s32.totalorder %s28, 0
    %p348 = por %p346, %p347
    %p349 = scmp.ne.s32.totalorder %s337, %s338
    %p350 = scmp.eq.s32.totalorder %s29, 1
    %p351 = por %p349, %p350
    %p353 = scmp.ne.s32.totalorder %s338, %s352
    %p354 = scmp.eq.s32.totalorder %s29, 0
    %p355 = por %p353, %p354
    %s357 = sadd.s32 %s356, 1
    %p360 = scmp.eq.s32.totalorder %s23, 1
    %p361 = scmp.ne.s32.totalorder %s356, %s358
    %p362 = scmp.eq.s32.totalorder %s23, 0
    %p363 = por %p361, %p362
    %p364 = scmp.ne.s32.totalorder %s356, %s358
    %p365 = scmp.eq.s32.totalorder %s28, 1
    %p366 = por %p364, %p365
    %p367 = scmp.ne.s32.totalorder %s358, %s359
    %p368 = scmp.eq.s32.totalorder %s28, 0
    %p369 = por %p367, %p368
    %p370 = scmp.ne.s32.totalorder %s358, %s359
    %p371 = scmp.eq.s32.totalorder %s29, 1
    %p372 = por %p370, %p371
    %p374 = scmp.ne.s32.totalorder %s359, %s373
    %p375 = scmp.eq.s32.totalorder %s29, 0
    %p376 = por %p374, %p375
    %s378 = sadd.s32 %s377, 1
    %p381 = scmp.eq.s32.totalorder %s23, 1
    %p382 = scmp.ne.s32.totalorder %s377, %s379
    %p383 = scmp.eq.s32.totalorder %s23, 0
    %p384 = por %p382, %p383
    %p385 = scmp.ne.s32.totalorder %s377, %s379
    %p386 = scmp.eq.s32.totalorder %s28, 1
    %p387 = por %p385, %p386
    %p388 = scmp.ne.s32.totalorder %s379, %s380
    %p389 = scmp.eq.s32.totalorder %s28, 0
    %p390 = por %p388, %p389
    %p391 = scmp.ne.s32.totalorder %s379, %s380
    %p392 = scmp.eq.s32.totalorder %s29, 1
    %p393 = por %p391, %p392
    %p395 = scmp.ne.s32.totalorder %s380, %s394
    %p396 = scmp.eq.s32.totalorder %s29, 0
    %p397 = por %p395, %p396
    %s398 = ssub.s32 %s23, %s30
    %p399 = scmp.eq.s32.totalorder %s398, 0
    %s401 = sadd.s32 %s400, 1
    %s402 = scalar_select %p399, %s400, %s401
    %p405 = pneg %p399
    %p406 = scmp.eq.s32.totalorder %s23, 1
    %p407 = por %p405, %p406
    %p408 = scmp.ne.s32.totalorder %s400, %s403
    %p409 = scmp.eq.s32.totalorder %s23, 0
    %p410 = por %p408, %p409
    %p411 = scmp.ne.s32.totalorder %s400, %s403
    %p412 = scmp.eq.s32.totalorder %s28, 1
    %p413 = por %p411, %p412
    %p414 = scmp.ne.s32.totalorder %s403, %s404
    %p415 = scmp.eq.s32.totalorder %s28, 0
    %p416 = por %p414, %p415
    %p417 = scmp.ne.s32.totalorder %s403, %s404
    %p418 = scmp.eq.s32.totalorder %s29, 1
    %p419 = por %p417, %p418
    %p421 = scmp.ne.s32.totalorder %s404, %s420
    %p422 = scmp.eq.s32.totalorder %s29, 0
    %p423 = por %p421, %p422
    %p424 = scmp.le.s32.totalorder 1, %s23
    %p425 = scmp.lt.s32.totalorder %s23, 3
    %p426 = pnand %p424, %p425
    %p427 = pneg %p426
    // Predicated region
    $region9: #{tpu_custom_call.1} parent=5 // pred_check
      _
    $region10: #{tpu_custom_call.1} parent=5 // pred_check_branch
      %429 = sbr.rel (%p426) target = $region12
    $region11: #{tpu_custom_call.1} parent=5 // pred_region
      %s430 = ssub.s32 %s23, 1
      // Predicated region
      $region13: #{tpu_custom_call.1} parent=11 // pred_check
        %p431 = pneg %p96
      $region14: #{tpu_custom_call.1} parent=11 // pred_check_branch
        %433 = sbr.rel (%p431) target = $region16
      $region15: #{tpu_custom_call.1} parent=11 // pred_region
        _
      $region16: #{tpu_custom_call.1} parent=11 // pred_fallthru
        _
      // Predicated region
      $region17: #{tpu_custom_call.1} parent=11 // pred_check
        %p434 = pneg %p117
      $region18: #{tpu_custom_call.1} parent=11 // pred_check_branch
        %436 = sbr.rel (%p434) target = $region20
      $region19: #{tpu_custom_call.1} parent=11 // pred_region
        _
      $region20: #{tpu_custom_call.1} parent=11 // pred_fallthru
        _
      // Predicated region
      $region21: #{tpu_custom_call.1} parent=11 // pred_check
        %p437 = pneg %p138
      $region22: #{tpu_custom_call.1} parent=11 // pred_check_branch
        %439 = sbr.rel (%p437) target = $region24
      $region23: #{tpu_custom_call.1} parent=11 // pred_region
        _
      $region24: #{tpu_custom_call.1} parent=11 // pred_fallthru
        _
      // Predicated region
      $region25: #{tpu_custom_call.1} parent=11 // pred_check
        %p440 = pneg %p159
      $region26: #{tpu_custom_call.1} parent=11 // pred_check_branch
        %442 = sbr.rel (%p440) target = $region28
      $region27: #{tpu_custom_call.1} parent=11 // pred_region
        _
      $region28: #{tpu_custom_call.1} parent=11 // pred_fallthru
        _
      // Predicated region
      $region29: #{tpu_custom_call.1} parent=11 // pred_check
        %p443 = pneg %p180
      $region30: #{tpu_custom_call.1} parent=11 // pred_check_branch
        %445 = sbr.rel (%p443) target = $region32
      $region31: #{tpu_custom_call.1} parent=11 // pred_region
        _
      $region32: #{tpu_custom_call.1} parent=11 // pred_fallthru
        _
      // Predicated region
      $region33: #{tpu_custom_call.1} parent=11 // pred_check
        %p446 = pneg %p201
      $region34: #{tpu_custom_call.1} parent=11 // pred_check_branch
        %448 = sbr.rel (%p446) target = $region36
      $region35: #{tpu_custom_call.1} parent=11 // pred_region
        _
      $region36: #{tpu_custom_call.1} parent=11 // pred_fallthru
        _
      // Predicated region
      $region37: #{tpu_custom_call.1} parent=11 // pred_check
        %p449 = pneg %p222
      $region38: #{tpu_custom_call.1} parent=11 // pred_check_branch
        %451 = sbr.rel (%p449) target = $region40
      $region39: #{tpu_custom_call.1} parent=11 // pred_region
        _
      $region40: #{tpu_custom_call.1} parent=11 // pred_fallthru
        _
      // Predicated region
      $region41: #{tpu_custom_call.1} parent=11 // pred_check
        %p452 = pneg %p243
      $region42: #{tpu_custom_call.1} parent=11 // pred_check_branch
        %454 = sbr.rel (%p452) target = $region44
      $region43: #{tpu_custom_call.1} parent=11 // pred_region
        _
      $region44: #{tpu_custom_call.1} parent=11 // pred_fallthru
        _
      // Predicated region
      $region45: #{tpu_custom_call.1} parent=11 // pred_check
        %p455 = pneg %p264
      $region46: #{tpu_custom_call.1} parent=11 // pred_check_branch
        %457 = sbr.rel (%p455) target = $region48
      $region47: #{tpu_custom_call.1} parent=11 // pred_region
        _
      $region48: #{tpu_custom_call.1} parent=11 // pred_fallthru
        _
      // Predicated region
      $region49: #{tpu_custom_call.1} parent=11 // pred_check
        %p458 = pneg %p285
      $region50: #{tpu_custom_call.1} parent=11 // pred_check_branch
        %460 = sbr.rel (%p458) target = $region52
      $region51: #{tpu_custom_call.1} parent=11 // pred_region
        _
      $region52: #{tpu_custom_call.1} parent=11 // pred_fallthru
        _
      // Predicated region
      $region53: #{tpu_custom_call.1} parent=11 // pred_check
        %p461 = pneg %p306
      $region54: #{tpu_custom_call.1} parent=11 // pred_check_branch
        %463 = sbr.rel (%p461) target = $region56
      $region55: #{tpu_custom_call.1} parent=11 // pred_region
        _
      $region56: #{tpu_custom_call.1} parent=11 // pred_fallthru
        _
      // Predicated region
      $region57: #{tpu_custom_call.1} parent=11 // pred_check
        %p464 = pneg %p327
      $region58: #{tpu_custom_call.1} parent=11 // pred_check_branch
        %466 = sbr.rel (%p464) target = $region60
      $region59: #{tpu_custom_call.1} parent=11 // pred_region
        _
      $region60: #{tpu_custom_call.1} parent=11 // pred_fallthru
        _
      // Predicated region
      $region61: #{tpu_custom_call.1} parent=11 // pred_check
        %p467 = pneg %p348
      $region62: #{tpu_custom_call.1} parent=11 // pred_check_branch
        %469 = sbr.rel (%p467) target = $region64
      $region63: #{tpu_custom_call.1} parent=11 // pred_region
        _
      $region64: #{tpu_custom_call.1} parent=11 // pred_fallthru
        _
      // Predicated region
      $region65: #{tpu_custom_call.1} parent=11 // pred_check
        %p470 = pneg %p369
      $region66: #{tpu_custom_call.1} parent=11 // pred_check_branch
        %472 = sbr.rel (%p470) target = $region68
      $region67: #{tpu_custom_call.1} parent=11 // pred_region
        _
      $region68: #{tpu_custom_call.1} parent=11 // pred_fallthru
        _
      // Predicated region
      $region69: #{tpu_custom_call.1} parent=11 // pred_check
        %p473 = pneg %p390
      $region70: #{tpu_custom_call.1} parent=11 // pred_check_branch
        %475 = sbr.rel (%p473) target = $region72
      $region71: #{tpu_custom_call.1} parent=11 // pred_region
        _
      $region72: #{tpu_custom_call.1} parent=11 // pred_fallthru
        _
    $region12: #{tpu_custom_call.1} parent=5 // pred_fallthru
      _
    %p476 = scmp.lt.s32.totalorder %s23, 2
    // Predicated region
    $region73: #{tpu_custom_call.1} parent=5 // pred_check
      %p477 = pneg %p476
    $region74: #{tpu_custom_call.1} parent=5 // pred_check_branch
      %479 = sbr.rel (%p477) target = $region76
    $region75: #{tpu_custom_call.1} parent=5 // pred_region
      // Predicated region
      $region77: #{tpu_custom_call.1} parent=75 // pred_check
        %p480 = pneg %p43
      $region78: #{tpu_custom_call.1} parent=75 // pred_check_branch
        %482 = sbr.rel (%p480) target = $region80
      $region79: #{tpu_custom_call.1} parent=75 // pred_region
        %s483 = smul.u32 32, %s23
        %p484 = scmp.lt.s32.totalorder %s483, 63
        %s485 = scalar_select %p484, %s483, 63
        %s486 = smul.addr %s485, 8
        %s487 = scalar_lea.vmem %s0, %s486
        %s488 = smul.u32 32, %s23
      $region80: #{tpu_custom_call.1} parent=75 // pred_fallthru
        _
      // Predicated region
      $region81: #{tpu_custom_call.1} parent=75 // pred_check
        %p489 = pneg %p69
      $region82: #{tpu_custom_call.1} parent=75 // pred_check_branch
        %491 = sbr.rel (%p489) target = $region84
      $region83: #{tpu_custom_call.1} parent=75 // pred_region
        %s492 = smul.u32 32, %s23
        %p493 = scmp.lt.s32.totalorder %s492, 63
        %s494 = scalar_select %p493, %s492, 63
        %s495 = smul.addr %s494, 8
        %s496 = scalar_lea.vmem %s1, %s495
        %s497 = smul.u32 32, %s23
      $region84: #{tpu_custom_call.1} parent=75 // pred_fallthru
        _
    $region76: #{tpu_custom_call.1} parent=5 // pred_fallthru
      _
    %p498 = scmp.le.s32.totalorder 1, %s23
    %p499 = scmp.lt.s32.totalorder %s23, 3
    %p500 = pnand %p498, %p499
    %p501 = pneg %p500
    // Predicated region
    $region85: #{tpu_custom_call.1} parent=5 // pred_check
      _
    $region86: #{tpu_custom_call.1} parent=5 // pred_check_branch
      %503 = sbr.rel (%p500) target = $region88
    $region87: #{tpu_custom_call.1} parent=5 // pred_region
      %s504 = ssub.s32 %s23, 1
      %s505 = smul.u32 32, %s28
      %p506 = scmp.lt.s32.totalorder %s505, 63
      %s507 = scalar_select %p506, %s505, 63
      %s508 = smul.addr %s507, 8
      %s509 = scalar_lea.vmem %s0, %s508
      %p510 = pneg %p49
      %p511 = pneg %p46
      %s512 = smul.u32 32, %s28
      %p513 = scmp.lt.s32.totalorder %s512, 63
      %s514 = scalar_select %p513, %s512, 63
      %s515 = smul.addr %s514, 8
      %s516 = scalar_lea.vmem %s1, %s515
      %p517 = pneg %p75
      %p518 = pneg %p72
      %p519 = pneg %p96
      %p520 = pneg %p93
      %p521 = pneg %p117
      %p522 = pneg %p114
      %p523 = pneg %p138
      %p524 = pneg %p135
      %p525 = pneg %p159
      %p526 = pneg %p156
      %p527 = pneg %p180
      %p528 = pneg %p177
      %p529 = pneg %p201
      %p530 = pneg %p198
      %p531 = pneg %p222
      %p532 = pneg %p219
      %p533 = pneg %p243
      %p534 = pneg %p240
      %p535 = pneg %p264
      %p536 = pneg %p261
      %p537 = pneg %p285
      %p538 = pneg %p282
      %p539 = pneg %p306
      %p540 = pneg %p303
      %p541 = pneg %p327
      %p542 = pneg %p324
      %p543 = pneg %p348
      %p544 = pneg %p345
      %p545 = pneg %p369
      %p546 = pneg %p366
      %p547 = pneg %p390
      %p548 = pneg %p387
      %p549 = pneg %p416
      %p550 = pneg %p413
      %s551 = smul.u32 32, %s28
      %p552 = scmp.lt.s32.totalorder %s551, 63
      %s553 = scalar_select %p552, %s551, 63
      %s554 = smul.addr %s553, 8
      %s555 = scalar_lea.vmem %s17, %s554
      %s556 = smul.u32 32, %s28
      %p557 = scmp.lt.s32.totalorder %s556, 63
      %s558 = scalar_select %p557, %s556, 63
      %s559 = smul.addr %s558, 8
      %s560 = scalar_lea.vmem %s0, %s559
      %s561 = smul.u32 32, %s28
      %s562 = smul.u32 32, %s28
      %p563 = scmp.lt.s32.totalorder %s562, 63
      %s564 = scalar_select %p563, %s562, 63
      %s565 = smul.addr %s564, 8
      %s566 = scalar_lea.vmem %s1, %s565
      %s567 = smul.u32 32, %s28
      %s568 = smul.u32 32, %s28
      %p569 = scmp.lt.s32.totalorder %s568, 63
      %s570 = scalar_select %p569, %s568, 63
      %s571 = smul.addr %s570, 8
      %s572 = scalar_lea.vmem %s17, %s571
      %s573 = smul.u32 32, %s28
      %v575 = vld [vmem:[%s560] sm:$0xff]
      %v576 = vld [vmem:[%s560 + $0x8] sm:$0xff]
      %v577 = vld [vmem:[%s560 + $0x10] sm:$0xff]
      %v578 = vld [vmem:[%s560 + $0x18] sm:$0xff]
      %v579 = vld [vmem:[%s560 + $0x20] sm:$0xff]
      %v580 = vld [vmem:[%s560 + $0x28] sm:$0xff]
      %v581 = vld [vmem:[%s560 + $0x30] sm:$0xff]
      %v582 = vld [vmem:[%s560 + $0x38] sm:$0xff]
      %v583 = vld [vmem:[%s560 + $0x40] sm:$0xff]
      %v584 = vld [vmem:[%s560 + $0x48] sm:$0xff]
      %v585 = vld [vmem:[%s560 + $0x50] sm:$0xff]
      %v586 = vld [vmem:[%s560 + $0x58] sm:$0xff]
      %v587 = vld [vmem:[%s560 + $0x60] sm:$0xff]
      %v588 = vld [vmem:[%s560 + $0x68] sm:$0xff]
      %v589 = vld [vmem:[%s560 + $0x70] sm:$0xff]
      %v590 = vld [vmem:[%s560 + $0x78] sm:$0xff]
      %v591 = vld [vmem:[%s560 + $0x80] sm:$0xff]
      %v592 = vld [vmem:[%s560 + $0x88] sm:$0xff]
      %v593 = vld [vmem:[%s560 + $0x90] sm:$0xff]
      %v594 = vld [vmem:[%s560 + $0x98] sm:$0xff]
      %v595 = vld [vmem:[%s560 + $0xa0] sm:$0xff]
      %v596 = vld [vmem:[%s560 + $0xa8] sm:$0xff]
      %v597 = vld [vmem:[%s560 + $0xb0] sm:$0xff]
      %v598 = vld [vmem:[%s560 + $0xb8] sm:$0xff]
      %v599 = vld [vmem:[%s560 + $0xc0] sm:$0xff]
      %v600 = vld [vmem:[%s560 + $0xc8] sm:$0xff]
      %v601 = vld [vmem:[%s560 + $0xd0] sm:$0xff]
      %v602 = vld [vmem:[%s560 + $0xd8] sm:$0xff]
      %v603 = vld [vmem:[%s560 + $0xe0] sm:$0xff]
      %v604 = vld [vmem:[%s560 + $0xe8] sm:$0xff]
      %v605 = vld [vmem:[%s560 + $0xf0] sm:$0xff]
      %v606 = vld [vmem:[%s560 + $0xf8] sm:$0xff]
      %v607 = vld [vmem:[%s566] sm:$0xff]
      %v608 = vld [vmem:[%s566 + $0x8] sm:$0xff]
      %v609 = vld [vmem:[%s566 + $0x10] sm:$0xff]
      %v610 = vld [vmem:[%s566 + $0x18] sm:$0xff]
      %v611 = vld [vmem:[%s566 + $0x20] sm:$0xff]
      %v612 = vld [vmem:[%s566 + $0x28] sm:$0xff]
      %v613 = vld [vmem:[%s566 + $0x30] sm:$0xff]
      %v614 = vld [vmem:[%s566 + $0x38] sm:$0xff]
      %v615 = vld [vmem:[%s566 + $0x40] sm:$0xff]
      %v616 = vld [vmem:[%s566 + $0x48] sm:$0xff]
      %v617 = vld [vmem:[%s566 + $0x50] sm:$0xff]
      %v618 = vld [vmem:[%s566 + $0x58] sm:$0xff]
      %v619 = vld [vmem:[%s566 + $0x60] sm:$0xff]
      %v620 = vld [vmem:[%s566 + $0x68] sm:$0xff]
      %v621 = vld [vmem:[%s566 + $0x70] sm:$0xff]
      %v622 = vld [vmem:[%s566 + $0x78] sm:$0xff]
      %v623 = vld [vmem:[%s566 + $0x80] sm:$0xff]
      %v624 = vld [vmem:[%s566 + $0x88] sm:$0xff]
      %v625 = vld [vmem:[%s566 + $0x90] sm:$0xff]
      %v626 = vld [vmem:[%s566 + $0x98] sm:$0xff]
      %v627 = vld [vmem:[%s566 + $0xa0] sm:$0xff]
      %v628 = vld [vmem:[%s566 + $0xa8] sm:$0xff]
      %v629 = vld [vmem:[%s566 + $0xb0] sm:$0xff]
      %v630 = vld [vmem:[%s566 + $0xb8] sm:$0xff]
      %v631 = vld [vmem:[%s566 + $0xc0] sm:$0xff]
      %v632 = vld [vmem:[%s566 + $0xc8] sm:$0xff]
      %v633 = vld [vmem:[%s566 + $0xd0] sm:$0xff]
      %v634 = vld [vmem:[%s566 + $0xd8] sm:$0xff]
      %v635 = vld [vmem:[%s566 + $0xe0] sm:$0xff]
      %v636 = vld [vmem:[%s566 + $0xe8] sm:$0xff]
      %v637 = vld [vmem:[%s566 + $0xf0] sm:$0xff]
      %v638 = vld [vmem:[%s566 + $0xf8] sm:$0xff]
      %vm639 = vcmask 130048
      %v640 = vsel %vm639, %v575, 0.0
      %641 = vadd.xlane.f32.xlu0 %v640
      %v642 = vpop.xlane.xlu0 %641
      %v643 = vsel %vm639, %v576, 0.0
      %644 = vadd.xlane.f32.xlu0 %v643
      %v645 = vpop.xlane.xlu0 %644
      %v646 = vsel %vm639, %v577, 0.0
      %647 = vadd.xlane.f32.xlu0 %v646
      %v648 = vpop.xlane.xlu0 %647
      %v649 = vsel %vm639, %v578, 0.0
      %650 = vadd.xlane.f32.xlu0 %v649
      %v651 = vpop.xlane.xlu0 %650
      %v652 = vsel %vm639, %v579, 0.0
      %653 = vadd.xlane.f32.xlu0 %v652
      %v654 = vpop.xlane.xlu0 %653
      %v655 = vsel %vm639, %v580, 0.0
      %656 = vadd.xlane.f32.xlu0 %v655
      %v657 = vpop.xlane.xlu0 %656
      %v658 = vsel %vm639, %v581, 0.0
      %659 = vadd.xlane.f32.xlu0 %v658
      %v660 = vpop.xlane.xlu0 %659
      %v661 = vsel %vm639, %v582, 0.0
      %662 = vadd.xlane.f32.xlu0 %v661
      %v663 = vpop.xlane.xlu0 %662
      %v664 = vsel %vm639, %v583, 0.0
      %665 = vadd.xlane.f32.xlu0 %v664
      %v666 = vpop.xlane.xlu0 %665
      %v667 = vsel %vm639, %v584, 0.0
      %668 = vadd.xlane.f32.xlu0 %v667
      %v669 = vpop.xlane.xlu0 %668
      %v670 = vsel %vm639, %v585, 0.0
      %671 = vadd.xlane.f32.xlu0 %v670
      %v672 = vpop.xlane.xlu0 %671
      %v673 = vsel %vm639, %v586, 0.0
      %674 = vadd.xlane.f32.xlu0 %v673
      %v675 = vpop.xlane.xlu0 %674
      %v676 = vsel %vm639, %v587, 0.0
      %677 = vadd.xlane.f32.xlu0 %v676
      %v678 = vpop.xlane.xlu0 %677
      %v679 = vsel %vm639, %v588, 0.0
      %680 = vadd.xlane.f32.xlu0 %v679
      %v681 = vpop.xlane.xlu0 %680
      %v682 = vsel %vm639, %v589, 0.0
      %683 = vadd.xlane.f32.xlu0 %v682
      %v684 = vpop.xlane.xlu0 %683
      %v685 = vsel %vm639, %v590, 0.0
      %686 = vadd.xlane.f32.xlu0 %v685
      %v687 = vpop.xlane.xlu0 %686
      %v688 = vsel %vm639, %v591, 0.0
      %689 = vadd.xlane.f32.xlu0 %v688
      %v690 = vpop.xlane.xlu0 %689
      %v691 = vsel %vm639, %v592, 0.0
      %692 = vadd.xlane.f32.xlu0 %v691
      %v693 = vpop.xlane.xlu0 %692
      %v694 = vsel %vm639, %v593, 0.0
      %695 = vadd.xlane.f32.xlu0 %v694
      %v696 = vpop.xlane.xlu0 %695
      %v697 = vsel %vm639, %v594, 0.0
      %698 = vadd.xlane.f32.xlu0 %v697
      %v699 = vpop.xlane.xlu0 %698
      %v700 = vsel %vm639, %v595, 0.0
      %701 = vadd.xlane.f32.xlu0 %v700
      %v702 = vpop.xlane.xlu0 %701
      %v703 = vsel %vm639, %v596, 0.0
      %704 = vadd.xlane.f32.xlu0 %v703
      %v705 = vpop.xlane.xlu0 %704
      %v706 = vsel %vm639, %v597, 0.0
      %707 = vadd.xlane.f32.xlu0 %v706
      %v708 = vpop.xlane.xlu0 %707
      %v709 = vsel %vm639, %v598, 0.0
      %710 = vadd.xlane.f32.xlu0 %v709
      %v711 = vpop.xlane.xlu0 %710
      %v712 = vsel %vm639, %v599, 0.0
      %713 = vadd.xlane.f32.xlu0 %v712
      %v714 = vpop.xlane.xlu0 %713
      %v715 = vsel %vm639, %v600, 0.0
      %716 = vadd.xlane.f32.xlu0 %v715
      %v717 = vpop.xlane.xlu0 %716
      %v718 = vsel %vm639, %v601, 0.0
      %719 = vadd.xlane.f32.xlu0 %v718
      %v720 = vpop.xlane.xlu0 %719
      %v721 = vsel %vm639, %v602, 0.0
      %722 = vadd.xlane.f32.xlu0 %v721
      %v723 = vpop.xlane.xlu0 %722
      %v724 = vsel %vm639, %v603, 0.0
      %725 = vadd.xlane.f32.xlu0 %v724
      %v726 = vpop.xlane.xlu0 %725
      %v727 = vsel %vm639, %v604, 0.0
      %728 = vadd.xlane.f32.xlu0 %v727
      %v729 = vpop.xlane.xlu0 %728
      %v730 = vsel %vm639, %v605, 0.0
      %731 = vadd.xlane.f32.xlu0 %v730
      %v732 = vpop.xlane.xlu0 %731
      %v733 = vsel %vm639, %v606, 0.0
      %734 = vadd.xlane.f32.xlu0 %v733
      %v735 = vpop.xlane.xlu0 %734
      %vm736 = vcmask 64512
      %v737 = vsel %vm736, %v607, 0.0
      %738 = vadd.xlane.f32.xlu0 %v737
      %v739 = vpop.xlane.xlu0 %738
      %v740 = vsel %vm736, %v608, 0.0
      %741 = vadd.xlane.f32.xlu0 %v740
      %v742 = vpop.xlane.xlu0 %741
      %v743 = vsel %vm736, %v609, 0.0
      %744 = vadd.xlane.f32.xlu0 %v743
      %v745 = vpop.xlane.xlu0 %744
      %v746 = vsel %vm736, %v610, 0.0
      %747 = vadd.xlane.f32.xlu0 %v746
      %v748 = vpop.xlane.xlu0 %747
      %v749 = vsel %vm736, %v611, 0.0
      %750 = vadd.xlane.f32.xlu0 %v749
      %v751 = vpop.xlane.xlu0 %750
      %v752 = vsel %vm736, %v612, 0.0
      %753 = vadd.xlane.f32.xlu0 %v752
      %v754 = vpop.xlane.xlu0 %753
      %v755 = vsel %vm736, %v613, 0.0
      %756 = vadd.xlane.f32.xlu0 %v755
      %v757 = vpop.xlane.xlu0 %756
      %v758 = vsel %vm736, %v614, 0.0
      %759 = vadd.xlane.f32.xlu0 %v758
      %v760 = vpop.xlane.xlu0 %759
      %v761 = vsel %vm736, %v615, 0.0
      %762 = vadd.xlane.f32.xlu0 %v761
      %v763 = vpop.xlane.xlu0 %762
      %v764 = vsel %vm736, %v616, 0.0
      %765 = vadd.xlane.f32.xlu0 %v764
      %v766 = vpop.xlane.xlu0 %765
      %v767 = vsel %vm736, %v617, 0.0
      %768 = vadd.xlane.f32.xlu0 %v767
      %v769 = vpop.xlane.xlu0 %768
      %v770 = vsel %vm736, %v618, 0.0
      %771 = vadd.xlane.f32.xlu0 %v770
      %v772 = vpop.xlane.xlu0 %771
      %v773 = vsel %vm736, %v619, 0.0
      %774 = vadd.xlane.f32.xlu0 %v773
      %v775 = vpop.xlane.xlu0 %774
      %v776 = vsel %vm736, %v620, 0.0
      %777 = vadd.xlane.f32.xlu0 %v776
      %v778 = vpop.xlane.xlu0 %777
      %v779 = vsel %vm736, %v621, 0.0
      %780 = vadd.xlane.f32.xlu0 %v779
      %v781 = vpop.xlane.xlu0 %780
      %v782 = vsel %vm736, %v622, 0.0
      %783 = vadd.xlane.f32.xlu0 %v782
      %v784 = vpop.xlane.xlu0 %783
      %v785 = vsel %vm736, %v623, 0.0
      %786 = vadd.xlane.f32.xlu0 %v785
      %v787 = vpop.xlane.xlu0 %786
      %v788 = vsel %vm736, %v624, 0.0
      %789 = vadd.xlane.f32.xlu0 %v788
      %v790 = vpop.xlane.xlu0 %789
      %v791 = vsel %vm736, %v625, 0.0
      %792 = vadd.xlane.f32.xlu0 %v791
      %v793 = vpop.xlane.xlu0 %792
      %v794 = vsel %vm736, %v626, 0.0
      %795 = vadd.xlane.f32.xlu0 %v794
      %v796 = vpop.xlane.xlu0 %795
      %v797 = vsel %vm736, %v627, 0.0
      %798 = vadd.xlane.f32.xlu0 %v797
      %v799 = vpop.xlane.xlu0 %798
      %v800 = vsel %vm736, %v628, 0.0
      %801 = vadd.xlane.f32.xlu0 %v800
      %v802 = vpop.xlane.xlu0 %801
      %v803 = vsel %vm736, %v629, 0.0
      %804 = vadd.xlane.f32.xlu0 %v803
      %v805 = vpop.xlane.xlu0 %804
      %v806 = vsel %vm736, %v630, 0.0
      %807 = vadd.xlane.f32.xlu0 %v806
      %v808 = vpop.xlane.xlu0 %807
      %v809 = vsel %vm736, %v631, 0.0
      %810 = vadd.xlane.f32.xlu0 %v809
      %v811 = vpop.xlane.xlu0 %810
      %v812 = vsel %vm736, %v632, 0.0
      %813 = vadd.xlane.f32.xlu0 %v812
      %v814 = vpop.xlane.xlu0 %813
      %v815 = vsel %vm736, %v633, 0.0
      %816 = vadd.xlane.f32.xlu0 %v815
      %v817 = vpop.xlane.xlu0 %816
      %v818 = vsel %vm736, %v634, 0.0
      %819 = vadd.xlane.f32.xlu0 %v818
      %v820 = vpop.xlane.xlu0 %819
      %v821 = vsel %vm736, %v635, 0.0
      %822 = vadd.xlane.f32.xlu0 %v821
      %v823 = vpop.xlane.xlu0 %822
      %v824 = vsel %vm736, %v636, 0.0
      %825 = vadd.xlane.f32.xlu0 %v824
      %v826 = vpop.xlane.xlu0 %825
      %v827 = vsel %vm736, %v637, 0.0
      %828 = vadd.xlane.f32.xlu0 %v827
      %v829 = vpop.xlane.xlu0 %828
      %v830 = vsel %vm736, %v638, 0.0
      %831 = vadd.xlane.f32.xlu0 %v830
      %v832 = vpop.xlane.xlu0 %831
      %v833 = vadd.f32 %v642, %v739
      %v834 = vadd.f32 %v645, %v742
      %v835 = vadd.f32 %v648, %v745
      %v836 = vadd.f32 %v651, %v748
      %v837 = vadd.f32 %v654, %v751
      %v838 = vadd.f32 %v657, %v754
      %v839 = vadd.f32 %v660, %v757
      %v840 = vadd.f32 %v663, %v760
      %v841 = vadd.f32 %v666, %v763
      %v842 = vadd.f32 %v669, %v766
      %v843 = vadd.f32 %v672, %v769
      %v844 = vadd.f32 %v675, %v772
      %v845 = vadd.f32 %v678, %v775
      %v846 = vadd.f32 %v681, %v778
      %v847 = vadd.f32 %v684, %v781
      %v848 = vadd.f32 %v687, %v784
      %v849 = vadd.f32 %v690, %v787
      %v850 = vadd.f32 %v693, %v790
      %v851 = vadd.f32 %v696, %v793
      %v852 = vadd.f32 %v699, %v796
      %v853 = vadd.f32 %v702, %v799
      %v854 = vadd.f32 %v705, %v802
      %v855 = vadd.f32 %v708, %v805
      %v856 = vadd.f32 %v711, %v808
      %v857 = vadd.f32 %v714, %v811
      %v858 = vadd.f32 %v717, %v814
      %v859 = vadd.f32 %v720, %v817
      %v860 = vadd.f32 %v723, %v820
      %v861 = vadd.f32 %v726, %v823
      %v862 = vadd.f32 %v729, %v826
      %v863 = vadd.f32 %v732, %v829
      %v864 = vadd.f32 %v735, %v832
      %v865 = vmul.f32 %v575, %v575
      %v866 = vmul.f32 %v576, %v576
      %v867 = vmul.f32 %v577, %v577
      %v868 = vmul.f32 %v578, %v578
      %v869 = vmul.f32 %v579, %v579
      %v870 = vmul.f32 %v580, %v580
      %v871 = vmul.f32 %v581, %v581
      %v872 = vmul.f32 %v582, %v582
      %v873 = vmul.f32 %v583, %v583
      %v874 = vmul.f32 %v584, %v584
      %v875 = vmul.f32 %v585, %v585
      %v876 = vmul.f32 %v586, %v586
      %v877 = vmul.f32 %v587, %v587
      %v878 = vmul.f32 %v588, %v588
      %v879 = vmul.f32 %v589, %v589
      %v880 = vmul.f32 %v590, %v590
      %v881 = vmul.f32 %v591, %v591
      %v882 = vmul.f32 %v592, %v592
      %v883 = vmul.f32 %v593, %v593
      %v884 = vmul.f32 %v594, %v594
      %v885 = vmul.f32 %v595, %v595
      %v886 = vmul.f32 %v596, %v596
      %v887 = vmul.f32 %v597, %v597
      %v888 = vmul.f32 %v598, %v598
      %v889 = vmul.f32 %v599, %v599
      %v890 = vmul.f32 %v600, %v600
      %v891 = vmul.f32 %v601, %v601
      %v892 = vmul.f32 %v602, %v602
      %v893 = vmul.f32 %v603, %v603
      %v894 = vmul.f32 %v604, %v604
      %v895 = vmul.f32 %v605, %v605
      %v896 = vmul.f32 %v606, %v606
      %v897 = vsel %vm639, %v865, 0.0
      %898 = vadd.xlane.f32.xlu0 %v897
      %v899 = vpop.xlane.xlu0 %898
      %v900 = vsel %vm639, %v866, 0.0
      %901 = vadd.xlane.f32.xlu0 %v900
      %v902 = vpop.xlane.xlu0 %901
      %v903 = vsel %vm639, %v867, 0.0
      %904 = vadd.xlane.f32.xlu0 %v903
      %v905 = vpop.xlane.xlu0 %904
      %v906 = vsel %vm639, %v868, 0.0
      %907 = vadd.xlane.f32.xlu0 %v906
      %v908 = vpop.xlane.xlu0 %907
      %v909 = vsel %vm639, %v869, 0.0
      %910 = vadd.xlane.f32.xlu0 %v909
      %v911 = vpop.xlane.xlu0 %910
      %v912 = vsel %vm639, %v870, 0.0
      %913 = vadd.xlane.f32.xlu0 %v912
      %v914 = vpop.xlane.xlu0 %913
      %v915 = vsel %vm639, %v871, 0.0
      %916 = vadd.xlane.f32.xlu0 %v915
      %v917 = vpop.xlane.xlu0 %916
      %v918 = vsel %vm639, %v872, 0.0
      %919 = vadd.xlane.f32.xlu0 %v918
      %v920 = vpop.xlane.xlu0 %919
      %v921 = vsel %vm639, %v873, 0.0
      %922 = vadd.xlane.f32.xlu0 %v921
      %v923 = vpop.xlane.xlu0 %922
      %v924 = vsel %vm639, %v874, 0.0
      %925 = vadd.xlane.f32.xlu0 %v924
      %v926 = vpop.xlane.xlu0 %925
      %v927 = vsel %vm639, %v875, 0.0
      %928 = vadd.xlane.f32.xlu0 %v927
      %v929 = vpop.xlane.xlu0 %928
      %v930 = vsel %vm639, %v876, 0.0
      %931 = vadd.xlane.f32.xlu0 %v930
      %v932 = vpop.xlane.xlu0 %931
      %v933 = vsel %vm639, %v877, 0.0
      %934 = vadd.xlane.f32.xlu0 %v933
      %v935 = vpop.xlane.xlu0 %934
      %v936 = vsel %vm639, %v878, 0.0
      %937 = vadd.xlane.f32.xlu0 %v936
      %v938 = vpop.xlane.xlu0 %937
      %v939 = vsel %vm639, %v879, 0.0
      %940 = vadd.xlane.f32.xlu0 %v939
      %v941 = vpop.xlane.xlu0 %940
      %v942 = vsel %vm639, %v880, 0.0
      %943 = vadd.xlane.f32.xlu0 %v942
      %v944 = vpop.xlane.xlu0 %943
      %v945 = vsel %vm639, %v881, 0.0
      %946 = vadd.xlane.f32.xlu0 %v945
      %v947 = vpop.xlane.xlu0 %946
      %v948 = vsel %vm639, %v882, 0.0
      %949 = vadd.xlane.f32.xlu0 %v948
      %v950 = vpop.xlane.xlu0 %949
      %v951 = vsel %vm639, %v883, 0.0
      %952 = vadd.xlane.f32.xlu0 %v951
      %v953 = vpop.xlane.xlu0 %952
      %v954 = vsel %vm639, %v884, 0.0
      %955 = vadd.xlane.f32.xlu0 %v954
      %v956 = vpop.xlane.xlu0 %955
      %v957 = vsel %vm639, %v885, 0.0
      %958 = vadd.xlane.f32.xlu0 %v957
      %v959 = vpop.xlane.xlu0 %958
      %v960 = vsel %vm639, %v886, 0.0
      %961 = vadd.xlane.f32.xlu0 %v960
      %v962 = vpop.xlane.xlu0 %961
      %v963 = vsel %vm639, %v887, 0.0
      %964 = vadd.xlane.f32.xlu0 %v963
      %v965 = vpop.xlane.xlu0 %964
      %v966 = vsel %vm639, %v888, 0.0
      %967 = vadd.xlane.f32.xlu0 %v966
      %v968 = vpop.xlane.xlu0 %967
      %v969 = vsel %vm639, %v889, 0.0
      %970 = vadd.xlane.f32.xlu0 %v969
      %v971 = vpop.xlane.xlu0 %970
      %v972 = vsel %vm639, %v890, 0.0
      %973 = vadd.xlane.f32.xlu0 %v972
      %v974 = vpop.xlane.xlu0 %973
      %v975 = vsel %vm639, %v891, 0.0
      %976 = vadd.xlane.f32.xlu0 %v975
      %v977 = vpop.xlane.xlu0 %976
      %v978 = vsel %vm639, %v892, 0.0
      %979 = vadd.xlane.f32.xlu0 %v978
      %v980 = vpop.xlane.xlu0 %979
      %v981 = vsel %vm639, %v893, 0.0
      %982 = vadd.xlane.f32.xlu0 %v981
      %v983 = vpop.xlane.xlu0 %982
      %v984 = vsel %vm639, %v894, 0.0
      %985 = vadd.xlane.f32.xlu0 %v984
      %v986 = vpop.xlane.xlu0 %985
      %v987 = vsel %vm639, %v895, 0.0
      %988 = vadd.xlane.f32.xlu0 %v987
      %v989 = vpop.xlane.xlu0 %988
      %v990 = vsel %vm639, %v896, 0.0
      %991 = vadd.xlane.f32.xlu0 %v990
      %v992 = vpop.xlane.xlu0 %991
      %v993 = vmul.f32 %v607, %v607
      %v994 = vmul.f32 %v608, %v608
      %v995 = vmul.f32 %v609, %v609
      %v996 = vmul.f32 %v610, %v610
      %v997 = vmul.f32 %v611, %v611
      %v998 = vmul.f32 %v612, %v612
      %v999 = vmul.f32 %v613, %v613
      %v1000 = vmul.f32 %v614, %v614
      %v1001 = vmul.f32 %v615, %v615
      %v1002 = vmul.f32 %v616, %v616
      %v1003 = vmul.f32 %v617, %v617
      %v1004 = vmul.f32 %v618, %v618
      %v1005 = vmul.f32 %v619, %v619
      %v1006 = vmul.f32 %v620, %v620
      %v1007 = vmul.f32 %v621, %v621
      %v1008 = vmul.f32 %v622, %v622
      %v1009 = vmul.f32 %v623, %v623
      %v1010 = vmul.f32 %v624, %v624
      %v1011 = vmul.f32 %v625, %v625
      %v1012 = vmul.f32 %v626, %v626
      %v1013 = vmul.f32 %v627, %v627
      %v1014 = vmul.f32 %v628, %v628
      %v1015 = vmul.f32 %v629, %v629
      %v1016 = vmul.f32 %v630, %v630
      %v1017 = vmul.f32 %v631, %v631
      %v1018 = vmul.f32 %v632, %v632
      %v1019 = vmul.f32 %v633, %v633
      %v1020 = vmul.f32 %v634, %v634
      %v1021 = vmul.f32 %v635, %v635
      %v1022 = vmul.f32 %v636, %v636
      %v1023 = vmul.f32 %v637, %v637
      %v1024 = vmul.f32 %v638, %v638
      %v1025 = vsel %vm736, %v993, 0.0
      %1026 = vadd.xlane.f32.xlu0 %v1025
      %v1027 = vpop.xlane.xlu0 %1026
      %v1028 = vsel %vm736, %v994, 0.0
      %1029 = vadd.xlane.f32.xlu0 %v1028
      %v1030 = vpop.xlane.xlu0 %1029
      %v1031 = vsel %vm736, %v995, 0.0
      %1032 = vadd.xlane.f32.xlu0 %v1031
      %v1033 = vpop.xlane.xlu0 %1032
      %v1034 = vsel %vm736, %v996, 0.0
      %1035 = vadd.xlane.f32.xlu0 %v1034
      %v1036 = vpop.xlane.xlu0 %1035
      %v1037 = vsel %vm736, %v997, 0.0
      %1038 = vadd.xlane.f32.xlu0 %v1037
      %v1039 = vpop.xlane.xlu0 %1038
      %v1040 = vsel %vm736, %v998, 0.0
      %1041 = vadd.xlane.f32.xlu0 %v1040
      %v1042 = vpop.xlane.xlu0 %1041
      %v1043 = vsel %vm736, %v999, 0.0
      %1044 = vadd.xlane.f32.xlu0 %v1043
      %v1045 = vpop.xlane.xlu0 %1044
      %v1046 = vsel %vm736, %v1000, 0.0
      %1047 = vadd.xlane.f32.xlu0 %v1046
      %v1048 = vpop.xlane.xlu0 %1047
      %v1049 = vsel %vm736, %v1001, 0.0
      %1050 = vadd.xlane.f32.xlu0 %v1049
      %v1051 = vpop.xlane.xlu0 %1050
      %v1052 = vsel %vm736, %v1002, 0.0
      %1053 = vadd.xlane.f32.xlu0 %v1052
      %v1054 = vpop.xlane.xlu0 %1053
      %v1055 = vsel %vm736, %v1003, 0.0
      %1056 = vadd.xlane.f32.xlu0 %v1055
      %v1057 = vpop.xlane.xlu0 %1056
      %v1058 = vsel %vm736, %v1004, 0.0
      %1059 = vadd.xlane.f32.xlu0 %v1058
      %v1060 = vpop.xlane.xlu0 %1059
      %v1061 = vsel %vm736, %v1005, 0.0
      %1062 = vadd.xlane.f32.xlu0 %v1061
      %v1063 = vpop.xlane.xlu0 %1062
      %v1064 = vsel %vm736, %v1006, 0.0
      %1065 = vadd.xlane.f32.xlu0 %v1064
      %v1066 = vpop.xlane.xlu0 %1065
      %v1067 = vsel %vm736, %v1007, 0.0
      %1068 = vadd.xlane.f32.xlu0 %v1067
      %v1069 = vpop.xlane.xlu0 %1068
      %v1070 = vsel %vm736, %v1008, 0.0
      %1071 = vadd.xlane.f32.xlu0 %v1070
      %v1072 = vpop.xlane.xlu0 %1071
      %v1073 = vsel %vm736, %v1009, 0.0
      %1074 = vadd.xlane.f32.xlu0 %v1073
      %v1075 = vpop.xlane.xlu0 %1074
      %v1076 = vsel %vm736, %v1010, 0.0
      %1077 = vadd.xlane.f32.xlu0 %v1076
      %v1078 = vpop.xlane.xlu0 %1077
      %v1079 = vsel %vm736, %v1011, 0.0
      %1080 = vadd.xlane.f32.xlu0 %v1079
      %v1081 = vpop.xlane.xlu0 %1080
      %v1082 = vsel %vm736, %v1012, 0.0
      %1083 = vadd.xlane.f32.xlu0 %v1082
      %v1084 = vpop.xlane.xlu0 %1083
      %v1085 = vsel %vm736, %v1013, 0.0
      %1086 = vadd.xlane.f32.xlu0 %v1085
      %v1087 = vpop.xlane.xlu0 %1086
      %v1088 = vsel %vm736, %v1014, 0.0
      %1089 = vadd.xlane.f32.xlu0 %v1088
      %v1090 = vpop.xlane.xlu0 %1089
      %v1091 = vsel %vm736, %v1015, 0.0
      %1092 = vadd.xlane.f32.xlu0 %v1091
      %v1093 = vpop.xlane.xlu0 %1092
      %v1094 = vsel %vm736, %v1016, 0.0
      %1095 = vadd.xlane.f32.xlu0 %v1094
      %v1096 = vpop.xlane.xlu0 %1095
      %v1097 = vsel %vm736, %v1017, 0.0
      %1098 = vadd.xlane.f32.xlu0 %v1097
      %v1099 = vpop.xlane.xlu0 %1098
      %v1100 = vsel %vm736, %v1018, 0.0
      %1101 = vadd.xlane.f32.xlu0 %v1100
      %v1102 = vpop.xlane.xlu0 %1101
      %v1103 = vsel %vm736, %v1019, 0.0
      %1104 = vadd.xlane.f32.xlu0 %v1103
      %v1105 = vpop.xlane.xlu0 %1104
      %v1106 = vsel %vm736, %v1020, 0.0
      %1107 = vadd.xlane.f32.xlu0 %v1106
      %v1108 = vpop.xlane.xlu0 %1107
      %v1109 = vsel %vm736, %v1021, 0.0
      %1110 = vadd.xlane.f32.xlu0 %v1109
      %v1111 = vpop.xlane.xlu0 %1110
      %v1112 = vsel %vm736, %v1022, 0.0
      %1113 = vadd.xlane.f32.xlu0 %v1112
      %v1114 = vpop.xlane.xlu0 %1113
      %v1115 = vsel %vm736, %v1023, 0.0
      %1116 = vadd.xlane.f32.xlu0 %v1115
      %v1117 = vpop.xlane.xlu0 %1116
      %v1118 = vsel %vm736, %v1024, 0.0
      %1119 = vadd.xlane.f32.xlu0 %v1118
      %v1120 = vpop.xlane.xlu0 %1119
      %v1121 = vadd.f32 %v899, %v1027
      %v1122 = vadd.f32 %v902, %v1030
      %v1123 = vadd.f32 %v905, %v1033
      %v1124 = vadd.f32 %v908, %v1036
      %v1125 = vadd.f32 %v911, %v1039
      %v1126 = vadd.f32 %v914, %v1042
      %v1127 = vadd.f32 %v917, %v1045
      %v1128 = vadd.f32 %v920, %v1048
      %v1129 = vadd.f32 %v923, %v1051
      %v1130 = vadd.f32 %v926, %v1054
      %v1131 = vadd.f32 %v929, %v1057
      %v1132 = vadd.f32 %v932, %v1060
      %v1133 = vadd.f32 %v935, %v1063
      %v1134 = vadd.f32 %v938, %v1066
      %v1135 = vadd.f32 %v941, %v1069
      %v1136 = vadd.f32 %v944, %v1072
      %v1137 = vadd.f32 %v947, %v1075
      %v1138 = vadd.f32 %v950, %v1078
      %v1139 = vadd.f32 %v953, %v1081
      %v1140 = vadd.f32 %v956, %v1084
      %v1141 = vadd.f32 %v959, %v1087
      %v1142 = vadd.f32 %v962, %v1090
      %v1143 = vadd.f32 %v965, %v1093
      %v1144 = vadd.f32 %v968, %v1096
      %v1145 = vadd.f32 %v971, %v1099
      %v1146 = vadd.f32 %v974, %v1102
      %v1147 = vadd.f32 %v977, %v1105
      %v1148 = vadd.f32 %v980, %v1108
      %v1149 = vadd.f32 %v983, %v1111
      %v1150 = vadd.f32 %v986, %v1114
      %v1151 = vadd.f32 %v989, %v1117
      %v1152 = vadd.f32 %v992, %v1120
      %v1153 = vmul.f32 %v833, 0.041666668
      %v1154 = vmul.f32 %v834, 0.041666668
      %v1155 = vmul.f32 %v835, 0.041666668
      %v1156 = vmul.f32 %v836, 0.041666668
      %v1157 = vmul.f32 %v837, 0.041666668
      %v1158 = vmul.f32 %v838, 0.041666668
      %v1159 = vmul.f32 %v839, 0.041666668
      %v1160 = vmul.f32 %v840, 0.041666668
      %v1161 = vmul.f32 %v841, 0.041666668
      %v1162 = vmul.f32 %v842, 0.041666668
      %v1163 = vmul.f32 %v843, 0.041666668
      %v1164 = vmul.f32 %v844, 0.041666668
      %v1165 = vmul.f32 %v845, 0.041666668
      %v1166 = vmul.f32 %v846, 0.041666668
      %v1167 = vmul.f32 %v847, 0.041666668
      %v1168 = vmul.f32 %v848, 0.041666668
      %v1169 = vmul.f32 %v849, 0.041666668
      %v1170 = vmul.f32 %v850, 0.041666668
      %v1171 = vmul.f32 %v851, 0.041666668
      %v1172 = vmul.f32 %v852, 0.041666668
      %v1173 = vmul.f32 %v853, 0.041666668
      %v1174 = vmul.f32 %v854, 0.041666668
      %v1175 = vmul.f32 %v855, 0.041666668
      %v1176 = vmul.f32 %v856, 0.041666668
      %v1177 = vmul.f32 %v857, 0.041666668
      %v1178 = vmul.f32 %v858, 0.041666668
      %v1179 = vmul.f32 %v859, 0.041666668
      %v1180 = vmul.f32 %v860, 0.041666668
      %v1181 = vmul.f32 %v861, 0.041666668
      %v1182 = vmul.f32 %v862, 0.041666668
      %v1183 = vmul.f32 %v863, 0.041666668
      %v1184 = vmul.f32 %v864, 0.041666668
      %v1185 = vmul.f32 %v1121, 0.041666668
      %v1186 = vmul.f32 %v1122, 0.041666668
      %v1187 = vmul.f32 %v1123, 0.041666668
      %v1188 = vmul.f32 %v1124, 0.041666668
      %v1189 = vmul.f32 %v1125, 0.041666668
      %v1190 = vmul.f32 %v1126, 0.041666668
      %v1191 = vmul.f32 %v1127, 0.041666668
      %v1192 = vmul.f32 %v1128, 0.041666668
      %v1193 = vmul.f32 %v1129, 0.041666668
      %v1194 = vmul.f32 %v1130, 0.041666668
      %v1195 = vmul.f32 %v1131, 0.041666668
      %v1196 = vmul.f32 %v1132, 0.041666668
      %v1197 = vmul.f32 %v1133, 0.041666668
      %v1198 = vmul.f32 %v1134, 0.041666668
      %v1199 = vmul.f32 %v1135, 0.041666668
      %v1200 = vmul.f32 %v1136, 0.041666668
      %v1201 = vmul.f32 %v1137, 0.041666668
      %v1202 = vmul.f32 %v1138, 0.041666668
      %v1203 = vmul.f32 %v1139, 0.041666668
      %v1204 = vmul.f32 %v1140, 0.041666668
      %v1205 = vmul.f32 %v1141, 0.041666668
      %v1206 = vmul.f32 %v1142, 0.041666668
      %v1207 = vmul.f32 %v1143, 0.041666668
      %v1208 = vmul.f32 %v1144, 0.041666668
      %v1209 = vmul.f32 %v1145, 0.041666668
      %v1210 = vmul.f32 %v1146, 0.041666668
      %v1211 = vmul.f32 %v1147, 0.041666668
      %v1212 = vmul.f32 %v1148, 0.041666668
      %v1213 = vmul.f32 %v1149, 0.041666668
      %v1214 = vmul.f32 %v1150, 0.041666668
      %v1215 = vmul.f32 %v1151, 0.041666668
      %v1216 = vmul.f32 %v1152, 0.041666668
      %v1217 = vmul.f32 %v1153, %v1153
      %v1218 = vmul.f32 %v1154, %v1154
      %v1219 = vmul.f32 %v1155, %v1155
      %v1220 = vmul.f32 %v1156, %v1156
      %v1221 = vmul.f32 %v1157, %v1157
      %v1222 = vmul.f32 %v1158, %v1158
      %v1223 = vmul.f32 %v1159, %v1159
      %v1224 = vmul.f32 %v1160, %v1160
      %v1225 = vmul.f32 %v1161, %v1161
      %v1226 = vmul.f32 %v1162, %v1162
      %v1227 = vmul.f32 %v1163, %v1163
      %v1228 = vmul.f32 %v1164, %v1164
      %v1229 = vmul.f32 %v1165, %v1165
      %v1230 = vmul.f32 %v1166, %v1166
      %v1231 = vmul.f32 %v1167, %v1167
      %v1232 = vmul.f32 %v1168, %v1168
      %v1233 = vmul.f32 %v1169, %v1169
      %v1234 = vmul.f32 %v1170, %v1170
      %v1235 = vmul.f32 %v1171, %v1171
      %v1236 = vmul.f32 %v1172, %v1172
      %v1237 = vmul.f32 %v1173, %v1173
      %v1238 = vmul.f32 %v1174, %v1174
      %v1239 = vmul.f32 %v1175, %v1175
      %v1240 = vmul.f32 %v1176, %v1176
      %v1241 = vmul.f32 %v1177, %v1177
      %v1242 = vmul.f32 %v1178, %v1178
      %v1243 = vmul.f32 %v1179, %v1179
      %v1244 = vmul.f32 %v1180, %v1180
      %v1245 = vmul.f32 %v1181, %v1181
      %v1246 = vmul.f32 %v1182, %v1182
      %v1247 = vmul.f32 %v1183, %v1183
      %v1248 = vmul.f32 %v1184, %v1184
      %v1249 = vsub.f32 %v1185, %v1217
      %v1250 = vsub.f32 %v1186, %v1218
      %v1251 = vsub.f32 %v1187, %v1219
      %v1252 = vsub.f32 %v1188, %v1220
      %v1253 = vsub.f32 %v1189, %v1221
      %v1254 = vsub.f32 %v1190, %v1222
      %v1255 = vsub.f32 %v1191, %v1223
      %v1256 = vsub.f32 %v1192, %v1224
      %v1257 = vsub.f32 %v1193, %v1225
      %v1258 = vsub.f32 %v1194, %v1226
      %v1259 = vsub.f32 %v1195, %v1227
      %v1260 = vsub.f32 %v1196, %v1228
      %v1261 = vsub.f32 %v1197, %v1229
      %v1262 = vsub.f32 %v1198, %v1230
      %v1263 = vsub.f32 %v1199, %v1231
      %v1264 = vsub.f32 %v1200, %v1232
      %v1265 = vsub.f32 %v1201, %v1233
      %v1266 = vsub.f32 %v1202, %v1234
      %v1267 = vsub.f32 %v1203, %v1235
      %v1268 = vsub.f32 %v1204, %v1236
      %v1269 = vsub.f32 %v1205, %v1237
      %v1270 = vsub.f32 %v1206, %v1238
      %v1271 = vsub.f32 %v1207, %v1239
      %v1272 = vsub.f32 %v1208, %v1240
      %v1273 = vsub.f32 %v1209, %v1241
      %v1274 = vsub.f32 %v1210, %v1242
      %v1275 = vsub.f32 %v1211, %v1243
      %v1276 = vsub.f32 %v1212, %v1244
      %v1277 = vsub.f32 %v1213, %v1245
      %v1278 = vsub.f32 %v1214, %v1246
      %v1279 = vsub.f32 %v1215, %v1247
      %v1280 = vsub.f32 %v1216, %v1248
      %v1281 = vadd.f32 %v1249, 1e-05
      %v1282 = vadd.f32 %v1250, 1e-05
      %v1283 = vadd.f32 %v1251, 1e-05
      %v1284 = vadd.f32 %v1252, 1e-05
      %v1285 = vadd.f32 %v1253, 1e-05
      %v1286 = vadd.f32 %v1254, 1e-05
      %v1287 = vadd.f32 %v1255, 1e-05
      %v1288 = vadd.f32 %v1256, 1e-05
      %v1289 = vadd.f32 %v1257, 1e-05
      %v1290 = vadd.f32 %v1258, 1e-05
      %v1291 = vadd.f32 %v1259, 1e-05
      %v1292 = vadd.f32 %v1260, 1e-05
      %v1293 = vadd.f32 %v1261, 1e-05
      %v1294 = vadd.f32 %v1262, 1e-05
      %v1295 = vadd.f32 %v1263, 1e-05
      %v1296 = vadd.f32 %v1264, 1e-05
      %v1297 = vadd.f32 %v1265, 1e-05
      %v1298 = vadd.f32 %v1266, 1e-05
      %v1299 = vadd.f32 %v1267, 1e-05
      %v1300 = vadd.f32 %v1268, 1e-05
      %v1301 = vadd.f32 %v1269, 1e-05
      %v1302 = vadd.f32 %v1270, 1e-05
      %v1303 = vadd.f32 %v1271, 1e-05
      %v1304 = vadd.f32 %v1272, 1e-05
      %v1305 = vadd.f32 %v1273, 1e-05
      %v1306 = vadd.f32 %v1274, 1e-05
      %v1307 = vadd.f32 %v1275, 1e-05
      %v1308 = vadd.f32 %v1276, 1e-05
      %v1309 = vadd.f32 %v1277, 1e-05
      %v1310 = vadd.f32 %v1278, 1e-05
      %v1311 = vadd.f32 %v1279, 1e-05
      %v1312 = vadd.f32 %v1280, 1e-05
      %v1313 = vrsqrt.pop %v1281
      %v1314 = vrsqrt.pop %v1282
      %v1315 = vrsqrt.pop %v1283
      %v1316 = vrsqrt.pop %v1284
      %v1317 = vrsqrt.pop %v1285
      %v1318 = vrsqrt.pop %v1286
      %v1319 = vrsqrt.pop %v1287
      %v1320 = vrsqrt.pop %v1288
      %v1321 = vrsqrt.pop %v1289
      %v1322 = vrsqrt.pop %v1290
      %v1323 = vrsqrt.pop %v1291
      %v1324 = vrsqrt.pop %v1292
      %v1325 = vrsqrt.pop %v1293
      %v1326 = vrsqrt.pop %v1294
      %v1327 = vrsqrt.pop %v1295
      %v1328 = vrsqrt.pop %v1296
      %v1329 = vrsqrt.pop %v1297
      %v1330 = vrsqrt.pop %v1298
      %v1331 = vrsqrt.pop %v1299
      %v1332 = vrsqrt.pop %v1300
      %v1333 = vrsqrt.pop %v1301
      %v1334 = vrsqrt.pop %v1302
      %v1335 = vrsqrt.pop %v1303
      %v1336 = vrsqrt.pop %v1304
      %v1337 = vrsqrt.pop %v1305
      %v1338 = vrsqrt.pop %v1306
      %v1339 = vrsqrt.pop %v1307
      %v1340 = vrsqrt.pop %v1308
      %v1341 = vrsqrt.pop %v1309
      %v1342 = vrsqrt.pop %v1310
      %v1343 = vrsqrt.pop %v1311
      %v1344 = vrsqrt.pop %v1312
      %v1345 = vsub.f32 %v575, %v1153
      %v1346 = vsub.f32 %v576, %v1154
      %v1347 = vsub.f32 %v577, %v1155
      %v1348 = vsub.f32 %v578, %v1156
      %v1349 = vsub.f32 %v579, %v1157
      %v1350 = vsub.f32 %v580, %v1158
      %v1351 = vsub.f32 %v581, %v1159
      %v1352 = vsub.f32 %v582, %v1160
      %v1353 = vsub.f32 %v583, %v1161
      %v1354 = vsub.f32 %v584, %v1162
      %v1355 = vsub.f32 %v585, %v1163
      %v1356 = vsub.f32 %v586, %v1164
      %v1357 = vsub.f32 %v587, %v1165
      %v1358 = vsub.f32 %v588, %v1166
      %v1359 = vsub.f32 %v589, %v1167
      %v1360 = vsub.f32 %v590, %v1168
      %v1361 = vsub.f32 %v591, %v1169
      %v1362 = vsub.f32 %v592, %v1170
      %v1363 = vsub.f32 %v593, %v1171
      %v1364 = vsub.f32 %v594, %v1172
      %v1365 = vsub.f32 %v595, %v1173
      %v1366 = vsub.f32 %v596, %v1174
      %v1367 = vsub.f32 %v597, %v1175
      %v1368 = vsub.f32 %v598, %v1176
      %v1369 = vsub.f32 %v599, %v1177
      %v1370 = vsub.f32 %v600, %v1178
      %v1371 = vsub.f32 %v601, %v1179
      %v1372 = vsub.f32 %v602, %v1180
      %v1373 = vsub.f32 %v603, %v1181
      %v1374 = vsub.f32 %v604, %v1182
      %v1375 = vsub.f32 %v605, %v1183
      %v1376 = vsub.f32 %v606, %v1184
      %v1377 = vld [vmem:[%s2] sm:$0x1]
      %v1379 = vlaneseq
      %v1380 = vshrl.u32 %v1379, 7
      %v1381 = vsub.s32 0, %v1380
      %v1382 = vrot.slane %v1377, %v1381
      %v1384 = vmul.f32 %v1313, %v1382
      %v1385 = vmul.f32 %v1314, %v1382
      %v1386 = vmul.f32 %v1315, %v1382
      %v1387 = vmul.f32 %v1316, %v1382
      %v1388 = vmul.f32 %v1317, %v1382
      %v1389 = vmul.f32 %v1318, %v1382
      %v1390 = vmul.f32 %v1319, %v1382
      %v1391 = vmul.f32 %v1320, %v1382
      %v1392 = vmul.f32 %v1321, %v1382
      %v1393 = vmul.f32 %v1322, %v1382
      %v1394 = vmul.f32 %v1323, %v1382
      %v1395 = vmul.f32 %v1324, %v1382
      %v1396 = vmul.f32 %v1325, %v1382
      %v1397 = vmul.f32 %v1326, %v1382
      %v1398 = vmul.f32 %v1327, %v1382
      %v1399 = vmul.f32 %v1328, %v1382
      %v1400 = vmul.f32 %v1329, %v1382
      %v1401 = vmul.f32 %v1330, %v1382
      %v1402 = vmul.f32 %v1331, %v1382
      %v1403 = vmul.f32 %v1332, %v1382
      %v1404 = vmul.f32 %v1333, %v1382
      %v1405 = vmul.f32 %v1334, %v1382
      %v1406 = vmul.f32 %v1335, %v1382
      %v1407 = vmul.f32 %v1336, %v1382
      %v1408 = vmul.f32 %v1337, %v1382
      %v1409 = vmul.f32 %v1338, %v1382
      %v1410 = vmul.f32 %v1339, %v1382
      %v1411 = vmul.f32 %v1340, %v1382
      %v1412 = vmul.f32 %v1341, %v1382
      %v1413 = vmul.f32 %v1342, %v1382
      %v1414 = vmul.f32 %v1343, %v1382
      %v1415 = vmul.f32 %v1344, %v1382
      %v1416 = vmul.f32 %v1345, %v1384
      %v1417 = vmul.f32 %v1346, %v1385
      %v1418 = vmul.f32 %v1347, %v1386
      %v1419 = vmul.f32 %v1348, %v1387
      %v1420 = vmul.f32 %v1349, %v1388
      %v1421 = vmul.f32 %v1350, %v1389
      %v1422 = vmul.f32 %v1351, %v1390
      %v1423 = vmul.f32 %v1352, %v1391
      %v1424 = vmul.f32 %v1353, %v1392
      %v1425 = vmul.f32 %v1354, %v1393
      %v1426 = vmul.f32 %v1355, %v1394
      %v1427 = vmul.f32 %v1356, %v1395
      %v1428 = vmul.f32 %v1357, %v1396
      %v1429 = vmul.f32 %v1358, %v1397
      %v1430 = vmul.f32 %v1359, %v1398
      %v1431 = vmul.f32 %v1360, %v1399
      %v1432 = vmul.f32 %v1361, %v1400
      %v1433 = vmul.f32 %v1362, %v1401
      %v1434 = vmul.f32 %v1363, %v1402
      %v1435 = vmul.f32 %v1364, %v1403
      %v1436 = vmul.f32 %v1365, %v1404
      %v1437 = vmul.f32 %v1366, %v1405
      %v1438 = vmul.f32 %v1367, %v1406
      %v1439 = vmul.f32 %v1368, %v1407
      %v1440 = vmul.f32 %v1369, %v1408
      %v1441 = vmul.f32 %v1370, %v1409
      %v1442 = vmul.f32 %v1371, %v1410
      %v1443 = vmul.f32 %v1372, %v1411
      %v1444 = vmul.f32 %v1373, %v1412
      %v1445 = vmul.f32 %v1374, %v1413
      %v1446 = vmul.f32 %v1375, %v1414
      %v1447 = vmul.f32 %v1376, %v1415
      %v1448 = vld [vmem:[%s4] sm:$0x1]
      %v1450 = vlaneseq
      %v1451 = vshrl.u32 %v1450, 7
      %v1452 = vsub.s32 0, %v1451
      %v1453 = vrot.slane %v1448, %v1452
      %v1455 = vadd.f32 %v1416, %v1453
      %v1456 = vadd.f32 %v1417, %v1453
      %v1457 = vadd.f32 %v1418, %v1453
      %v1458 = vadd.f32 %v1419, %v1453
      %v1459 = vadd.f32 %v1420, %v1453
      %v1460 = vadd.f32 %v1421, %v1453
      %v1461 = vadd.f32 %v1422, %v1453
      %v1462 = vadd.f32 %v1423, %v1453
      %v1463 = vadd.f32 %v1424, %v1453
      %v1464 = vadd.f32 %v1425, %v1453
      %v1465 = vadd.f32 %v1426, %v1453
      %v1466 = vadd.f32 %v1427, %v1453
      %v1467 = vadd.f32 %v1428, %v1453
      %v1468 = vadd.f32 %v1429, %v1453
      %v1469 = vadd.f32 %v1430, %v1453
      %v1470 = vadd.f32 %v1431, %v1453
      %v1471 = vadd.f32 %v1432, %v1453
      %v1472 = vadd.f32 %v1433, %v1453
      %v1473 = vadd.f32 %v1434, %v1453
      %v1474 = vadd.f32 %v1435, %v1453
      %v1475 = vadd.f32 %v1436, %v1453
      %v1476 = vadd.f32 %v1437, %v1453
      %v1477 = vadd.f32 %v1438, %v1453
      %v1478 = vadd.f32 %v1439, %v1453
      %v1479 = vadd.f32 %v1440, %v1453
      %v1480 = vadd.f32 %v1441, %v1453
      %v1481 = vadd.f32 %v1442, %v1453
      %v1482 = vadd.f32 %v1443, %v1453
      %v1483 = vadd.f32 %v1444, %v1453
      %v1484 = vadd.f32 %v1445, %v1453
      %v1485 = vadd.f32 %v1446, %v1453
      %v1486 = vadd.f32 %v1447, %v1453
      %v1487 = vsub.f32 %v607, %v1153
      %v1488 = vsub.f32 %v608, %v1154
      %v1489 = vsub.f32 %v609, %v1155
      %v1490 = vsub.f32 %v610, %v1156
      %v1491 = vsub.f32 %v611, %v1157
      %v1492 = vsub.f32 %v612, %v1158
      %v1493 = vsub.f32 %v613, %v1159
      %v1494 = vsub.f32 %v614, %v1160
      %v1495 = vsub.f32 %v615, %v1161
      %v1496 = vsub.f32 %v616, %v1162
      %v1497 = vsub.f32 %v617, %v1163
      %v1498 = vsub.f32 %v618, %v1164
      %v1499 = vsub.f32 %v619, %v1165
      %v1500 = vsub.f32 %v620, %v1166
      %v1501 = vsub.f32 %v621, %v1167
      %v1502 = vsub.f32 %v622, %v1168
      %v1503 = vsub.f32 %v623, %v1169
      %v1504 = vsub.f32 %v624, %v1170
      %v1505 = vsub.f32 %v625, %v1171
      %v1506 = vsub.f32 %v626, %v1172
      %v1507 = vsub.f32 %v627, %v1173
      %v1508 = vsub.f32 %v628, %v1174
      %v1509 = vsub.f32 %v629, %v1175
      %v1510 = vsub.f32 %v630, %v1176
      %v1511 = vsub.f32 %v631, %v1177
      %v1512 = vsub.f32 %v632, %v1178
      %v1513 = vsub.f32 %v633, %v1179
      %v1514 = vsub.f32 %v634, %v1180
      %v1515 = vsub.f32 %v635, %v1181
      %v1516 = vsub.f32 %v636, %v1182
      %v1517 = vsub.f32 %v637, %v1183
      %v1518 = vsub.f32 %v638, %v1184
      %v1519 = vld [vmem:[%s3] sm:$0x1]
      %v1521 = vlaneseq
      %v1522 = vshrl.u32 %v1521, 7
      %v1523 = vsub.s32 0, %v1522
      %v1524 = vrot.slane %v1519, %v1523
      %v1526 = vmul.f32 %v1313, %v1524
      %v1527 = vmul.f32 %v1314, %v1524
      %v1528 = vmul.f32 %v1315, %v1524
      %v1529 = vmul.f32 %v1316, %v1524
      %v1530 = vmul.f32 %v1317, %v1524
      %v1531 = vmul.f32 %v1318, %v1524
      %v1532 = vmul.f32 %v1319, %v1524
      %v1533 = vmul.f32 %v1320, %v1524
      %v1534 = vmul.f32 %v1321, %v1524
      %v1535 = vmul.f32 %v1322, %v1524
      %v1536 = vmul.f32 %v1323, %v1524
      %v1537 = vmul.f32 %v1324, %v1524
      %v1538 = vmul.f32 %v1325, %v1524
      %v1539 = vmul.f32 %v1326, %v1524
      %v1540 = vmul.f32 %v1327, %v1524
      %v1541 = vmul.f32 %v1328, %v1524
      %v1542 = vmul.f32 %v1329, %v1524
      %v1543 = vmul.f32 %v1330, %v1524
      %v1544 = vmul.f32 %v1331, %v1524
      %v1545 = vmul.f32 %v1332, %v1524
      %v1546 = vmul.f32 %v1333, %v1524
      %v1547 = vmul.f32 %v1334, %v1524
      %v1548 = vmul.f32 %v1335, %v1524
      %v1549 = vmul.f32 %v1336, %v1524
      %v1550 = vmul.f32 %v1337, %v1524
      %v1551 = vmul.f32 %v1338, %v1524
      %v1552 = vmul.f32 %v1339, %v1524
      %v1553 = vmul.f32 %v1340, %v1524
      %v1554 = vmul.f32 %v1341, %v1524
      %v1555 = vmul.f32 %v1342, %v1524
      %v1556 = vmul.f32 %v1343, %v1524
      %v1557 = vmul.f32 %v1344, %v1524
      %v1558 = vmul.f32 %v1487, %v1526
      %v1559 = vmul.f32 %v1488, %v1527
      %v1560 = vmul.f32 %v1489, %v1528
      %v1561 = vmul.f32 %v1490, %v1529
      %v1562 = vmul.f32 %v1491, %v1530
      %v1563 = vmul.f32 %v1492, %v1531
      %v1564 = vmul.f32 %v1493, %v1532
      %v1565 = vmul.f32 %v1494, %v1533
      %v1566 = vmul.f32 %v1495, %v1534
      %v1567 = vmul.f32 %v1496, %v1535
      %v1568 = vmul.f32 %v1497, %v1536
      %v1569 = vmul.f32 %v1498, %v1537
      %v1570 = vmul.f32 %v1499, %v1538
      %v1571 = vmul.f32 %v1500, %v1539
      %v1572 = vmul.f32 %v1501, %v1540
      %v1573 = vmul.f32 %v1502, %v1541
      %v1574 = vmul.f32 %v1503, %v1542
      %v1575 = vmul.f32 %v1504, %v1543
      %v1576 = vmul.f32 %v1505, %v1544
      %v1577 = vmul.f32 %v1506, %v1545
      %v1578 = vmul.f32 %v1507, %v1546
      %v1579 = vmul.f32 %v1508, %v1547
      %v1580 = vmul.f32 %v1509, %v1548
      %v1581 = vmul.f32 %v1510, %v1549
      %v1582 = vmul.f32 %v1511, %v1550
      %v1583 = vmul.f32 %v1512, %v1551
      %v1584 = vmul.f32 %v1513, %v1552
      %v1585 = vmul.f32 %v1514, %v1553
      %v1586 = vmul.f32 %v1515, %v1554
      %v1587 = vmul.f32 %v1516, %v1555
      %v1588 = vmul.f32 %v1517, %v1556
      %v1589 = vmul.f32 %v1518, %v1557
      %v1590 = vld [vmem:[%s5] sm:$0x1]
      %v1592 = vlaneseq
      %v1593 = vshrl.u32 %v1592, 7
      %v1594 = vsub.s32 0, %v1593
      %v1595 = vrot.slane %v1590, %v1594
      %v1597 = vadd.f32 %v1558, %v1595
      %v1598 = vadd.f32 %v1559, %v1595
      %v1599 = vadd.f32 %v1560, %v1595
      %v1600 = vadd.f32 %v1561, %v1595
      %v1601 = vadd.f32 %v1562, %v1595
      %v1602 = vadd.f32 %v1563, %v1595
      %v1603 = vadd.f32 %v1564, %v1595
      %v1604 = vadd.f32 %v1565, %v1595
      %v1605 = vadd.f32 %v1566, %v1595
      %v1606 = vadd.f32 %v1567, %v1595
      %v1607 = vadd.f32 %v1568, %v1595
      %v1608 = vadd.f32 %v1569, %v1595
      %v1609 = vadd.f32 %v1570, %v1595
      %v1610 = vadd.f32 %v1571, %v1595
      %v1611 = vadd.f32 %v1572, %v1595
      %v1612 = vadd.f32 %v1573, %v1595
      %v1613 = vadd.f32 %v1574, %v1595
      %v1614 = vadd.f32 %v1575, %v1595
      %v1615 = vadd.f32 %v1576, %v1595
      %v1616 = vadd.f32 %v1577, %v1595
      %v1617 = vadd.f32 %v1578, %v1595
      %v1618 = vadd.f32 %v1579, %v1595
      %v1619 = vadd.f32 %v1580, %v1595
      %v1620 = vadd.f32 %v1581, %v1595
      %v1621 = vadd.f32 %v1582, %v1595
      %v1622 = vadd.f32 %v1583, %v1595
      %v1623 = vadd.f32 %v1584, %v1595
      %v1624 = vadd.f32 %v1585, %v1595
      %v1625 = vadd.f32 %v1586, %v1595
      %v1626 = vadd.f32 %v1587, %v1595
      %v1627 = vadd.f32 %v1588, %v1595
      %v1628 = vadd.f32 %v1589, %v1595
      %v1629 = vpack.c.bf16 %v1456, %v1455
      %v1630 = vpack.c.bf16 %v1458, %v1457
      %v1631 = vpack.c.bf16 %v1460, %v1459
      %v1632 = vpack.c.bf16 %v1462, %v1461
      %v1633 = vpack.c.bf16 %v1464, %v1463
      %v1634 = vpack.c.bf16 %v1466, %v1465
      %v1635 = vpack.c.bf16 %v1468, %v1467
      %v1636 = vpack.c.bf16 %v1470, %v1469
      %v1637 = vpack.c.bf16 %v1472, %v1471
      %v1638 = vpack.c.bf16 %v1474, %v1473
      %v1639 = vpack.c.bf16 %v1476, %v1475
      %v1640 = vpack.c.bf16 %v1478, %v1477
      %v1641 = vpack.c.bf16 %v1480, %v1479
      %v1642 = vpack.c.bf16 %v1482, %v1481
      %v1643 = vpack.c.bf16 %v1484, %v1483
      %v1644 = vpack.c.bf16 %v1486, %v1485
      %v1645 = vld [vmem:[%s6] sm:$0xff]
      %v1646 = vld [vmem:[%s6 + $0x8] sm:$0xff]
      %v1647 = vpack.c.bf16 %v1598, %v1597
      %v1648 = vpack.c.bf16 %v1600, %v1599
      %v1649 = vpack.c.bf16 %v1602, %v1601
      %v1650 = vpack.c.bf16 %v1604, %v1603
      %v1651 = vpack.c.bf16 %v1606, %v1605
      %v1652 = vpack.c.bf16 %v1608, %v1607
      %v1653 = vpack.c.bf16 %v1610, %v1609
      %v1654 = vpack.c.bf16 %v1612, %v1611
      %v1655 = vpack.c.bf16 %v1614, %v1613
      %v1656 = vpack.c.bf16 %v1616, %v1615
      %v1657 = vpack.c.bf16 %v1618, %v1617
      %v1658 = vpack.c.bf16 %v1620, %v1619
      %v1659 = vpack.c.bf16 %v1622, %v1621
      %v1660 = vpack.c.bf16 %v1624, %v1623
      %v1661 = vpack.c.bf16 %v1626, %v1625
      %v1662 = vpack.c.bf16 %v1628, %v1627
      %v1663 = vld [vmem:[%s7] sm:$0xff]
      %v1665 = vunpack.c.l.b16 %v1663
      %v1666 = vunpack.c.h.b16 %v1663
      %v1667 = vpack.c.b16 %v1665, %v1665
      %v1668 = vpack.c.b16 %v1666, %v1666
      %v1670 = vsel %vm736, %v1647, 0
      %v1673 = vsel %vm736, %v1648, 0
      %v1676 = vsel %vm736, %v1649, 0
      %v1679 = vsel %vm736, %v1650, 0
      %v1682 = vsel %vm736, %v1651, 0
      %v1685 = vsel %vm736, %v1652, 0
      %v1688 = vsel %vm736, %v1653, 0
      %v1691 = vsel %vm736, %v1654, 0
      %v1694 = vsel %vm736, %v1655, 0
      %v1697 = vsel %vm736, %v1656, 0
      %v1700 = vsel %vm736, %v1657, 0
      %v1703 = vsel %vm736, %v1658, 0
      %v1706 = vsel %vm736, %v1659, 0
      %v1709 = vsel %vm736, %v1660, 0
      %v1712 = vsel %vm736, %v1661, 0
      %v1715 = vsel %vm736, %v1662, 0
      %vm1717 = vcmask 1043456
      %v1719 = vsel %vm1717, %v1667, 0
      %v1722 = vsel %vm1717, %v1668, 0
      %1724 = vmatprep.subr.bf16.mxu0 0
      %1725 = vmatpush1.bf16.msra.mxu0 0
      %1726 = vmatprep.subr.bf16.mxu0 0
      %1727 = vmatpush1.bf16.msra.mxu0 0
      %1728 = vmatprep.subr.bf16.mxu0 0
      %1729 = vmatpush1.bf16.msra.mxu0 0
      %1730 = vmatprep.subr.bf16.mxu0 0
      %1731 = vmatpush1.bf16.msra.mxu0 0
      %1732 = vmatprep.subr.bf16.mxu0 0
      %1733 = vmatpush1.bf16.msra.mxu0 0
      %1734 = vmatprep.subr.bf16.mxu0 0
      %1735 = vmatpush1.bf16.msra.mxu0 0
      %1736 = vmatprep.subr.bf16.mxu0 0
      %1737 = vmatpush1.bf16.msra.mxu0 0
      %1738 = vmatprep.subr.bf16.mxu0 %v1722
      %1739 = vmatpush1.bf16.msra.mxu0 %v1719
      %1740 = vmatprep.subr.bf16.mxu0 0
      %1741 = vmatpush2.bf16.msra.mxu0 0
      %1742 = vmatprep.subr.bf16.mxu0 0
      %1743 = vmatpush2.bf16.msra.mxu0 0
      %1744 = vmatprep.subr.bf16.mxu0 0
      %1745 = vmatpush2.bf16.msra.mxu0 0
      %1746 = vmatprep.subr.bf16.mxu0 0
      %1747 = vmatpush2.bf16.msra.mxu0 0
      %1748 = vmatprep.subr.bf16.mxu0 0
      %1749 = vmatpush2.bf16.msra.mxu0 0
      %1750 = vmatprep.subr.bf16.mxu0 0
      %1751 = vmatpush2.bf16.msra.mxu0 0
      %1752 = vmatprep.subr.bf16.mxu0 0
      %1753 = vmatpush2.bf16.msra.mxu0 0
      %1754 = vmatprep.subr.bf16.mxu0 0
      %1755 = vmatpush2.bf16.msra.mxu0 0
      %1756 = vmatprep.mubr.bf16.mxu0 0
      %1757 = vmatmul.mubr.bf16.gmra.mxu0 %v1670
      %v1758 = vpop.f32.mrf.mxu0
      %v1759 = vadd.f32 0.0, %v1758
      %v1760 = vpop.f32.mrf.mxu0
      %v1761 = vadd.f32 0.0, %v1760
      %v1762 = vpop.f32.mrf.mxu0
      %v1763 = vadd.f32 0.0, %v1762
      %v1764 = vpop.f32.mrf.mxu0
      %v1765 = vadd.f32 0.0, %v1764
      %1766 = vmatprep.mubr.bf16.mxu0 0
      %1767 = vmatmul.mubr.bf16.gmra.mxu0 %v1673
      %v1768 = vpop.f32.mrf.mxu0
      %v1769 = vadd.f32 0.0, %v1768
      %v1770 = vpop.f32.mrf.mxu0
      %v1771 = vadd.f32 0.0, %v1770
      %v1772 = vpop.f32.mrf.mxu0
      %v1773 = vadd.f32 0.0, %v1772
      %v1774 = vpop.f32.mrf.mxu0
      %v1775 = vadd.f32 0.0, %v1774
      %1776 = vmatprep.mubr.bf16.mxu0 0
      %1777 = vmatmul.mubr.bf16.gmra.mxu0 %v1676
      %v1778 = vpop.f32.mrf.mxu0
      %v1779 = vadd.f32 0.0, %v1778
      %v1780 = vpop.f32.mrf.mxu0
      %v1781 = vadd.f32 0.0, %v1780
      %v1782 = vpop.f32.mrf.mxu0
      %v1783 = vadd.f32 0.0, %v1782
      %v1784 = vpop.f32.mrf.mxu0
      %v1785 = vadd.f32 0.0, %v1784
      %1786 = vmatprep.mubr.bf16.mxu0 0
      %1787 = vmatmul.mubr.bf16.gmra.mxu0 %v1679
      %v1788 = vpop.f32.mrf.mxu0
      %v1789 = vadd.f32 0.0, %v1788
      %v1790 = vpop.f32.mrf.mxu0
      %v1791 = vadd.f32 0.0, %v1790
      %v1792 = vpop.f32.mrf.mxu0
      %v1793 = vadd.f32 0.0, %v1792
      %v1794 = vpop.f32.mrf.mxu0
      %v1795 = vadd.f32 0.0, %v1794
      %1796 = vmatprep.mubr.bf16.mxu0 0
      %1797 = vmatmul.mubr.bf16.gmra.mxu0 %v1682
      %v1798 = vpop.f32.mrf.mxu0
      %v1799 = vadd.f32 0.0, %v1798
      %v1800 = vpop.f32.mrf.mxu0
      %v1801 = vadd.f32 0.0, %v1800
      %v1802 = vpop.f32.mrf.mxu0
      %v1803 = vadd.f32 0.0, %v1802
      %v1804 = vpop.f32.mrf.mxu0
      %v1805 = vadd.f32 0.0, %v1804
      %1806 = vmatprep.mubr.bf16.mxu0 0
      %1807 = vmatmul.mubr.bf16.gmra.mxu0 %v1685
      %v1808 = vpop.f32.mrf.mxu0
      %v1809 = vadd.f32 0.0, %v1808
      %v1810 = vpop.f32.mrf.mxu0
      %v1811 = vadd.f32 0.0, %v1810
      %v1812 = vpop.f32.mrf.mxu0
      %v1813 = vadd.f32 0.0, %v1812
      %v1814 = vpop.f32.mrf.mxu0
      %v1815 = vadd.f32 0.0, %v1814
      %1816 = vmatprep.mubr.bf16.mxu0 0
      %1817 = vmatmul.mubr.bf16.gmra.mxu0 %v1688
      %v1818 = vpop.f32.mrf.mxu0
      %v1819 = vadd.f32 0.0, %v1818
      %v1820 = vpop.f32.mrf.mxu0
      %v1821 = vadd.f32 0.0, %v1820
      %v1822 = vpop.f32.mrf.mxu0
      %v1823 = vadd.f32 0.0, %v1822
      %v1824 = vpop.f32.mrf.mxu0
      %v1825 = vadd.f32 0.0, %v1824
      %1826 = vmatprep.mubr.bf16.mxu0 0
      %1827 = vmatmul.mubr.bf16.gmra.mxu0 %v1691
      %v1828 = vpop.f32.mrf.mxu0
      %v1829 = vadd.f32 0.0, %v1828
      %v1830 = vpop.f32.mrf.mxu0
      %v1831 = vadd.f32 0.0, %v1830
      %v1832 = vpop.f32.mrf.mxu0
      %v1833 = vadd.f32 0.0, %v1832
      %v1834 = vpop.f32.mrf.mxu0
      %v1835 = vadd.f32 0.0, %v1834
      %1836 = vmatprep.mubr.bf16.mxu0 0
      %1837 = vmatmul.mubr.bf16.gmra.mxu0 %v1694
      %v1838 = vpop.f32.mrf.mxu0
      %v1839 = vadd.f32 0.0, %v1838
      %v1840 = vpop.f32.mrf.mxu0
      %v1841 = vadd.f32 0.0, %v1840
      %v1842 = vpop.f32.mrf.mxu0
      %v1843 = vadd.f32 0.0, %v1842
      %v1844 = vpop.f32.mrf.mxu0
      %v1845 = vadd.f32 0.0, %v1844
      %1846 = vmatprep.mubr.bf16.mxu0 0
      %1847 = vmatmul.mubr.bf16.gmra.mxu0 %v1697
      %v1848 = vpop.f32.mrf.mxu0
      %v1849 = vadd.f32 0.0, %v1848
      %v1850 = vpop.f32.mrf.mxu0
      %v1851 = vadd.f32 0.0, %v1850
      %v1852 = vpop.f32.mrf.mxu0
      %v1853 = vadd.f32 0.0, %v1852
      %v1854 = vpop.f32.mrf.mxu0
      %v1855 = vadd.f32 0.0, %v1854
      %1856 = vmatprep.mubr.bf16.mxu0 0
      %1857 = vmatmul.mubr.bf16.gmra.mxu0 %v1700
      %v1858 = vpop.f32.mrf.mxu0
      %v1859 = vadd.f32 0.0, %v1858
      %v1860 = vpop.f32.mrf.mxu0
      %v1861 = vadd.f32 0.0, %v1860
      %v1862 = vpop.f32.mrf.mxu0
      %v1863 = vadd.f32 0.0, %v1862
      %v1864 = vpop.f32.mrf.mxu0
      %v1865 = vadd.f32 0.0, %v1864
      %1866 = vmatprep.mubr.bf16.mxu0 0
      %1867 = vmatmul.mubr.bf16.gmra.mxu0 %v1703
      %v1868 = vpop.f32.mrf.mxu0
      %v1869 = vadd.f32 0.0, %v1868
      %v1870 = vpop.f32.mrf.mxu0
      %v1871 = vadd.f32 0.0, %v1870
      %v1872 = vpop.f32.mrf.mxu0
      %v1873 = vadd.f32 0.0, %v1872
      %v1874 = vpop.f32.mrf.mxu0
      %v1875 = vadd.f32 0.0, %v1874
      %1876 = vmatprep.mubr.bf16.mxu0 0
      %1877 = vmatmul.mubr.bf16.gmra.mxu0 %v1706
      %v1878 = vpop.f32.mrf.mxu0
      %v1879 = vadd.f32 0.0, %v1878
      %v1880 = vpop.f32.mrf.mxu0
      %v1881 = vadd.f32 0.0, %v1880
      %v1882 = vpop.f32.mrf.mxu0
      %v1883 = vadd.f32 0.0, %v1882
      %v1884 = vpop.f32.mrf.mxu0
      %v1885 = vadd.f32 0.0, %v1884
      %1886 = vmatprep.mubr.bf16.mxu0 0
      %1887 = vmatmul.mubr.bf16.gmra.mxu0 %v1709
      %v1888 = vpop.f32.mrf.mxu0
      %v1889 = vadd.f32 0.0, %v1888
      %v1890 = vpop.f32.mrf.mxu0
      %v1891 = vadd.f32 0.0, %v1890
      %v1892 = vpop.f32.mrf.mxu0
      %v1893 = vadd.f32 0.0, %v1892
      %v1894 = vpop.f32.mrf.mxu0
      %v1895 = vadd.f32 0.0, %v1894
      %1896 = vmatprep.mubr.bf16.mxu0 0
      %1897 = vmatmul.mubr.bf16.gmra.mxu0 %v1712
      %v1898 = vpop.f32.mrf.mxu0
      %v1899 = vadd.f32 0.0, %v1898
      %v1900 = vpop.f32.mrf.mxu0
      %v1901 = vadd.f32 0.0, %v1900
      %v1902 = vpop.f32.mrf.mxu0
      %v1903 = vadd.f32 0.0, %v1902
      %v1904 = vpop.f32.mrf.mxu0
      %v1905 = vadd.f32 0.0, %v1904
      %1906 = vmatprep.mubr.bf16.mxu0 0
      %1907 = vmatmul.mubr.bf16.gmra.mxu0 %v1715
      %v1908 = vpop.f32.mrf.mxu0
      %v1909 = vadd.f32 0.0, %v1908
      %v1910 = vpop.f32.mrf.mxu0
      %v1911 = vadd.f32 0.0, %v1910
      %v1912 = vpop.f32.mrf.mxu0
      %v1913 = vadd.f32 0.0, %v1912
      %v1914 = vpop.f32.mrf.mxu0
      %v1915 = vadd.f32 0.0, %v1914
      %1916 = vdwg.mxu0
      %v1919 = vunpack.c.l.b16 %v1645
      %v1920 = vunpack.c.h.b16 %v1645
      %v1921 = vunpack.c.l.b16 %v1646
      %v1922 = vunpack.c.h.b16 %v1646
      %v1923 = vpack.c.b16 %v1921, %v1919
      %v1924 = vpack.c.b16 %v1922, %v1920
      %v1928 = vsel %vm639, %v1629, 0
      %v1931 = vsel %vm639, %v1630, 0
      %v1934 = vsel %vm639, %v1631, 0
      %v1937 = vsel %vm639, %v1632, 0
      %v1940 = vsel %vm639, %v1633, 0
      %v1943 = vsel %vm639, %v1634, 0
      %v1946 = vsel %vm639, %v1635, 0
      %v1949 = vsel %vm639, %v1636, 0
      %v1952 = vsel %vm639, %v1637, 0
      %v1955 = vsel %vm639, %v1638, 0
      %v1958 = vsel %vm639, %v1639, 0
      %v1961 = vsel %vm639, %v1640, 0
      %v1964 = vsel %vm639, %v1641, 0
      %v1967 = vsel %vm639, %v1642, 0
      %v1970 = vsel %vm639, %v1643, 0
      %v1973 = vsel %vm639, %v1644, 0
      %1975 = vmatprep.subr.bf16.mxu0 0
      %1976 = vmatpush1.bf16.msra.mxu0 0
      %1977 = vmatprep.subr.bf16.mxu0 0
      %1978 = vmatpush1.bf16.msra.mxu0 0
      %1979 = vmatprep.subr.bf16.mxu0 0
      %1980 = vmatpush1.bf16.msra.mxu0 0
      %1981 = vmatprep.subr.bf16.mxu0 0
      %1982 = vmatpush1.bf16.msra.mxu0 0
      %1983 = vmatprep.subr.bf16.mxu0 0
      %1984 = vmatpush1.bf16.msra.mxu0 0
      %1985 = vmatprep.subr.bf16.mxu0 0
      %1986 = vmatpush1.bf16.msra.mxu0 0
      %1987 = vmatprep.subr.bf16.mxu0 0
      %1988 = vmatpush1.bf16.msra.mxu0 0
      %1989 = vmatprep.subr.bf16.mxu0 %v1924
      %1990 = vmatpush1.bf16.msra.mxu0 %v1923
      %1991 = vmatprep.subr.bf16.mxu0 0
      %1992 = vmatpush2.bf16.msra.mxu0 0
      %1993 = vmatprep.subr.bf16.mxu0 0
      %1994 = vmatpush2.bf16.msra.mxu0 0
      %1995 = vmatprep.subr.bf16.mxu0 0
      %1996 = vmatpush2.bf16.msra.mxu0 0
      %1997 = vmatprep.subr.bf16.mxu0 0
      %1998 = vmatpush2.bf16.msra.mxu0 0
      %1999 = vmatprep.subr.bf16.mxu0 0
      %2000 = vmatpush2.bf16.msra.mxu0 0
      %2001 = vmatprep.subr.bf16.mxu0 0
      %2002 = vmatpush2.bf16.msra.mxu0 0
      %2003 = vmatprep.subr.bf16.mxu0 0
      %2004 = vmatpush2.bf16.msra.mxu0 0
      %2005 = vmatprep.subr.bf16.mxu0 0
      %2006 = vmatpush2.bf16.msra.mxu0 0
      %2007 = vmatprep.mubr.bf16.mxu0 0
      %2008 = vmatmul.mubr.bf16.gmra.mxu0 %v1928
      %v2009 = vpop.f32.mrf.mxu0
      %v2010 = vadd.f32 %v1759, %v2009
      %v2011 = vpop.f32.mrf.mxu0
      %v2012 = vadd.f32 %v1761, %v2011
      %v2013 = vpop.f32.mrf.mxu0
      %v2014 = vadd.f32 %v1763, %v2013
      %v2015 = vpop.f32.mrf.mxu0
      %v2016 = vadd.f32 %v1765, %v2015
      %2017 = vmatprep.mubr.bf16.mxu0 0
      %2018 = vmatmul.mubr.bf16.gmra.mxu0 %v1931
      %v2019 = vpop.f32.mrf.mxu0
      %v2020 = vadd.f32 %v1769, %v2019
      %v2021 = vpop.f32.mrf.mxu0
      %v2022 = vadd.f32 %v1771, %v2021
      %v2023 = vpop.f32.mrf.mxu0
      %v2024 = vadd.f32 %v1773, %v2023
      %v2025 = vpop.f32.mrf.mxu0
      %v2026 = vadd.f32 %v1775, %v2025
      %2027 = vmatprep.mubr.bf16.mxu0 0
      %2028 = vmatmul.mubr.bf16.gmra.mxu0 %v1934
      %v2029 = vpop.f32.mrf.mxu0
      %v2030 = vadd.f32 %v1779, %v2029
      %v2031 = vpop.f32.mrf.mxu0
      %v2032 = vadd.f32 %v1781, %v2031
      %v2033 = vpop.f32.mrf.mxu0
      %v2034 = vadd.f32 %v1783, %v2033
      %v2035 = vpop.f32.mrf.mxu0
      %v2036 = vadd.f32 %v1785, %v2035
      %2037 = vmatprep.mubr.bf16.mxu0 0
      %2038 = vmatmul.mubr.bf16.gmra.mxu0 %v1937
      %v2039 = vpop.f32.mrf.mxu0
      %v2040 = vadd.f32 %v1789, %v2039
      %v2041 = vpop.f32.mrf.mxu0
      %v2042 = vadd.f32 %v1791, %v2041
      %v2043 = vpop.f32.mrf.mxu0
      %v2044 = vadd.f32 %v1793, %v2043
      %v2045 = vpop.f32.mrf.mxu0
      %v2046 = vadd.f32 %v1795, %v2045
      %2047 = vmatprep.mubr.bf16.mxu0 0
      %2048 = vmatmul.mubr.bf16.gmra.mxu0 %v1940
      %v2049 = vpop.f32.mrf.mxu0
      %v2050 = vadd.f32 %v1799, %v2049
      %v2051 = vpop.f32.mrf.mxu0
      %v2052 = vadd.f32 %v1801, %v2051
      %v2053 = vpop.f32.mrf.mxu0
      %v2054 = vadd.f32 %v1803, %v2053
      %v2055 = vpop.f32.mrf.mxu0
      %v2056 = vadd.f32 %v1805, %v2055
      %2057 = vmatprep.mubr.bf16.mxu0 0
      %2058 = vmatmul.mubr.bf16.gmra.mxu0 %v1943
      %v2059 = vpop.f32.mrf.mxu0
      %v2060 = vadd.f32 %v1809, %v2059
      %v2061 = vpop.f32.mrf.mxu0
      %v2062 = vadd.f32 %v1811, %v2061
      %v2063 = vpop.f32.mrf.mxu0
      %v2064 = vadd.f32 %v1813, %v2063
      %v2065 = vpop.f32.mrf.mxu0
      %v2066 = vadd.f32 %v1815, %v2065
      %2067 = vmatprep.mubr.bf16.mxu0 0
      %2068 = vmatmul.mubr.bf16.gmra.mxu0 %v1946
      %v2069 = vpop.f32.mrf.mxu0
      %v2070 = vadd.f32 %v1819, %v2069
      %v2071 = vpop.f32.mrf.mxu0
      %v2072 = vadd.f32 %v1821, %v2071
      %v2073 = vpop.f32.mrf.mxu0
      %v2074 = vadd.f32 %v1823, %v2073
      %v2075 = vpop.f32.mrf.mxu0
      %v2076 = vadd.f32 %v1825, %v2075
      %2077 = vmatprep.mubr.bf16.mxu0 0
      %2078 = vmatmul.mubr.bf16.gmra.mxu0 %v1949
      %v2079 = vpop.f32.mrf.mxu0
      %v2080 = vadd.f32 %v1829, %v2079
      %v2081 = vpop.f32.mrf.mxu0
      %v2082 = vadd.f32 %v1831, %v2081
      %v2083 = vpop.f32.mrf.mxu0
      %v2084 = vadd.f32 %v1833, %v2083
      %v2085 = vpop.f32.mrf.mxu0
      %v2086 = vadd.f32 %v1835, %v2085
      %2087 = vmatprep.mubr.bf16.mxu0 0
      %2088 = vmatmul.mubr.bf16.gmra.mxu0 %v1952
      %v2089 = vpop.f32.mrf.mxu0
      %v2090 = vadd.f32 %v1839, %v2089
      %v2091 = vpop.f32.mrf.mxu0
      %v2092 = vadd.f32 %v1841, %v2091
      %v2093 = vpop.f32.mrf.mxu0
      %v2094 = vadd.f32 %v1843, %v2093
      %v2095 = vpop.f32.mrf.mxu0
      %v2096 = vadd.f32 %v1845, %v2095
      %2097 = vmatprep.mubr.bf16.mxu0 0
      %2098 = vmatmul.mubr.bf16.gmra.mxu0 %v1955
      %v2099 = vpop.f32.mrf.mxu0
      %v2100 = vadd.f32 %v1849, %v2099
      %v2101 = vpop.f32.mrf.mxu0
      %v2102 = vadd.f32 %v1851, %v2101
      %v2103 = vpop.f32.mrf.mxu0
      %v2104 = vadd.f32 %v1853, %v2103
      %v2105 = vpop.f32.mrf.mxu0
      %v2106 = vadd.f32 %v1855, %v2105
      %2107 = vmatprep.mubr.bf16.mxu0 0
      %2108 = vmatmul.mubr.bf16.gmra.mxu0 %v1958
      %v2109 = vpop.f32.mrf.mxu0
      %v2110 = vadd.f32 %v1859, %v2109
      %v2111 = vpop.f32.mrf.mxu0
      %v2112 = vadd.f32 %v1861, %v2111
      %v2113 = vpop.f32.mrf.mxu0
      %v2114 = vadd.f32 %v1863, %v2113
      %v2115 = vpop.f32.mrf.mxu0
      %v2116 = vadd.f32 %v1865, %v2115
      %2117 = vmatprep.mubr.bf16.mxu0 0
      %2118 = vmatmul.mubr.bf16.gmra.mxu0 %v1961
      %v2119 = vpop.f32.mrf.mxu0
      %v2120 = vadd.f32 %v1869, %v2119
      %v2121 = vpop.f32.mrf.mxu0
      %v2122 = vadd.f32 %v1871, %v2121
      %v2123 = vpop.f32.mrf.mxu0
      %v2124 = vadd.f32 %v1873, %v2123
      %v2125 = vpop.f32.mrf.mxu0
      %v2126 = vadd.f32 %v1875, %v2125
      %2127 = vmatprep.mubr.bf16.mxu0 0
      %2128 = vmatmul.mubr.bf16.gmra.mxu0 %v1964
      %v2129 = vpop.f32.mrf.mxu0
      %v2130 = vadd.f32 %v1879, %v2129
      %v2131 = vpop.f32.mrf.mxu0
      %v2132 = vadd.f32 %v1881, %v2131
      %v2133 = vpop.f32.mrf.mxu0
      %v2134 = vadd.f32 %v1883, %v2133
      %v2135 = vpop.f32.mrf.mxu0
      %v2136 = vadd.f32 %v1885, %v2135
      %2137 = vmatprep.mubr.bf16.mxu0 0
      %2138 = vmatmul.mubr.bf16.gmra.mxu0 %v1967
      %v2139 = vpop.f32.mrf.mxu0
      %v2140 = vadd.f32 %v1889, %v2139
      %v2141 = vpop.f32.mrf.mxu0
      %v2142 = vadd.f32 %v1891, %v2141
      %v2143 = vpop.f32.mrf.mxu0
      %v2144 = vadd.f32 %v1893, %v2143
      %v2145 = vpop.f32.mrf.mxu0
      %v2146 = vadd.f32 %v1895, %v2145
      %2147 = vmatprep.mubr.bf16.mxu0 0
      %2148 = vmatmul.mubr.bf16.gmra.mxu0 %v1970
      %v2149 = vpop.f32.mrf.mxu0
      %v2150 = vadd.f32 %v1899, %v2149
      %v2151 = vpop.f32.mrf.mxu0
      %v2152 = vadd.f32 %v1901, %v2151
      %v2153 = vpop.f32.mrf.mxu0
      %v2154 = vadd.f32 %v1903, %v2153
      %v2155 = vpop.f32.mrf.mxu0
      %v2156 = vadd.f32 %v1905, %v2155
      %2157 = vmatprep.mubr.bf16.mxu0 0
      %2158 = vmatmul.mubr.bf16.gmra.mxu0 %v1973
      %v2159 = vpop.f32.mrf.mxu0
      %v2160 = vadd.f32 %v1909, %v2159
      %v2161 = vpop.f32.mrf.mxu0
      %v2162 = vadd.f32 %v1911, %v2161
      %v2163 = vpop.f32.mrf.mxu0
      %v2164 = vadd.f32 %v1913, %v2163
      %v2165 = vpop.f32.mrf.mxu0
      %v2166 = vadd.f32 %v1915, %v2165
      %2167 = vdwg.mxu0
      %v2168 = vld [vmem:[%s8] sm:$0x3]
      %v2170 = vlaneseq
      %v2171 = vshrl.u32 %v2170, 7
      %v2172 = vsub.s32 0, %v2171
      %v2173 = vrot.slane %v2168, %v2172
      %v2174 = vlaneseq
      %v2175 = vshrl.u32 %v2174, 7
      %v2176 = vsub.s32 1, %v2175
      %v2177 = vrot.slane %v2168, %v2176
      %v2180 = vadd.f32 %v2010, %v2173
      %v2181 = vadd.f32 %v2012, %v2177
      %v2182 = vadd.f32 %v2014, %v2173
      %v2183 = vadd.f32 %v2016, %v2177
      %v2184 = vadd.f32 %v2020, %v2173
      %v2185 = vadd.f32 %v2022, %v2177
      %v2186 = vadd.f32 %v2024, %v2173
      %v2187 = vadd.f32 %v2026, %v2177
      %v2188 = vadd.f32 %v2030, %v2173
      %v2189 = vadd.f32 %v2032, %v2177
      %v2190 = vadd.f32 %v2034, %v2173
      %v2191 = vadd.f32 %v2036, %v2177
      %v2192 = vadd.f32 %v2040, %v2173
      %v2193 = vadd.f32 %v2042, %v2177
      %v2194 = vadd.f32 %v2044, %v2173
      %v2195 = vadd.f32 %v2046, %v2177
      %v2196 = vadd.f32 %v2050, %v2173
      %v2197 = vadd.f32 %v2052, %v2177
      %v2198 = vadd.f32 %v2054, %v2173
      %v2199 = vadd.f32 %v2056, %v2177
      %v2200 = vadd.f32 %v2060, %v2173
      %v2201 = vadd.f32 %v2062, %v2177
      %v2202 = vadd.f32 %v2064, %v2173
      %v2203 = vadd.f32 %v2066, %v2177
      %v2204 = vadd.f32 %v2070, %v2173
      %v2205 = vadd.f32 %v2072, %v2177
      %v2206 = vadd.f32 %v2074, %v2173
      %v2207 = vadd.f32 %v2076, %v2177
      %v2208 = vadd.f32 %v2080, %v2173
      %v2209 = vadd.f32 %v2082, %v2177
      %v2210 = vadd.f32 %v2084, %v2173
      %v2211 = vadd.f32 %v2086, %v2177
      %v2212 = vadd.f32 %v2090, %v2173
      %v2213 = vadd.f32 %v2092, %v2177
      %v2214 = vadd.f32 %v2094, %v2173
      %v2215 = vadd.f32 %v2096, %v2177
      %v2216 = vadd.f32 %v2100, %v2173
      %v2217 = vadd.f32 %v2102, %v2177
      %v2218 = vadd.f32 %v2104, %v2173
      %v2219 = vadd.f32 %v2106, %v2177
      %v2220 = vadd.f32 %v2110, %v2173
      %v2221 = vadd.f32 %v2112, %v2177
      %v2222 = vadd.f32 %v2114, %v2173
      %v2223 = vadd.f32 %v2116, %v2177
      %v2224 = vadd.f32 %v2120, %v2173
      %v2225 = vadd.f32 %v2122, %v2177
      %v2226 = vadd.f32 %v2124, %v2173
      %v2227 = vadd.f32 %v2126, %v2177
      %v2228 = vadd.f32 %v2130, %v2173
      %v2229 = vadd.f32 %v2132, %v2177
      %v2230 = vadd.f32 %v2134, %v2173
      %v2231 = vadd.f32 %v2136, %v2177
      %v2232 = vadd.f32 %v2140, %v2173
      %v2233 = vadd.f32 %v2142, %v2177
      %v2234 = vadd.f32 %v2144, %v2173
      %v2235 = vadd.f32 %v2146, %v2177
      %v2236 = vadd.f32 %v2150, %v2173
      %v2237 = vadd.f32 %v2152, %v2177
      %v2238 = vadd.f32 %v2154, %v2173
      %v2239 = vadd.f32 %v2156, %v2177
      %v2240 = vadd.f32 %v2160, %v2173
      %v2241 = vadd.f32 %v2162, %v2177
      %v2242 = vadd.f32 %v2164, %v2173
      %v2243 = vadd.f32 %v2166, %v2177
      %v2244 = vmax.f32 %v2180, 0.0
      %v2245 = vmax.f32 %v2181, 0.0
      %v2246 = vmax.f32 %v2182, 0.0
      %v2247 = vmax.f32 %v2183, 0.0
      %v2248 = vmax.f32 %v2184, 0.0
      %v2249 = vmax.f32 %v2185, 0.0
      %v2250 = vmax.f32 %v2186, 0.0
      %v2251 = vmax.f32 %v2187, 0.0
      %v2252 = vmax.f32 %v2188, 0.0
      %v2253 = vmax.f32 %v2189, 0.0
      %v2254 = vmax.f32 %v2190, 0.0
      %v2255 = vmax.f32 %v2191, 0.0
      %v2256 = vmax.f32 %v2192, 0.0
      %v2257 = vmax.f32 %v2193, 0.0
      %v2258 = vmax.f32 %v2194, 0.0
      %v2259 = vmax.f32 %v2195, 0.0
      %v2260 = vmax.f32 %v2196, 0.0
      %v2261 = vmax.f32 %v2197, 0.0
      %v2262 = vmax.f32 %v2198, 0.0
      %v2263 = vmax.f32 %v2199, 0.0
      %v2264 = vmax.f32 %v2200, 0.0
      %v2265 = vmax.f32 %v2201, 0.0
      %v2266 = vmax.f32 %v2202, 0.0
      %v2267 = vmax.f32 %v2203, 0.0
      %v2268 = vmax.f32 %v2204, 0.0
      %v2269 = vmax.f32 %v2205, 0.0
      %v2270 = vmax.f32 %v2206, 0.0
      %v2271 = vmax.f32 %v2207, 0.0
      %v2272 = vmax.f32 %v2208, 0.0
      %v2273 = vmax.f32 %v2209, 0.0
      %v2274 = vmax.f32 %v2210, 0.0
      %v2275 = vmax.f32 %v2211, 0.0
      %v2276 = vmax.f32 %v2212, 0.0
      %v2277 = vmax.f32 %v2213, 0.0
      %v2278 = vmax.f32 %v2214, 0.0
      %v2279 = vmax.f32 %v2215, 0.0
      %v2280 = vmax.f32 %v2216, 0.0
      %v2281 = vmax.f32 %v2217, 0.0
      %v2282 = vmax.f32 %v2218, 0.0
      %v2283 = vmax.f32 %v2219, 0.0
      %v2284 = vmax.f32 %v2220, 0.0
      %v2285 = vmax.f32 %v2221, 0.0
      %v2286 = vmax.f32 %v2222, 0.0
      %v2287 = vmax.f32 %v2223, 0.0
      %v2288 = vmax.f32 %v2224, 0.0
      %v2289 = vmax.f32 %v2225, 0.0
      %v2290 = vmax.f32 %v2226, 0.0
      %v2291 = vmax.f32 %v2227, 0.0
      %v2292 = vmax.f32 %v2228, 0.0
      %v2293 = vmax.f32 %v2229, 0.0
      %v2294 = vmax.f32 %v2230, 0.0
      %v2295 = vmax.f32 %v2231, 0.0
      %v2296 = vmax.f32 %v2232, 0.0
      %v2297 = vmax.f32 %v2233, 0.0
      %v2298 = vmax.f32 %v2234, 0.0
      %v2299 = vmax.f32 %v2235, 0.0
      %v2300 = vmax.f32 %v2236, 0.0
      %v2301 = vmax.f32 %v2237, 0.0
      %v2302 = vmax.f32 %v2238, 0.0
      %v2303 = vmax.f32 %v2239, 0.0
      %v2304 = vmax.f32 %v2240, 0.0
      %v2305 = vmax.f32 %v2241, 0.0
      %v2306 = vmax.f32 %v2242, 0.0
      %v2307 = vmax.f32 %v2243, 0.0
      %v2308 = vld [vmem:[%s9] sm:$0x3]
      %v2309 = vld [vmem:[%s10] sm:$0x3]
      %v2310 = vadd.f32 %v2244, %v2245
      %2311 = vadd.xlane.f32.xlu0 %v2310
      %v2312 = vpop.xlane.xlu0 %2311
      %v2313 = vadd.f32 %v2246, %v2247
      %2314 = vadd.xlane.f32.xlu0 %v2313
      %v2315 = vpop.xlane.xlu0 %2314
      %v2316 = vadd.f32 %v2248, %v2249
      %2317 = vadd.xlane.f32.xlu0 %v2316
      %v2318 = vpop.xlane.xlu0 %2317
      %v2319 = vadd.f32 %v2250, %v2251
      %2320 = vadd.xlane.f32.xlu0 %v2319
      %v2321 = vpop.xlane.xlu0 %2320
      %v2322 = vadd.f32 %v2252, %v2253
      %2323 = vadd.xlane.f32.xlu0 %v2322
      %v2324 = vpop.xlane.xlu0 %2323
      %v2325 = vadd.f32 %v2254, %v2255
      %2326 = vadd.xlane.f32.xlu0 %v2325
      %v2327 = vpop.xlane.xlu0 %2326
      %v2328 = vadd.f32 %v2256, %v2257
      %2329 = vadd.xlane.f32.xlu0 %v2328
      %v2330 = vpop.xlane.xlu0 %2329
      %v2331 = vadd.f32 %v2258, %v2259
      %2332 = vadd.xlane.f32.xlu0 %v2331
      %v2333 = vpop.xlane.xlu0 %2332
      %v2334 = vadd.f32 %v2260, %v2261
      %2335 = vadd.xlane.f32.xlu0 %v2334
      %v2336 = vpop.xlane.xlu0 %2335
      %v2337 = vadd.f32 %v2262, %v2263
      %2338 = vadd.xlane.f32.xlu0 %v2337
      %v2339 = vpop.xlane.xlu0 %2338
      %v2340 = vadd.f32 %v2264, %v2265
      %2341 = vadd.xlane.f32.xlu0 %v2340
      %v2342 = vpop.xlane.xlu0 %2341
      %v2343 = vadd.f32 %v2266, %v2267
      %2344 = vadd.xlane.f32.xlu0 %v2343
      %v2345 = vpop.xlane.xlu0 %2344
      %v2346 = vadd.f32 %v2268, %v2269
      %2347 = vadd.xlane.f32.xlu0 %v2346
      %v2348 = vpop.xlane.xlu0 %2347
      %v2349 = vadd.f32 %v2270, %v2271
      %2350 = vadd.xlane.f32.xlu0 %v2349
      %v2351 = vpop.xlane.xlu0 %2350
      %v2352 = vadd.f32 %v2272, %v2273
      %2353 = vadd.xlane.f32.xlu0 %v2352
      %v2354 = vpop.xlane.xlu0 %2353
      %v2355 = vadd.f32 %v2274, %v2275
      %2356 = vadd.xlane.f32.xlu0 %v2355
      %v2357 = vpop.xlane.xlu0 %2356
      %v2358 = vadd.f32 %v2276, %v2277
      %2359 = vadd.xlane.f32.xlu0 %v2358
      %v2360 = vpop.xlane.xlu0 %2359
      %v2361 = vadd.f32 %v2278, %v2279
      %2362 = vadd.xlane.f32.xlu0 %v2361
      %v2363 = vpop.xlane.xlu0 %2362
      %v2364 = vadd.f32 %v2280, %v2281
      %2365 = vadd.xlane.f32.xlu0 %v2364
      %v2366 = vpop.xlane.xlu0 %2365
      %v2367 = vadd.f32 %v2282, %v2283
      %2368 = vadd.xlane.f32.xlu0 %v2367
      %v2369 = vpop.xlane.xlu0 %2368
      %v2370 = vadd.f32 %v2284, %v2285
      %2371 = vadd.xlane.f32.xlu0 %v2370
      %v2372 = vpop.xlane.xlu0 %2371
      %v2373 = vadd.f32 %v2286, %v2287
      %2374 = vadd.xlane.f32.xlu0 %v2373
      %v2375 = vpop.xlane.xlu0 %2374
      %v2376 = vadd.f32 %v2288, %v2289
      %2377 = vadd.xlane.f32.xlu0 %v2376
      %v2378 = vpop.xlane.xlu0 %2377
      %v2379 = vadd.f32 %v2290, %v2291
      %2380 = vadd.xlane.f32.xlu0 %v2379
      %v2381 = vpop.xlane.xlu0 %2380
      %v2382 = vadd.f32 %v2292, %v2293
      %2383 = vadd.xlane.f32.xlu0 %v2382
      %v2384 = vpop.xlane.xlu0 %2383
      %v2385 = vadd.f32 %v2294, %v2295
      %2386 = vadd.xlane.f32.xlu0 %v2385
      %v2387 = vpop.xlane.xlu0 %2386
      %v2388 = vadd.f32 %v2296, %v2297
      %2389 = vadd.xlane.f32.xlu0 %v2388
      %v2390 = vpop.xlane.xlu0 %2389
      %v2391 = vadd.f32 %v2298, %v2299
      %2392 = vadd.xlane.f32.xlu0 %v2391
      %v2393 = vpop.xlane.xlu0 %2392
      %v2394 = vadd.f32 %v2300, %v2301
      %2395 = vadd.xlane.f32.xlu0 %v2394
      %v2396 = vpop.xlane.xlu0 %2395
      %v2397 = vadd.f32 %v2302, %v2303
      %2398 = vadd.xlane.f32.xlu0 %v2397
      %v2399 = vpop.xlane.xlu0 %2398
      %v2400 = vadd.f32 %v2304, %v2305
      %2401 = vadd.xlane.f32.xlu0 %v2400
      %v2402 = vpop.xlane.xlu0 %2401
      %v2403 = vadd.f32 %v2306, %v2307
      %2404 = vadd.xlane.f32.xlu0 %v2403
      %v2405 = vpop.xlane.xlu0 %2404
      %v2406 = vmul.f32 %v2244, %v2244
      %v2407 = vmul.f32 %v2245, %v2245
      %v2408 = vmul.f32 %v2246, %v2246
      %v2409 = vmul.f32 %v2247, %v2247
      %v2410 = vmul.f32 %v2248, %v2248
      %v2411 = vmul.f32 %v2249, %v2249
      %v2412 = vmul.f32 %v2250, %v2250
      %v2413 = vmul.f32 %v2251, %v2251
      %v2414 = vmul.f32 %v2252, %v2252
      %v2415 = vmul.f32 %v2253, %v2253
      %v2416 = vmul.f32 %v2254, %v2254
      %v2417 = vmul.f32 %v2255, %v2255
      %v2418 = vmul.f32 %v2256, %v2256
      %v2419 = vmul.f32 %v2257, %v2257
      %v2420 = vmul.f32 %v2258, %v2258
      %v2421 = vmul.f32 %v2259, %v2259
      %v2422 = vmul.f32 %v2260, %v2260
      %v2423 = vmul.f32 %v2261, %v2261
      %v2424 = vmul.f32 %v2262, %v2262
      %v2425 = vmul.f32 %v2263, %v2263
      %v2426 = vmul.f32 %v2264, %v2264
      %v2427 = vmul.f32 %v2265, %v2265
      %v2428 = vmul.f32 %v2266, %v2266
      %v2429 = vmul.f32 %v2267, %v2267
      %v2430 = vmul.f32 %v2268, %v2268
      %v2431 = vmul.f32 %v2269, %v2269
      %v2432 = vmul.f32 %v2270, %v2270
      %v2433 = vmul.f32 %v2271, %v2271
      %v2434 = vmul.f32 %v2272, %v2272
      %v2435 = vmul.f32 %v2273, %v2273
      %v2436 = vmul.f32 %v2274, %v2274
      %v2437 = vmul.f32 %v2275, %v2275
      %v2438 = vmul.f32 %v2276, %v2276
      %v2439 = vmul.f32 %v2277, %v2277
      %v2440 = vmul.f32 %v2278, %v2278
      %v2441 = vmul.f32 %v2279, %v2279
      %v2442 = vmul.f32 %v2280, %v2280
      %v2443 = vmul.f32 %v2281, %v2281
      %v2444 = vmul.f32 %v2282, %v2282
      %v2445 = vmul.f32 %v2283, %v2283
      %v2446 = vmul.f32 %v2284, %v2284
      %v2447 = vmul.f32 %v2285, %v2285
      %v2448 = vmul.f32 %v2286, %v2286
      %v2449 = vmul.f32 %v2287, %v2287
      %v2450 = vmul.f32 %v2288, %v2288
      %v2451 = vmul.f32 %v2289, %v2289
      %v2452 = vmul.f32 %v2290, %v2290
      %v2453 = vmul.f32 %v2291, %v2291
      %v2454 = vmul.f32 %v2292, %v2292
      %v2455 = vmul.f32 %v2293, %v2293
      %v2456 = vmul.f32 %v2294, %v2294
      %v2457 = vmul.f32 %v2295, %v2295
      %v2458 = vmul.f32 %v2296, %v2296
      %v2459 = vmul.f32 %v2297, %v2297
      %v2460 = vmul.f32 %v2298, %v2298
      %v2461 = vmul.f32 %v2299, %v2299
      %v2462 = vmul.f32 %v2300, %v2300
      %v2463 = vmul.f32 %v2301, %v2301
      %v2464 = vmul.f32 %v2302, %v2302
      %v2465 = vmul.f32 %v2303, %v2303
      %v2466 = vmul.f32 %v2304, %v2304
      %v2467 = vmul.f32 %v2305, %v2305
      %v2468 = vmul.f32 %v2306, %v2306
      %v2469 = vmul.f32 %v2307, %v2307
      %v2470 = vadd.f32 %v2406, %v2407
      %2471 = vadd.xlane.f32.xlu0 %v2470
      %v2472 = vpop.xlane.xlu0 %2471
      %v2473 = vadd.f32 %v2408, %v2409
      %2474 = vadd.xlane.f32.xlu0 %v2473
      %v2475 = vpop.xlane.xlu0 %2474
      %v2476 = vadd.f32 %v2410, %v2411
      %2477 = vadd.xlane.f32.xlu0 %v2476
      %v2478 = vpop.xlane.xlu0 %2477
      %v2479 = vadd.f32 %v2412, %v2413
      %2480 = vadd.xlane.f32.xlu0 %v2479
      %v2481 = vpop.xlane.xlu0 %2480
      %v2482 = vadd.f32 %v2414, %v2415
      %2483 = vadd.xlane.f32.xlu0 %v2482
      %v2484 = vpop.xlane.xlu0 %2483
      %v2485 = vadd.f32 %v2416, %v2417
      %2486 = vadd.xlane.f32.xlu0 %v2485
      %v2487 = vpop.xlane.xlu0 %2486
      %v2488 = vadd.f32 %v2418, %v2419
      %2489 = vadd.xlane.f32.xlu0 %v2488
      %v2490 = vpop.xlane.xlu0 %2489
      %v2491 = vadd.f32 %v2420, %v2421
      %2492 = vadd.xlane.f32.xlu0 %v2491
      %v2493 = vpop.xlane.xlu0 %2492
      %v2494 = vadd.f32 %v2422, %v2423
      %2495 = vadd.xlane.f32.xlu0 %v2494
      %v2496 = vpop.xlane.xlu0 %2495
      %v2497 = vadd.f32 %v2424, %v2425
      %2498 = vadd.xlane.f32.xlu0 %v2497
      %v2499 = vpop.xlane.xlu0 %2498
      %v2500 = vadd.f32 %v2426, %v2427
      %2501 = vadd.xlane.f32.xlu0 %v2500
      %v2502 = vpop.xlane.xlu0 %2501
      %v2503 = vadd.f32 %v2428, %v2429
      %2504 = vadd.xlane.f32.xlu0 %v2503
      %v2505 = vpop.xlane.xlu0 %2504
      %v2506 = vadd.f32 %v2430, %v2431
      %2507 = vadd.xlane.f32.xlu0 %v2506
      %v2508 = vpop.xlane.xlu0 %2507
      %v2509 = vadd.f32 %v2432, %v2433
      %2510 = vadd.xlane.f32.xlu0 %v2509
      %v2511 = vpop.xlane.xlu0 %2510
      %v2512 = vadd.f32 %v2434, %v2435
      %2513 = vadd.xlane.f32.xlu0 %v2512
      %v2514 = vpop.xlane.xlu0 %2513
      %v2515 = vadd.f32 %v2436, %v2437
      %2516 = vadd.xlane.f32.xlu0 %v2515
      %v2517 = vpop.xlane.xlu0 %2516
      %v2518 = vadd.f32 %v2438, %v2439
      %2519 = vadd.xlane.f32.xlu0 %v2518
      %v2520 = vpop.xlane.xlu0 %2519
      %v2521 = vadd.f32 %v2440, %v2441
      %2522 = vadd.xlane.f32.xlu0 %v2521
      %v2523 = vpop.xlane.xlu0 %2522
      %v2524 = vadd.f32 %v2442, %v2443
      %2525 = vadd.xlane.f32.xlu0 %v2524
      %v2526 = vpop.xlane.xlu0 %2525
      %v2527 = vadd.f32 %v2444, %v2445
      %2528 = vadd.xlane.f32.xlu0 %v2527
      %v2529 = vpop.xlane.xlu0 %2528
      %v2530 = vadd.f32 %v2446, %v2447
      %2531 = vadd.xlane.f32.xlu0 %v2530
      %v2532 = vpop.xlane.xlu0 %2531
      %v2533 = vadd.f32 %v2448, %v2449
      %2534 = vadd.xlane.f32.xlu0 %v2533
      %v2535 = vpop.xlane.xlu0 %2534
      %v2536 = vadd.f32 %v2450, %v2451
      %2537 = vadd.xlane.f32.xlu0 %v2536
      %v2538 = vpop.xlane.xlu0 %2537
      %v2539 = vadd.f32 %v2452, %v2453
      %2540 = vadd.xlane.f32.xlu0 %v2539
      %v2541 = vpop.xlane.xlu0 %2540
      %v2542 = vadd.f32 %v2454, %v2455
      %2543 = vadd.xlane.f32.xlu0 %v2542
      %v2544 = vpop.xlane.xlu0 %2543
      %v2545 = vadd.f32 %v2456, %v2457
      %2546 = vadd.xlane.f32.xlu0 %v2545
      %v2547 = vpop.xlane.xlu0 %2546
      %v2548 = vadd.f32 %v2458, %v2459
      %2549 = vadd.xlane.f32.xlu0 %v2548
      %v2550 = vpop.xlane.xlu0 %2549
      %v2551 = vadd.f32 %v2460, %v2461
      %2552 = vadd.xlane.f32.xlu0 %v2551
      %v2553 = vpop.xlane.xlu0 %2552
      %v2554 = vadd.f32 %v2462, %v2463
      %2555 = vadd.xlane.f32.xlu0 %v2554
      %v2556 = vpop.xlane.xlu0 %2555
      %v2557 = vadd.f32 %v2464, %v2465
      %2558 = vadd.xlane.f32.xlu0 %v2557
      %v2559 = vpop.xlane.xlu0 %2558
      %v2560 = vadd.f32 %v2466, %v2467
      %2561 = vadd.xlane.f32.xlu0 %v2560
      %v2562 = vpop.xlane.xlu0 %2561
      %v2563 = vadd.f32 %v2468, %v2469
      %2564 = vadd.xlane.f32.xlu0 %v2563
      %v2565 = vpop.xlane.xlu0 %2564
      %v2566 = vmul.f32 %v2312, 0.00390625
      %v2567 = vmul.f32 %v2315, 0.00390625
      %v2568 = vmul.f32 %v2318, 0.00390625
      %v2569 = vmul.f32 %v2321, 0.00390625
      %v2570 = vmul.f32 %v2324, 0.00390625
      %v2571 = vmul.f32 %v2327, 0.00390625
      %v2572 = vmul.f32 %v2330, 0.00390625
      %v2573 = vmul.f32 %v2333, 0.00390625
      %v2574 = vmul.f32 %v2336, 0.00390625
      %v2575 = vmul.f32 %v2339, 0.00390625
      %v2576 = vmul.f32 %v2342, 0.00390625
      %v2577 = vmul.f32 %v2345, 0.00390625
      %v2578 = vmul.f32 %v2348, 0.00390625
      %v2579 = vmul.f32 %v2351, 0.00390625
      %v2580 = vmul.f32 %v2354, 0.00390625
      %v2581 = vmul.f32 %v2357, 0.00390625
      %v2582 = vmul.f32 %v2360, 0.00390625
      %v2583 = vmul.f32 %v2363, 0.00390625
      %v2584 = vmul.f32 %v2366, 0.00390625
      %v2585 = vmul.f32 %v2369, 0.00390625
      %v2586 = vmul.f32 %v2372, 0.00390625
      %v2587 = vmul.f32 %v2375, 0.00390625
      %v2588 = vmul.f32 %v2378, 0.00390625
      %v2589 = vmul.f32 %v2381, 0.00390625
      %v2590 = vmul.f32 %v2384, 0.00390625
      %v2591 = vmul.f32 %v2387, 0.00390625
      %v2592 = vmul.f32 %v2390, 0.00390625
      %v2593 = vmul.f32 %v2393, 0.00390625
      %v2594 = vmul.f32 %v2396, 0.00390625
      %v2595 = vmul.f32 %v2399, 0.00390625
      %v2596 = vmul.f32 %v2402, 0.00390625
      %v2597 = vmul.f32 %v2405, 0.00390625
      %v2598 = vmul.f32 %v2472, 0.00390625
      %v2599 = vmul.f32 %v2475, 0.00390625
      %v2600 = vmul.f32 %v2478, 0.00390625
      %v2601 = vmul.f32 %v2481, 0.00390625
      %v2602 = vmul.f32 %v2484, 0.00390625
      %v2603 = vmul.f32 %v2487, 0.00390625
      %v2604 = vmul.f32 %v2490, 0.00390625
      %v2605 = vmul.f32 %v2493, 0.00390625
      %v2606 = vmul.f32 %v2496, 0.00390625
      %v2607 = vmul.f32 %v2499, 0.00390625
      %v2608 = vmul.f32 %v2502, 0.00390625
      %v2609 = vmul.f32 %v2505, 0.00390625
      %v2610 = vmul.f32 %v2508, 0.00390625
      %v2611 = vmul.f32 %v2511, 0.00390625
      %v2612 = vmul.f32 %v2514, 0.00390625
      %v2613 = vmul.f32 %v2517, 0.00390625
      %v2614 = vmul.f32 %v2520, 0.00390625
      %v2615 = vmul.f32 %v2523, 0.00390625
      %v2616 = vmul.f32 %v2526, 0.00390625
      %v2617 = vmul.f32 %v2529, 0.00390625
      %v2618 = vmul.f32 %v2532, 0.00390625
      %v2619 = vmul.f32 %v2535, 0.00390625
      %v2620 = vmul.f32 %v2538, 0.00390625
      %v2621 = vmul.f32 %v2541, 0.00390625
      %v2622 = vmul.f32 %v2544, 0.00390625
      %v2623 = vmul.f32 %v2547, 0.00390625
      %v2624 = vmul.f32 %v2550, 0.00390625
      %v2625 = vmul.f32 %v2553, 0.00390625
      %v2626 = vmul.f32 %v2556, 0.00390625
      %v2627 = vmul.f32 %v2559, 0.00390625
      %v2628 = vmul.f32 %v2562, 0.00390625
      %v2629 = vmul.f32 %v2565, 0.00390625
      %v2630 = vmul.f32 %v2566, %v2566
      %v2631 = vmul.f32 %v2567, %v2567
      %v2632 = vmul.f32 %v2568, %v2568
      %v2633 = vmul.f32 %v2569, %v2569
      %v2634 = vmul.f32 %v2570, %v2570
      %v2635 = vmul.f32 %v2571, %v2571
      %v2636 = vmul.f32 %v2572, %v2572
      %v2637 = vmul.f32 %v2573, %v2573
      %v2638 = vmul.f32 %v2574, %v2574
      %v2639 = vmul.f32 %v2575, %v2575
      %v2640 = vmul.f32 %v2576, %v2576
      %v2641 = vmul.f32 %v2577, %v2577
      %v2642 = vmul.f32 %v2578, %v2578
      %v2643 = vmul.f32 %v2579, %v2579
      %v2644 = vmul.f32 %v2580, %v2580
      %v2645 = vmul.f32 %v2581, %v2581
      %v2646 = vmul.f32 %v2582, %v2582
      %v2647 = vmul.f32 %v2583, %v2583
      %v2648 = vmul.f32 %v2584, %v2584
      %v2649 = vmul.f32 %v2585, %v2585
      %v2650 = vmul.f32 %v2586, %v2586
      %v2651 = vmul.f32 %v2587, %v2587
      %v2652 = vmul.f32 %v2588, %v2588
      %v2653 = vmul.f32 %v2589, %v2589
      %v2654 = vmul.f32 %v2590, %v2590
      %v2655 = vmul.f32 %v2591, %v2591
      %v2656 = vmul.f32 %v2592, %v2592
      %v2657 = vmul.f32 %v2593, %v2593
      %v2658 = vmul.f32 %v2594, %v2594
      %v2659 = vmul.f32 %v2595, %v2595
      %v2660 = vmul.f32 %v2596, %v2596
      %v2661 = vmul.f32 %v2597, %v2597
      %v2662 = vsub.f32 %v2598, %v2630
      %v2663 = vsub.f32 %v2599, %v2631
      %v2664 = vsub.f32 %v2600, %v2632
      %v2665 = vsub.f32 %v2601, %v2633
      %v2666 = vsub.f32 %v2602, %v2634
      %v2667 = vsub.f32 %v2603, %v2635
      %v2668 = vsub.f32 %v2604, %v2636
      %v2669 = vsub.f32 %v2605, %v2637
      %v2670 = vsub.f32 %v2606, %v2638
      %v2671 = vsub.f32 %v2607, %v2639
      %v2672 = vsub.f32 %v2608, %v2640
      %v2673 = vsub.f32 %v2609, %v2641
      %v2674 = vsub.f32 %v2610, %v2642
      %v2675 = vsub.f32 %v2611, %v2643
      %v2676 = vsub.f32 %v2612, %v2644
      %v2677 = vsub.f32 %v2613, %v2645
      %v2678 = vsub.f32 %v2614, %v2646
      %v2679 = vsub.f32 %v2615, %v2647
      %v2680 = vsub.f32 %v2616, %v2648
      %v2681 = vsub.f32 %v2617, %v2649
      %v2682 = vsub.f32 %v2618, %v2650
      %v2683 = vsub.f32 %v2619, %v2651
      %v2684 = vsub.f32 %v2620, %v2652
      %v2685 = vsub.f32 %v2621, %v2653
      %v2686 = vsub.f32 %v2622, %v2654
      %v2687 = vsub.f32 %v2623, %v2655
      %v2688 = vsub.f32 %v2624, %v2656
      %v2689 = vsub.f32 %v2625, %v2657
      %v2690 = vsub.f32 %v2626, %v2658
      %v2691 = vsub.f32 %v2627, %v2659
      %v2692 = vsub.f32 %v2628, %v2660
      %v2693 = vsub.f32 %v2629, %v2661
      %v2694 = vadd.f32 %v2662, 1e-05
      %v2695 = vadd.f32 %v2663, 1e-05
      %v2696 = vadd.f32 %v2664, 1e-05
      %v2697 = vadd.f32 %v2665, 1e-05
      %v2698 = vadd.f32 %v2666, 1e-05
      %v2699 = vadd.f32 %v2667, 1e-05
      %v2700 = vadd.f32 %v2668, 1e-05
      %v2701 = vadd.f32 %v2669, 1e-05
      %v2702 = vadd.f32 %v2670, 1e-05
      %v2703 = vadd.f32 %v2671, 1e-05
      %v2704 = vadd.f32 %v2672, 1e-05
      %v2705 = vadd.f32 %v2673, 1e-05
      %v2706 = vadd.f32 %v2674, 1e-05
      %v2707 = vadd.f32 %v2675, 1e-05
      %v2708 = vadd.f32 %v2676, 1e-05
      %v2709 = vadd.f32 %v2677, 1e-05
      %v2710 = vadd.f32 %v2678, 1e-05
      %v2711 = vadd.f32 %v2679, 1e-05
      %v2712 = vadd.f32 %v2680, 1e-05
      %v2713 = vadd.f32 %v2681, 1e-05
      %v2714 = vadd.f32 %v2682, 1e-05
      %v2715 = vadd.f32 %v2683, 1e-05
      %v2716 = vadd.f32 %v2684, 1e-05
      %v2717 = vadd.f32 %v2685, 1e-05
      %v2718 = vadd.f32 %v2686, 1e-05
      %v2719 = vadd.f32 %v2687, 1e-05
      %v2720 = vadd.f32 %v2688, 1e-05
      %v2721 = vadd.f32 %v2689, 1e-05
      %v2722 = vadd.f32 %v2690, 1e-05
      %v2723 = vadd.f32 %v2691, 1e-05
      %v2724 = vadd.f32 %v2692, 1e-05
      %v2725 = vadd.f32 %v2693, 1e-05
      %v2726 = vrsqrt.pop %v2694
      %v2727 = vrsqrt.pop %v2695
      %v2728 = vrsqrt.pop %v2696
      %v2729 = vrsqrt.pop %v2697
      %v2730 = vrsqrt.pop %v2698
      %v2731 = vrsqrt.pop %v2699
      %v2732 = vrsqrt.pop %v2700
      %v2733 = vrsqrt.pop %v2701
      %v2734 = vrsqrt.pop %v2702
      %v2735 = vrsqrt.pop %v2703
      %v2736 = vrsqrt.pop %v2704
      %v2737 = vrsqrt.pop %v2705
      %v2738 = vrsqrt.pop %v2706
      %v2739 = vrsqrt.pop %v2707
      %v2740 = vrsqrt.pop %v2708
      %v2741 = vrsqrt.pop %v2709
      %v2742 = vrsqrt.pop %v2710
      %v2743 = vrsqrt.pop %v2711
      %v2744 = vrsqrt.pop %v2712
      %v2745 = vrsqrt.pop %v2713
      %v2746 = vrsqrt.pop %v2714
      %v2747 = vrsqrt.pop %v2715
      %v2748 = vrsqrt.pop %v2716
      %v2749 = vrsqrt.pop %v2717
      %v2750 = vrsqrt.pop %v2718
      %v2751 = vrsqrt.pop %v2719
      %v2752 = vrsqrt.pop %v2720
      %v2753 = vrsqrt.pop %v2721
      %v2754 = vrsqrt.pop %v2722
      %v2755 = vrsqrt.pop %v2723
      %v2756 = vrsqrt.pop %v2724
      %v2757 = vrsqrt.pop %v2725
      %v2758 = vsub.f32 %v2244, %v2566
      %v2759 = vsub.f32 %v2245, %v2566
      %v2760 = vsub.f32 %v2246, %v2567
      %v2761 = vsub.f32 %v2247, %v2567
      %v2762 = vsub.f32 %v2248, %v2568
      %v2763 = vsub.f32 %v2249, %v2568
      %v2764 = vsub.f32 %v2250, %v2569
      %v2765 = vsub.f32 %v2251, %v2569
      %v2766 = vsub.f32 %v2252, %v2570
      %v2767 = vsub.f32 %v2253, %v2570
      %v2768 = vsub.f32 %v2254, %v2571
      %v2769 = vsub.f32 %v2255, %v2571
      %v2770 = vsub.f32 %v2256, %v2572
      %v2771 = vsub.f32 %v2257, %v2572
      %v2772 = vsub.f32 %v2258, %v2573
      %v2773 = vsub.f32 %v2259, %v2573
      %v2774 = vsub.f32 %v2260, %v2574
      %v2775 = vsub.f32 %v2261, %v2574
      %v2776 = vsub.f32 %v2262, %v2575
      %v2777 = vsub.f32 %v2263, %v2575
      %v2778 = vsub.f32 %v2264, %v2576
      %v2779 = vsub.f32 %v2265, %v2576
      %v2780 = vsub.f32 %v2266, %v2577
      %v2781 = vsub.f32 %v2267, %v2577
      %v2782 = vsub.f32 %v2268, %v2578
      %v2783 = vsub.f32 %v2269, %v2578
      %v2784 = vsub.f32 %v2270, %v2579
      %v2785 = vsub.f32 %v2271, %v2579
      %v2786 = vsub.f32 %v2272, %v2580
      %v2787 = vsub.f32 %v2273, %v2580
      %v2788 = vsub.f32 %v2274, %v2581
      %v2789 = vsub.f32 %v2275, %v2581
      %v2790 = vsub.f32 %v2276, %v2582
      %v2791 = vsub.f32 %v2277, %v2582
      %v2792 = vsub.f32 %v2278, %v2583
      %v2793 = vsub.f32 %v2279, %v2583
      %v2794 = vsub.f32 %v2280, %v2584
      %v2795 = vsub.f32 %v2281, %v2584
      %v2796 = vsub.f32 %v2282, %v2585
      %v2797 = vsub.f32 %v2283, %v2585
      %v2798 = vsub.f32 %v2284, %v2586
      %v2799 = vsub.f32 %v2285, %v2586
      %v2800 = vsub.f32 %v2286, %v2587
      %v2801 = vsub.f32 %v2287, %v2587
      %v2802 = vsub.f32 %v2288, %v2588
      %v2803 = vsub.f32 %v2289, %v2588
      %v2804 = vsub.f32 %v2290, %v2589
      %v2805 = vsub.f32 %v2291, %v2589
      %v2806 = vsub.f32 %v2292, %v2590
      %v2807 = vsub.f32 %v2293, %v2590
      %v2808 = vsub.f32 %v2294, %v2591
      %v2809 = vsub.f32 %v2295, %v2591
      %v2810 = vsub.f32 %v2296, %v2592
      %v2811 = vsub.f32 %v2297, %v2592
      %v2812 = vsub.f32 %v2298, %v2593
      %v2813 = vsub.f32 %v2299, %v2593
      %v2814 = vsub.f32 %v2300, %v2594
      %v2815 = vsub.f32 %v2301, %v2594
      %v2816 = vsub.f32 %v2302, %v2595
      %v2817 = vsub.f32 %v2303, %v2595
      %v2818 = vsub.f32 %v2304, %v2596
      %v2819 = vsub.f32 %v2305, %v2596
      %v2820 = vsub.f32 %v2306, %v2597
      %v2821 = vsub.f32 %v2307, %v2597
      %v2823 = vlaneseq
      %v2824 = vshrl.u32 %v2823, 7
      %v2825 = vsub.s32 0, %v2824
      %v2826 = vrot.slane %v2308, %v2825
      %v2827 = vlaneseq
      %v2828 = vshrl.u32 %v2827, 7
      %v2829 = vsub.s32 1, %v2828
      %v2830 = vrot.slane %v2308, %v2829
      %v2833 = vmul.f32 %v2726, %v2826
      %v2834 = vmul.f32 %v2726, %v2830
      %v2835 = vmul.f32 %v2727, %v2826
      %v2836 = vmul.f32 %v2727, %v2830
      %v2837 = vmul.f32 %v2728, %v2826
      %v2838 = vmul.f32 %v2728, %v2830
      %v2839 = vmul.f32 %v2729, %v2826
      %v2840 = vmul.f32 %v2729, %v2830
      %v2841 = vmul.f32 %v2730, %v2826
      %v2842 = vmul.f32 %v2730, %v2830
      %v2843 = vmul.f32 %v2731, %v2826
      %v2844 = vmul.f32 %v2731, %v2830
      %v2845 = vmul.f32 %v2732, %v2826
      %v2846 = vmul.f32 %v2732, %v2830
      %v2847 = vmul.f32 %v2733, %v2826
      %v2848 = vmul.f32 %v2733, %v2830
      %v2849 = vmul.f32 %v2734, %v2826
      %v2850 = vmul.f32 %v2734, %v2830
      %v2851 = vmul.f32 %v2735, %v2826
      %v2852 = vmul.f32 %v2735, %v2830
      %v2853 = vmul.f32 %v2736, %v2826
      %v2854 = vmul.f32 %v2736, %v2830
      %v2855 = vmul.f32 %v2737, %v2826
      %v2856 = vmul.f32 %v2737, %v2830
      %v2857 = vmul.f32 %v2738, %v2826
      %v2858 = vmul.f32 %v2738, %v2830
      %v2859 = vmul.f32 %v2739, %v2826
      %v2860 = vmul.f32 %v2739, %v2830
      %v2861 = vmul.f32 %v2740, %v2826
      %v2862 = vmul.f32 %v2740, %v2830
      %v2863 = vmul.f32 %v2741, %v2826
      %v2864 = vmul.f32 %v2741, %v2830
      %v2865 = vmul.f32 %v2742, %v2826
      %v2866 = vmul.f32 %v2742, %v2830
      %v2867 = vmul.f32 %v2743, %v2826
      %v2868 = vmul.f32 %v2743, %v2830
      %v2869 = vmul.f32 %v2744, %v2826
      %v2870 = vmul.f32 %v2744, %v2830
      %v2871 = vmul.f32 %v2745, %v2826
      %v2872 = vmul.f32 %v2745, %v2830
      %v2873 = vmul.f32 %v2746, %v2826
      %v2874 = vmul.f32 %v2746, %v2830
      %v2875 = vmul.f32 %v2747, %v2826
      %v2876 = vmul.f32 %v2747, %v2830
      %v2877 = vmul.f32 %v2748, %v2826
      %v2878 = vmul.f32 %v2748, %v2830
      %v2879 = vmul.f32 %v2749, %v2826
      %v2880 = vmul.f32 %v2749, %v2830
      %v2881 = vmul.f32 %v2750, %v2826
      %v2882 = vmul.f32 %v2750, %v2830
      %v2883 = vmul.f32 %v2751, %v2826
      %v2884 = vmul.f32 %v2751, %v2830
      %v2885 = vmul.f32 %v2752, %v2826
      %v2886 = vmul.f32 %v2752, %v2830
      %v2887 = vmul.f32 %v2753, %v2826
      %v2888 = vmul.f32 %v2753, %v2830
      %v2889 = vmul.f32 %v2754, %v2826
      %v2890 = vmul.f32 %v2754, %v2830
      %v2891 = vmul.f32 %v2755, %v2826
      %v2892 = vmul.f32 %v2755, %v2830
      %v2893 = vmul.f32 %v2756, %v2826
      %v2894 = vmul.f32 %v2756, %v2830
      %v2895 = vmul.f32 %v2757, %v2826
      %v2896 = vmul.f32 %v2757, %v2830
      %v2897 = vmul.f32 %v2758, %v2833
      %v2898 = vmul.f32 %v2759, %v2834
      %v2899 = vmul.f32 %v2760, %v2835
      %v2900 = vmul.f32 %v2761, %v2836
      %v2901 = vmul.f32 %v2762, %v2837
      %v2902 = vmul.f32 %v2763, %v2838
      %v2903 = vmul.f32 %v2764, %v2839
      %v2904 = vmul.f32 %v2765, %v2840
      %v2905 = vmul.f32 %v2766, %v2841
      %v2906 = vmul.f32 %v2767, %v2842
      %v2907 = vmul.f32 %v2768, %v2843
      %v2908 = vmul.f32 %v2769, %v2844
      %v2909 = vmul.f32 %v2770, %v2845
      %v2910 = vmul.f32 %v2771, %v2846
      %v2911 = vmul.f32 %v2772, %v2847
      %v2912 = vmul.f32 %v2773, %v2848
      %v2913 = vmul.f32 %v2774, %v2849
      %v2914 = vmul.f32 %v2775, %v2850
      %v2915 = vmul.f32 %v2776, %v2851
      %v2916 = vmul.f32 %v2777, %v2852
      %v2917 = vmul.f32 %v2778, %v2853
      %v2918 = vmul.f32 %v2779, %v2854
      %v2919 = vmul.f32 %v2780, %v2855
      %v2920 = vmul.f32 %v2781, %v2856
      %v2921 = vmul.f32 %v2782, %v2857
      %v2922 = vmul.f32 %v2783, %v2858
      %v2923 = vmul.f32 %v2784, %v2859
      %v2924 = vmul.f32 %v2785, %v2860
      %v2925 = vmul.f32 %v2786, %v2861
      %v2926 = vmul.f32 %v2787, %v2862
      %v2927 = vmul.f32 %v2788, %v2863
      %v2928 = vmul.f32 %v2789, %v2864
      %v2929 = vmul.f32 %v2790, %v2865
      %v2930 = vmul.f32 %v2791, %v2866
      %v2931 = vmul.f32 %v2792, %v2867
      %v2932 = vmul.f32 %v2793, %v2868
      %v2933 = vmul.f32 %v2794, %v2869
      %v2934 = vmul.f32 %v2795, %v2870
      %v2935 = vmul.f32 %v2796, %v2871
      %v2936 = vmul.f32 %v2797, %v2872
      %v2937 = vmul.f32 %v2798, %v2873
      %v2938 = vmul.f32 %v2799, %v2874
      %v2939 = vmul.f32 %v2800, %v2875
      %v2940 = vmul.f32 %v2801, %v2876
      %v2941 = vmul.f32 %v2802, %v2877
      %v2942 = vmul.f32 %v2803, %v2878
      %v2943 = vmul.f32 %v2804, %v2879
      %v2944 = vmul.f32 %v2805, %v2880
      %v2945 = vmul.f32 %v2806, %v2881
      %v2946 = vmul.f32 %v2807, %v2882
      %v2947 = vmul.f32 %v2808, %v2883
      %v2948 = vmul.f32 %v2809, %v2884
      %v2949 = vmul.f32 %v2810, %v2885
      %v2950 = vmul.f32 %v2811, %v2886
      %v2951 = vmul.f32 %v2812, %v2887
      %v2952 = vmul.f32 %v2813, %v2888
      %v2953 = vmul.f32 %v2814, %v2889
      %v2954 = vmul.f32 %v2815, %v2890
      %v2955 = vmul.f32 %v2816, %v2891
      %v2956 = vmul.f32 %v2817, %v2892
      %v2957 = vmul.f32 %v2818, %v2893
      %v2958 = vmul.f32 %v2819, %v2894
      %v2959 = vmul.f32 %v2820, %v2895
      %v2960 = vmul.f32 %v2821, %v2896
      %v2962 = vlaneseq
      %v2963 = vshrl.u32 %v2962, 7
      %v2964 = vsub.s32 0, %v2963
      %v2965 = vrot.slane %v2309, %v2964
      %v2966 = vlaneseq
      %v2967 = vshrl.u32 %v2966, 7
      %v2968 = vsub.s32 1, %v2967
      %v2969 = vrot.slane %v2309, %v2968
      %v2972 = vadd.f32 %v2897, %v2965
      %v2973 = vadd.f32 %v2898, %v2969
      %v2974 = vadd.f32 %v2899, %v2965
      %v2975 = vadd.f32 %v2900, %v2969
      %v2976 = vadd.f32 %v2901, %v2965
      %v2977 = vadd.f32 %v2902, %v2969
      %v2978 = vadd.f32 %v2903, %v2965
      %v2979 = vadd.f32 %v2904, %v2969
      %v2980 = vadd.f32 %v2905, %v2965
      %v2981 = vadd.f32 %v2906, %v2969
      %v2982 = vadd.f32 %v2907, %v2965
      %v2983 = vadd.f32 %v2908, %v2969
      %v2984 = vadd.f32 %v2909, %v2965
      %v2985 = vadd.f32 %v2910, %v2969
      %v2986 = vadd.f32 %v2911, %v2965
      %v2987 = vadd.f32 %v2912, %v2969
      %v2988 = vadd.f32 %v2913, %v2965
      %v2989 = vadd.f32 %v2914, %v2969
      %v2990 = vadd.f32 %v2915, %v2965
      %v2991 = vadd.f32 %v2916, %v2969
      %v2992 = vadd.f32 %v2917, %v2965
      %v2993 = vadd.f32 %v2918, %v2969
      %v2994 = vadd.f32 %v2919, %v2965
      %v2995 = vadd.f32 %v2920, %v2969
      %v2996 = vadd.f32 %v2921, %v2965
      %v2997 = vadd.f32 %v2922, %v2969
      %v2998 = vadd.f32 %v2923, %v2965
      %v2999 = vadd.f32 %v2924, %v2969
      %v3000 = vadd.f32 %v2925, %v2965
      %v3001 = vadd.f32 %v2926, %v2969
      %v3002 = vadd.f32 %v2927, %v2965
      %v3003 = vadd.f32 %v2928, %v2969
      %v3004 = vadd.f32 %v2929, %v2965
      %v3005 = vadd.f32 %v2930, %v2969
      %v3006 = vadd.f32 %v2931, %v2965
      %v3007 = vadd.f32 %v2932, %v2969
      %v3008 = vadd.f32 %v2933, %v2965
      %v3009 = vadd.f32 %v2934, %v2969
      %v3010 = vadd.f32 %v2935, %v2965
      %v3011 = vadd.f32 %v2936, %v2969
      %v3012 = vadd.f32 %v2937, %v2965
      %v3013 = vadd.f32 %v2938, %v2969
      %v3014 = vadd.f32 %v2939, %v2965
      %v3015 = vadd.f32 %v2940, %v2969
      %v3016 = vadd.f32 %v2941, %v2965
      %v3017 = vadd.f32 %v2942, %v2969
      %v3018 = vadd.f32 %v2943, %v2965
      %v3019 = vadd.f32 %v2944, %v2969
      %v3020 = vadd.f32 %v2945, %v2965
      %v3021 = vadd.f32 %v2946, %v2969
      %v3022 = vadd.f32 %v2947, %v2965
      %v3023 = vadd.f32 %v2948, %v2969
      %v3024 = vadd.f32 %v2949, %v2965
      %v3025 = vadd.f32 %v2950, %v2969
      %v3026 = vadd.f32 %v2951, %v2965
      %v3027 = vadd.f32 %v2952, %v2969
      %v3028 = vadd.f32 %v2953, %v2965
      %v3029 = vadd.f32 %v2954, %v2969
      %v3030 = vadd.f32 %v2955, %v2965
      %v3031 = vadd.f32 %v2956, %v2969
      %v3032 = vadd.f32 %v2957, %v2965
      %v3033 = vadd.f32 %v2958, %v2969
      %v3034 = vadd.f32 %v2959, %v2965
      %v3035 = vadd.f32 %v2960, %v2969
      %v3036 = vpack.c.bf16 %v2974, %v2972
      %v3037 = vpack.c.bf16 %v2975, %v2973
      %v3038 = vpack.c.bf16 %v2978, %v2976
      %v3039 = vpack.c.bf16 %v2979, %v2977
      %v3040 = vpack.c.bf16 %v2982, %v2980
      %v3041 = vpack.c.bf16 %v2983, %v2981
      %v3042 = vpack.c.bf16 %v2986, %v2984
      %v3043 = vpack.c.bf16 %v2987, %v2985
      %v3044 = vpack.c.bf16 %v2990, %v2988
      %v3045 = vpack.c.bf16 %v2991, %v2989
      %v3046 = vpack.c.bf16 %v2994, %v2992
      %v3047 = vpack.c.bf16 %v2995, %v2993
      %v3048 = vpack.c.bf16 %v2998, %v2996
      %v3049 = vpack.c.bf16 %v2999, %v2997
      %v3050 = vpack.c.bf16 %v3002, %v3000
      %v3051 = vpack.c.bf16 %v3003, %v3001
      %v3052 = vpack.c.bf16 %v3006, %v3004
      %v3053 = vpack.c.bf16 %v3007, %v3005
      %v3054 = vpack.c.bf16 %v3010, %v3008
      %v3055 = vpack.c.bf16 %v3011, %v3009
      %v3056 = vpack.c.bf16 %v3014, %v3012
      %v3057 = vpack.c.bf16 %v3015, %v3013
      %v3058 = vpack.c.bf16 %v3018, %v3016
      %v3059 = vpack.c.bf16 %v3019, %v3017
      %v3060 = vpack.c.bf16 %v3022, %v3020
      %v3061 = vpack.c.bf16 %v3023, %v3021
      %v3062 = vpack.c.bf16 %v3026, %v3024
      %v3063 = vpack.c.bf16 %v3027, %v3025
      %v3064 = vpack.c.bf16 %v3030, %v3028
      %v3065 = vpack.c.bf16 %v3031, %v3029
      %v3066 = vpack.c.bf16 %v3034, %v3032
      %v3067 = vpack.c.bf16 %v3035, %v3033
      %v3068 = vld [vmem:[%s11] sm:$0xff]
      %v3069 = vld [vmem:[%s11 + $0x8] sm:$0xff]
      %v3070 = vld [vmem:[%s11 + $0x10] sm:$0xff]
      %v3071 = vld [vmem:[%s11 + $0x18] sm:$0xff]
      %v3072 = vld [vmem:[%s11 + $0x20] sm:$0xff]
      %v3073 = vld [vmem:[%s11 + $0x28] sm:$0xff]
      %v3074 = vld [vmem:[%s11 + $0x30] sm:$0xff]
      %v3075 = vld [vmem:[%s11 + $0x38] sm:$0xff]
      %v3076 = vld [vmem:[%s11 + $0x40] sm:$0xff]
      %v3077 = vld [vmem:[%s11 + $0x48] sm:$0xff]
      %v3078 = vld [vmem:[%s11 + $0x50] sm:$0xff]
      %v3079 = vld [vmem:[%s11 + $0x58] sm:$0xff]
      %v3080 = vld [vmem:[%s11 + $0x60] sm:$0xff]
      %v3081 = vld [vmem:[%s11 + $0x68] sm:$0xff]
      %v3082 = vld [vmem:[%s11 + $0x70] sm:$0xff]
      %v3083 = vld [vmem:[%s11 + $0x78] sm:$0xff]
      %v3084 = vld [vmem:[%s11 + $0x80] sm:$0xff]
      %v3085 = vld [vmem:[%s11 + $0x88] sm:$0xff]
      %v3086 = vld [vmem:[%s11 + $0x90] sm:$0xff]
      %v3087 = vld [vmem:[%s11 + $0x98] sm:$0xff]
      %v3088 = vld [vmem:[%s11 + $0xa0] sm:$0xff]
      %v3089 = vld [vmem:[%s11 + $0xa8] sm:$0xff]
      %v3090 = vld [vmem:[%s11 + $0xb0] sm:$0xff]
      %v3091 = vld [vmem:[%s11 + $0xb8] sm:$0xff]
      %v3092 = vld [vmem:[%s11 + $0xc0] sm:$0xff]
      %v3093 = vld [vmem:[%s11 + $0xc8] sm:$0xff]
      %v3094 = vld [vmem:[%s11 + $0xd0] sm:$0xff]
      %v3095 = vld [vmem:[%s11 + $0xd8] sm:$0xff]
      %v3096 = vld [vmem:[%s11 + $0xe0] sm:$0xff]
      %v3097 = vld [vmem:[%s11 + $0xe8] sm:$0xff]
      %v3098 = vld [vmem:[%s11 + $0xf0] sm:$0xff]
      %v3099 = vld [vmem:[%s11 + $0xf8] sm:$0xff]
      %v3100 = vld [vmem:[%s12] sm:$0x3]
      %v3102 = vlaneseq
      %v3103 = vshrl.u32 %v3102, 7
      %v3104 = vsub.s32 0, %v3103
      %v3105 = vrot.slane %v3100, %v3104
      %v3106 = vlaneseq
      %v3107 = vshrl.u32 %v3106, 7
      %v3108 = vsub.s32 1, %v3107
      %v3109 = vrot.slane %v3100, %v3108
      %v3144 = vunpack.c.l.b16 %v3068
      %v3145 = vunpack.c.h.b16 %v3068
      %v3146 = vunpack.c.l.b16 %v3069
      %v3147 = vunpack.c.h.b16 %v3069
      %v3148 = vunpack.c.l.b16 %v3070
      %v3149 = vunpack.c.h.b16 %v3070
      %v3150 = vunpack.c.l.b16 %v3071
      %v3151 = vunpack.c.h.b16 %v3071
      %v3152 = vunpack.c.l.b16 %v3072
      %v3153 = vunpack.c.h.b16 %v3072
      %v3154 = vunpack.c.l.b16 %v3073
      %v3155 = vunpack.c.h.b16 %v3073
      %v3156 = vunpack.c.l.b16 %v3074
      %v3157 = vunpack.c.h.b16 %v3074
      %v3158 = vunpack.c.l.b16 %v3075
      %v3159 = vunpack.c.h.b16 %v3075
      %v3160 = vunpack.c.l.b16 %v3076
      %v3161 = vunpack.c.h.b16 %v3076
      %v3162 = vunpack.c.l.b16 %v3077
      %v3163 = vunpack.c.h.b16 %v3077
      %v3164 = vunpack.c.l.b16 %v3078
      %v3165 = vunpack.c.h.b16 %v3078
      %v3166 = vunpack.c.l.b16 %v3079
      %v3167 = vunpack.c.h.b16 %v3079
      %v3168 = vunpack.c.l.b16 %v3080
      %v3169 = vunpack.c.h.b16 %v3080
      %v3170 = vunpack.c.l.b16 %v3081
      %v3171 = vunpack.c.h.b16 %v3081
      %v3172 = vunpack.c.l.b16 %v3082
      %v3173 = vunpack.c.h.b16 %v3082
      %v3174 = vunpack.c.l.b16 %v3083
      %v3175 = vunpack.c.h.b16 %v3083
      %v3176 = vunpack.c.l.b16 %v3084
      %v3177 = vunpack.c.h.b16 %v3084
      %v3178 = vunpack.c.l.b16 %v3085
      %v3179 = vunpack.c.h.b16 %v3085
      %v3180 = vunpack.c.l.b16 %v3086
      %v3181 = vunpack.c.h.b16 %v3086
      %v3182 = vunpack.c.l.b16 %v3087
      %v3183 = vunpack.c.h.b16 %v3087
      %v3184 = vunpack.c.l.b16 %v3088
      %v3185 = vunpack.c.h.b16 %v3088
      %v3186 = vunpack.c.l.b16 %v3089
      %v3187 = vunpack.c.h.b16 %v3089
      %v3188 = vunpack.c.l.b16 %v3090
      %v3189 = vunpack.c.h.b16 %v3090
      %v3190 = vunpack.c.l.b16 %v3091
      %v3191 = vunpack.c.h.b16 %v3091
      %v3192 = vunpack.c.l.b16 %v3092
      %v3193 = vunpack.c.h.b16 %v3092
      %v3194 = vunpack.c.l.b16 %v3093
      %v3195 = vunpack.c.h.b16 %v3093
      %v3196 = vunpack.c.l.b16 %v3094
      %v3197 = vunpack.c.h.b16 %v3094
      %v3198 = vunpack.c.l.b16 %v3095
      %v3199 = vunpack.c.h.b16 %v3095
      %v3200 = vunpack.c.l.b16 %v3096
      %v3201 = vunpack.c.h.b16 %v3096
      %v3202 = vunpack.c.l.b16 %v3097
      %v3203 = vunpack.c.h.b16 %v3097
      %v3204 = vunpack.c.l.b16 %v3098
      %v3205 = vunpack.c.h.b16 %v3098
      %v3206 = vunpack.c.l.b16 %v3099
      %v3207 = vunpack.c.h.b16 %v3099
      %v3208 = vpack.c.b16 %v3146, %v3144
      %v3209 = vpack.c.b16 %v3147, %v3145
      %v3210 = vpack.c.b16 %v3150, %v3148
      %v3211 = vpack.c.b16 %v3151, %v3149
      %v3212 = vpack.c.b16 %v3154, %v3152
      %v3213 = vpack.c.b16 %v3155, %v3153
      %v3214 = vpack.c.b16 %v3158, %v3156
      %v3215 = vpack.c.b16 %v3159, %v3157
      %v3216 = vpack.c.b16 %v3162, %v3160
      %v3217 = vpack.c.b16 %v3163, %v3161
      %v3218 = vpack.c.b16 %v3166, %v3164
      %v3219 = vpack.c.b16 %v3167, %v3165
      %v3220 = vpack.c.b16 %v3170, %v3168
      %v3221 = vpack.c.b16 %v3171, %v3169
      %v3222 = vpack.c.b16 %v3174, %v3172
      %v3223 = vpack.c.b16 %v3175, %v3173
      %v3224 = vpack.c.b16 %v3178, %v3176
      %v3225 = vpack.c.b16 %v3179, %v3177
      %v3226 = vpack.c.b16 %v3182, %v3180
      %v3227 = vpack.c.b16 %v3183, %v3181
      %v3228 = vpack.c.b16 %v3186, %v3184
      %v3229 = vpack.c.b16 %v3187, %v3185
      %v3230 = vpack.c.b16 %v3190, %v3188
      %v3231 = vpack.c.b16 %v3191, %v3189
      %v3232 = vpack.c.b16 %v3194, %v3192
      %v3233 = vpack.c.b16 %v3195, %v3193
      %v3234 = vpack.c.b16 %v3198, %v3196
      %v3235 = vpack.c.b16 %v3199, %v3197
      %v3236 = vpack.c.b16 %v3202, %v3200
      %v3237 = vpack.c.b16 %v3203, %v3201
      %v3238 = vpack.c.b16 %v3206, %v3204
      %v3239 = vpack.c.b16 %v3207, %v3205
      %3272 = vmatprep.subr.bf16.mxu0 %v3223
      %3273 = vmatpush1.bf16.msra.mxu0 %v3222
      %3274 = vmatprep.subr.bf16.mxu0 %v3221
      %3275 = vmatpush1.bf16.msra.mxu0 %v3220
      %3276 = vmatprep.subr.bf16.mxu0 %v3219
      %3277 = vmatpush1.bf16.msra.mxu0 %v3218
      %3278 = vmatprep.subr.bf16.mxu0 %v3217
      %3279 = vmatpush1.bf16.msra.mxu0 %v3216
      %3280 = vmatprep.subr.bf16.mxu0 %v3215
      %3281 = vmatpush1.bf16.msra.mxu0 %v3214
      %3282 = vmatprep.subr.bf16.mxu0 %v3213
      %3283 = vmatpush1.bf16.msra.mxu0 %v3212
      %3284 = vmatprep.subr.bf16.mxu0 %v3211
      %3285 = vmatpush1.bf16.msra.mxu0 %v3210
      %3286 = vmatprep.subr.bf16.mxu0 %v3209
      %3287 = vmatpush1.bf16.msra.mxu0 %v3208
      %3288 = vmatprep.subr.bf16.mxu0 %v3239
      %3289 = vmatpush2.bf16.msra.mxu0 %v3238
      %3290 = vmatprep.subr.bf16.mxu0 %v3237
      %3291 = vmatpush2.bf16.msra.mxu0 %v3236
      %3292 = vmatprep.subr.bf16.mxu0 %v3235
      %3293 = vmatpush2.bf16.msra.mxu0 %v3234
      %3294 = vmatprep.subr.bf16.mxu0 %v3233
      %3295 = vmatpush2.bf16.msra.mxu0 %v3232
      %3296 = vmatprep.subr.bf16.mxu0 %v3231
      %3297 = vmatpush2.bf16.msra.mxu0 %v3230
      %3298 = vmatprep.subr.bf16.mxu0 %v3229
      %3299 = vmatpush2.bf16.msra.mxu0 %v3228
      %3300 = vmatprep.subr.bf16.mxu0 %v3227
      %3301 = vmatpush2.bf16.msra.mxu0 %v3226
      %3302 = vmatprep.subr.bf16.mxu0 %v3225
      %3303 = vmatpush2.bf16.msra.mxu0 %v3224
      %3304 = vmatprep.mubr.bf16.mxu0 %v3037
      %3305 = vmatmul.mubr.bf16.gmra.mxu0 %v3036
      %v3306 = vpop.f32.mrf.mxu0
      %v3307 = vadd.f32 %v3105, %v3306
      %v3308 = vpop.f32.mrf.mxu0
      %v3309 = vadd.f32 %v3109, %v3308
      %v3310 = vpop.f32.mrf.mxu0
      %v3311 = vadd.f32 %v3105, %v3310
      %v3312 = vpop.f32.mrf.mxu0
      %v3313 = vadd.f32 %v3109, %v3312
      %3314 = vmatprep.mubr.bf16.mxu0 %v3039
      %3315 = vmatmul.mubr.bf16.gmra.mxu0 %v3038
      %v3316 = vpop.f32.mrf.mxu0
      %v3317 = vadd.f32 %v3105, %v3316
      %v3318 = vpop.f32.mrf.mxu0
      %v3319 = vadd.f32 %v3109, %v3318
      %v3320 = vpop.f32.mrf.mxu0
      %v3321 = vadd.f32 %v3105, %v3320
      %v3322 = vpop.f32.mrf.mxu0
      %v3323 = vadd.f32 %v3109, %v3322
      %3324 = vmatprep.mubr.bf16.mxu0 %v3041
      %3325 = vmatmul.mubr.bf16.gmra.mxu0 %v3040
      %v3326 = vpop.f32.mrf.mxu0
      %v3327 = vadd.f32 %v3105, %v3326
      %v3328 = vpop.f32.mrf.mxu0
      %v3329 = vadd.f32 %v3109, %v3328
      %v3330 = vpop.f32.mrf.mxu0
      %v3331 = vadd.f32 %v3105, %v3330
      %v3332 = vpop.f32.mrf.mxu0
      %v3333 = vadd.f32 %v3109, %v3332
      %3334 = vmatprep.mubr.bf16.mxu0 %v3043
      %3335 = vmatmul.mubr.bf16.gmra.mxu0 %v3042
      %v3336 = vpop.f32.mrf.mxu0
      %v3337 = vadd.f32 %v3105, %v3336
      %v3338 = vpop.f32.mrf.mxu0
      %v3339 = vadd.f32 %v3109, %v3338
      %v3340 = vpop.f32.mrf.mxu0
      %v3341 = vadd.f32 %v3105, %v3340
      %v3342 = vpop.f32.mrf.mxu0
      %v3343 = vadd.f32 %v3109, %v3342
      %3344 = vmatprep.mubr.bf16.mxu0 %v3045
      %3345 = vmatmul.mubr.bf16.gmra.mxu0 %v3044
      %v3346 = vpop.f32.mrf.mxu0
      %v3347 = vadd.f32 %v3105, %v3346
      %v3348 = vpop.f32.mrf.mxu0
      %v3349 = vadd.f32 %v3109, %v3348
      %v3350 = vpop.f32.mrf.mxu0
      %v3351 = vadd.f32 %v3105, %v3350
      %v3352 = vpop.f32.mrf.mxu0
      %v3353 = vadd.f32 %v3109, %v3352
      %3354 = vmatprep.mubr.bf16.mxu0 %v3047
      %3355 = vmatmul.mubr.bf16.gmra.mxu0 %v3046
      %v3356 = vpop.f32.mrf.mxu0
      %v3357 = vadd.f32 %v3105, %v3356
      %v3358 = vpop.f32.mrf.mxu0
      %v3359 = vadd.f32 %v3109, %v3358
      %v3360 = vpop.f32.mrf.mxu0
      %v3361 = vadd.f32 %v3105, %v3360
      %v3362 = vpop.f32.mrf.mxu0
      %v3363 = vadd.f32 %v3109, %v3362
      %3364 = vmatprep.mubr.bf16.mxu0 %v3049
      %3365 = vmatmul.mubr.bf16.gmra.mxu0 %v3048
      %v3366 = vpop.f32.mrf.mxu0
      %v3367 = vadd.f32 %v3105, %v3366
      %v3368 = vpop.f32.mrf.mxu0
      %v3369 = vadd.f32 %v3109, %v3368
      %v3370 = vpop.f32.mrf.mxu0
      %v3371 = vadd.f32 %v3105, %v3370
      %v3372 = vpop.f32.mrf.mxu0
      %v3373 = vadd.f32 %v3109, %v3372
      %3374 = vmatprep.mubr.bf16.mxu0 %v3051
      %3375 = vmatmul.mubr.bf16.gmra.mxu0 %v3050
      %v3376 = vpop.f32.mrf.mxu0
      %v3377 = vadd.f32 %v3105, %v3376
      %v3378 = vpop.f32.mrf.mxu0
      %v3379 = vadd.f32 %v3109, %v3378
      %v3380 = vpop.f32.mrf.mxu0
      %v3381 = vadd.f32 %v3105, %v3380
      %v3382 = vpop.f32.mrf.mxu0
      %v3383 = vadd.f32 %v3109, %v3382
      %3384 = vmatprep.mubr.bf16.mxu0 %v3053
      %3385 = vmatmul.mubr.bf16.gmra.mxu0 %v3052
      %v3386 = vpop.f32.mrf.mxu0
      %v3387 = vadd.f32 %v3105, %v3386
      %v3388 = vpop.f32.mrf.mxu0
      %v3389 = vadd.f32 %v3109, %v3388
      %v3390 = vpop.f32.mrf.mxu0
      %v3391 = vadd.f32 %v3105, %v3390
      %v3392 = vpop.f32.mrf.mxu0
      %v3393 = vadd.f32 %v3109, %v3392
      %3394 = vmatprep.mubr.bf16.mxu0 %v3055
      %3395 = vmatmul.mubr.bf16.gmra.mxu0 %v3054
      %v3396 = vpop.f32.mrf.mxu0
      %v3397 = vadd.f32 %v3105, %v3396
      %v3398 = vpop.f32.mrf.mxu0
      %v3399 = vadd.f32 %v3109, %v3398
      %v3400 = vpop.f32.mrf.mxu0
      %v3401 = vadd.f32 %v3105, %v3400
      %v3402 = vpop.f32.mrf.mxu0
      %v3403 = vadd.f32 %v3109, %v3402
      %3404 = vmatprep.mubr.bf16.mxu0 %v3057
      %3405 = vmatmul.mubr.bf16.gmra.mxu0 %v3056
      %v3406 = vpop.f32.mrf.mxu0
      %v3407 = vadd.f32 %v3105, %v3406
      %v3408 = vpop.f32.mrf.mxu0
      %v3409 = vadd.f32 %v3109, %v3408
      %v3410 = vpop.f32.mrf.mxu0
      %v3411 = vadd.f32 %v3105, %v3410
      %v3412 = vpop.f32.mrf.mxu0
      %v3413 = vadd.f32 %v3109, %v3412
      %3414 = vmatprep.mubr.bf16.mxu0 %v3059
      %3415 = vmatmul.mubr.bf16.gmra.mxu0 %v3058
      %v3416 = vpop.f32.mrf.mxu0
      %v3417 = vadd.f32 %v3105, %v3416
      %v3418 = vpop.f32.mrf.mxu0
      %v3419 = vadd.f32 %v3109, %v3418
      %v3420 = vpop.f32.mrf.mxu0
      %v3421 = vadd.f32 %v3105, %v3420
      %v3422 = vpop.f32.mrf.mxu0
      %v3423 = vadd.f32 %v3109, %v3422
      %3424 = vmatprep.mubr.bf16.mxu0 %v3061
      %3425 = vmatmul.mubr.bf16.gmra.mxu0 %v3060
      %v3426 = vpop.f32.mrf.mxu0
      %v3427 = vadd.f32 %v3105, %v3426
      %v3428 = vpop.f32.mrf.mxu0
      %v3429 = vadd.f32 %v3109, %v3428
      %v3430 = vpop.f32.mrf.mxu0
      %v3431 = vadd.f32 %v3105, %v3430
      %v3432 = vpop.f32.mrf.mxu0
      %v3433 = vadd.f32 %v3109, %v3432
      %3434 = vmatprep.mubr.bf16.mxu0 %v3063
      %3435 = vmatmul.mubr.bf16.gmra.mxu0 %v3062
      %v3436 = vpop.f32.mrf.mxu0
      %v3437 = vadd.f32 %v3105, %v3436
      %v3438 = vpop.f32.mrf.mxu0
      %v3439 = vadd.f32 %v3109, %v3438
      %v3440 = vpop.f32.mrf.mxu0
      %v3441 = vadd.f32 %v3105, %v3440
      %v3442 = vpop.f32.mrf.mxu0
      %v3443 = vadd.f32 %v3109, %v3442
      %3444 = vmatprep.mubr.bf16.mxu0 %v3065
      %3445 = vmatmul.mubr.bf16.gmra.mxu0 %v3064
      %v3446 = vpop.f32.mrf.mxu0
      %v3447 = vadd.f32 %v3105, %v3446
      %v3448 = vpop.f32.mrf.mxu0
      %v3449 = vadd.f32 %v3109, %v3448
      %v3450 = vpop.f32.mrf.mxu0
      %v3451 = vadd.f32 %v3105, %v3450
      %v3452 = vpop.f32.mrf.mxu0
      %v3453 = vadd.f32 %v3109, %v3452
      %3454 = vmatprep.mubr.bf16.mxu0 %v3067
      %3455 = vmatmul.mubr.bf16.gmra.mxu0 %v3066
      %v3456 = vpop.f32.mrf.mxu0
      %v3457 = vadd.f32 %v3105, %v3456
      %v3458 = vpop.f32.mrf.mxu0
      %v3459 = vadd.f32 %v3109, %v3458
      %v3460 = vpop.f32.mrf.mxu0
      %v3461 = vadd.f32 %v3105, %v3460
      %v3462 = vpop.f32.mrf.mxu0
      %v3463 = vadd.f32 %v3109, %v3462
      %3464 = vdwg.mxu0
      %v3465 = vmax.f32 %v3307, 0.0
      %v3466 = vmax.f32 %v3309, 0.0
      %v3467 = vmax.f32 %v3311, 0.0
      %v3468 = vmax.f32 %v3313, 0.0
      %v3469 = vmax.f32 %v3317, 0.0
      %v3470 = vmax.f32 %v3319, 0.0
      %v3471 = vmax.f32 %v3321, 0.0
      %v3472 = vmax.f32 %v3323, 0.0
      %v3473 = vmax.f32 %v3327, 0.0
      %v3474 = vmax.f32 %v3329, 0.0
      %v3475 = vmax.f32 %v3331, 0.0
      %v3476 = vmax.f32 %v3333, 0.0
      %v3477 = vmax.f32 %v3337, 0.0
      %v3478 = vmax.f32 %v3339, 0.0
      %v3479 = vmax.f32 %v3341, 0.0
      %v3480 = vmax.f32 %v3343, 0.0
      %v3481 = vmax.f32 %v3347, 0.0
      %v3482 = vmax.f32 %v3349, 0.0
      %v3483 = vmax.f32 %v3351, 0.0
      %v3484 = vmax.f32 %v3353, 0.0
      %v3485 = vmax.f32 %v3357, 0.0
      %v3486 = vmax.f32 %v3359, 0.0
      %v3487 = vmax.f32 %v3361, 0.0
      %v3488 = vmax.f32 %v3363, 0.0
      %v3489 = vmax.f32 %v3367, 0.0
      %v3490 = vmax.f32 %v3369, 0.0
      %v3491 = vmax.f32 %v3371, 0.0
      %v3492 = vmax.f32 %v3373, 0.0
      %v3493 = vmax.f32 %v3377, 0.0
      %v3494 = vmax.f32 %v3379, 0.0
      %v3495 = vmax.f32 %v3381, 0.0
      %v3496 = vmax.f32 %v3383, 0.0
      %v3497 = vmax.f32 %v3387, 0.0
      %v3498 = vmax.f32 %v3389, 0.0
      %v3499 = vmax.f32 %v3391, 0.0
      %v3500 = vmax.f32 %v3393, 0.0
      %v3501 = vmax.f32 %v3397, 0.0
      %v3502 = vmax.f32 %v3399, 0.0
      %v3503 = vmax.f32 %v3401, 0.0
      %v3504 = vmax.f32 %v3403, 0.0
      %v3505 = vmax.f32 %v3407, 0.0
      %v3506 = vmax.f32 %v3409, 0.0
      %v3507 = vmax.f32 %v3411, 0.0
      %v3508 = vmax.f32 %v3413, 0.0
      %v3509 = vmax.f32 %v3417, 0.0
      %v3510 = vmax.f32 %v3419, 0.0
      %v3511 = vmax.f32 %v3421, 0.0
      %v3512 = vmax.f32 %v3423, 0.0
      %v3513 = vmax.f32 %v3427, 0.0
      %v3514 = vmax.f32 %v3429, 0.0
      %v3515 = vmax.f32 %v3431, 0.0
      %v3516 = vmax.f32 %v3433, 0.0
      %v3517 = vmax.f32 %v3437, 0.0
      %v3518 = vmax.f32 %v3439, 0.0
      %v3519 = vmax.f32 %v3441, 0.0
      %v3520 = vmax.f32 %v3443, 0.0
      %v3521 = vmax.f32 %v3447, 0.0
      %v3522 = vmax.f32 %v3449, 0.0
      %v3523 = vmax.f32 %v3451, 0.0
      %v3524 = vmax.f32 %v3453, 0.0
      %v3525 = vmax.f32 %v3457, 0.0
      %v3526 = vmax.f32 %v3459, 0.0
      %v3527 = vmax.f32 %v3461, 0.0
      %v3528 = vmax.f32 %v3463, 0.0
      %v3529 = vld [vmem:[%s13] sm:$0x3]
      %v3530 = vld [vmem:[%s14] sm:$0x3]
      %v3531 = vadd.f32 %v3465, %v3466
      %3532 = vadd.xlane.f32.xlu0 %v3531
      %v3533 = vpop.xlane.xlu0 %3532
      %v3534 = vadd.f32 %v3467, %v3468
      %3535 = vadd.xlane.f32.xlu0 %v3534
      %v3536 = vpop.xlane.xlu0 %3535
      %v3537 = vadd.f32 %v3469, %v3470
      %3538 = vadd.xlane.f32.xlu0 %v3537
      %v3539 = vpop.xlane.xlu0 %3538
      %v3540 = vadd.f32 %v3471, %v3472
      %3541 = vadd.xlane.f32.xlu0 %v3540
      %v3542 = vpop.xlane.xlu0 %3541
      %v3543 = vadd.f32 %v3473, %v3474
      %3544 = vadd.xlane.f32.xlu0 %v3543
      %v3545 = vpop.xlane.xlu0 %3544
      %v3546 = vadd.f32 %v3475, %v3476
      %3547 = vadd.xlane.f32.xlu0 %v3546
      %v3548 = vpop.xlane.xlu0 %3547
      %v3549 = vadd.f32 %v3477, %v3478
      %3550 = vadd.xlane.f32.xlu0 %v3549
      %v3551 = vpop.xlane.xlu0 %3550
      %v3552 = vadd.f32 %v3479, %v3480
      %3553 = vadd.xlane.f32.xlu0 %v3552
      %v3554 = vpop.xlane.xlu0 %3553
      %v3555 = vadd.f32 %v3481, %v3482
      %3556 = vadd.xlane.f32.xlu0 %v3555
      %v3557 = vpop.xlane.xlu0 %3556
      %v3558 = vadd.f32 %v3483, %v3484
      %3559 = vadd.xlane.f32.xlu0 %v3558
      %v3560 = vpop.xlane.xlu0 %3559
      %v3561 = vadd.f32 %v3485, %v3486
      %3562 = vadd.xlane.f32.xlu0 %v3561
      %v3563 = vpop.xlane.xlu0 %3562
      %v3564 = vadd.f32 %v3487, %v3488
      %3565 = vadd.xlane.f32.xlu0 %v3564
      %v3566 = vpop.xlane.xlu0 %3565
      %v3567 = vadd.f32 %v3489, %v3490
      %3568 = vadd.xlane.f32.xlu0 %v3567
      %v3569 = vpop.xlane.xlu0 %3568
      %v3570 = vadd.f32 %v3491, %v3492
      %3571 = vadd.xlane.f32.xlu0 %v3570
      %v3572 = vpop.xlane.xlu0 %3571
      %v3573 = vadd.f32 %v3493, %v3494
      %3574 = vadd.xlane.f32.xlu0 %v3573
      %v3575 = vpop.xlane.xlu0 %3574
      %v3576 = vadd.f32 %v3495, %v3496
      %3577 = vadd.xlane.f32.xlu0 %v3576
      %v3578 = vpop.xlane.xlu0 %3577
      %v3579 = vadd.f32 %v3497, %v3498
      %3580 = vadd.xlane.f32.xlu0 %v3579
      %v3581 = vpop.xlane.xlu0 %3580
      %v3582 = vadd.f32 %v3499, %v3500
      %3583 = vadd.xlane.f32.xlu0 %v3582
      %v3584 = vpop.xlane.xlu0 %3583
      %v3585 = vadd.f32 %v3501, %v3502
      %3586 = vadd.xlane.f32.xlu0 %v3585
      %v3587 = vpop.xlane.xlu0 %3586
      %v3588 = vadd.f32 %v3503, %v3504
      %3589 = vadd.xlane.f32.xlu0 %v3588
      %v3590 = vpop.xlane.xlu0 %3589
      %v3591 = vadd.f32 %v3505, %v3506
      %3592 = vadd.xlane.f32.xlu0 %v3591
      %v3593 = vpop.xlane.xlu0 %3592
      %v3594 = vadd.f32 %v3507, %v3508
      %3595 = vadd.xlane.f32.xlu0 %v3594
      %v3596 = vpop.xlane.xlu0 %3595
      %v3597 = vadd.f32 %v3509, %v3510
      %3598 = vadd.xlane.f32.xlu0 %v3597
      %v3599 = vpop.xlane.xlu0 %3598
      %v3600 = vadd.f32 %v3511, %v3512
      %3601 = vadd.xlane.f32.xlu0 %v3600
      %v3602 = vpop.xlane.xlu0 %3601
      %v3603 = vadd.f32 %v3513, %v3514
      %3604 = vadd.xlane.f32.xlu0 %v3603
      %v3605 = vpop.xlane.xlu0 %3604
      %v3606 = vadd.f32 %v3515, %v3516
      %3607 = vadd.xlane.f32.xlu0 %v3606
      %v3608 = vpop.xlane.xlu0 %3607
      %v3609 = vadd.f32 %v3517, %v3518
      %3610 = vadd.xlane.f32.xlu0 %v3609
      %v3611 = vpop.xlane.xlu0 %3610
      %v3612 = vadd.f32 %v3519, %v3520
      %3613 = vadd.xlane.f32.xlu0 %v3612
      %v3614 = vpop.xlane.xlu0 %3613
      %v3615 = vadd.f32 %v3521, %v3522
      %3616 = vadd.xlane.f32.xlu0 %v3615
      %v3617 = vpop.xlane.xlu0 %3616
      %v3618 = vadd.f32 %v3523, %v3524
      %3619 = vadd.xlane.f32.xlu0 %v3618
      %v3620 = vpop.xlane.xlu0 %3619
      %v3621 = vadd.f32 %v3525, %v3526
      %3622 = vadd.xlane.f32.xlu0 %v3621
      %v3623 = vpop.xlane.xlu0 %3622
      %v3624 = vadd.f32 %v3527, %v3528
      %3625 = vadd.xlane.f32.xlu0 %v3624
      %v3626 = vpop.xlane.xlu0 %3625
      %v3627 = vmul.f32 %v3465, %v3465
      %v3628 = vmul.f32 %v3466, %v3466
      %v3629 = vmul.f32 %v3467, %v3467
      %v3630 = vmul.f32 %v3468, %v3468
      %v3631 = vmul.f32 %v3469, %v3469
      %v3632 = vmul.f32 %v3470, %v3470
      %v3633 = vmul.f32 %v3471, %v3471
      %v3634 = vmul.f32 %v3472, %v3472
      %v3635 = vmul.f32 %v3473, %v3473
      %v3636 = vmul.f32 %v3474, %v3474
      %v3637 = vmul.f32 %v3475, %v3475
      %v3638 = vmul.f32 %v3476, %v3476
      %v3639 = vmul.f32 %v3477, %v3477
      %v3640 = vmul.f32 %v3478, %v3478
      %v3641 = vmul.f32 %v3479, %v3479
      %v3642 = vmul.f32 %v3480, %v3480
      %v3643 = vmul.f32 %v3481, %v3481
      %v3644 = vmul.f32 %v3482, %v3482
      %v3645 = vmul.f32 %v3483, %v3483
      %v3646 = vmul.f32 %v3484, %v3484
      %v3647 = vmul.f32 %v3485, %v3485
      %v3648 = vmul.f32 %v3486, %v3486
      %v3649 = vmul.f32 %v3487, %v3487
      %v3650 = vmul.f32 %v3488, %v3488
      %v3651 = vmul.f32 %v3489, %v3489
      %v3652 = vmul.f32 %v3490, %v3490
      %v3653 = vmul.f32 %v3491, %v3491
      %v3654 = vmul.f32 %v3492, %v3492
      %v3655 = vmul.f32 %v3493, %v3493
      %v3656 = vmul.f32 %v3494, %v3494
      %v3657 = vmul.f32 %v3495, %v3495
      %v3658 = vmul.f32 %v3496, %v3496
      %v3659 = vmul.f32 %v3497, %v3497
      %v3660 = vmul.f32 %v3498, %v3498
      %v3661 = vmul.f32 %v3499, %v3499
      %v3662 = vmul.f32 %v3500, %v3500
      %v3663 = vmul.f32 %v3501, %v3501
      %v3664 = vmul.f32 %v3502, %v3502
      %v3665 = vmul.f32 %v3503, %v3503
      %v3666 = vmul.f32 %v3504, %v3504
      %v3667 = vmul.f32 %v3505, %v3505
      %v3668 = vmul.f32 %v3506, %v3506
      %v3669 = vmul.f32 %v3507, %v3507
      %v3670 = vmul.f32 %v3508, %v3508
      %v3671 = vmul.f32 %v3509, %v3509
      %v3672 = vmul.f32 %v3510, %v3510
      %v3673 = vmul.f32 %v3511, %v3511
      %v3674 = vmul.f32 %v3512, %v3512
      %v3675 = vmul.f32 %v3513, %v3513
      %v3676 = vmul.f32 %v3514, %v3514
      %v3677 = vmul.f32 %v3515, %v3515
      %v3678 = vmul.f32 %v3516, %v3516
      %v3679 = vmul.f32 %v3517, %v3517
      %v3680 = vmul.f32 %v3518, %v3518
      %v3681 = vmul.f32 %v3519, %v3519
      %v3682 = vmul.f32 %v3520, %v3520
      %v3683 = vmul.f32 %v3521, %v3521
      %v3684 = vmul.f32 %v3522, %v3522
      %v3685 = vmul.f32 %v3523, %v3523
      %v3686 = vmul.f32 %v3524, %v3524
      %v3687 = vmul.f32 %v3525, %v3525
      %v3688 = vmul.f32 %v3526, %v3526
      %v3689 = vmul.f32 %v3527, %v3527
      %v3690 = vmul.f32 %v3528, %v3528
      %v3691 = vadd.f32 %v3627, %v3628
      %3692 = vadd.xlane.f32.xlu0 %v3691
      %v3693 = vpop.xlane.xlu0 %3692
      %v3694 = vadd.f32 %v3629, %v3630
      %3695 = vadd.xlane.f32.xlu0 %v3694
      %v3696 = vpop.xlane.xlu0 %3695
      %v3697 = vadd.f32 %v3631, %v3632
      %3698 = vadd.xlane.f32.xlu0 %v3697
      %v3699 = vpop.xlane.xlu0 %3698
      %v3700 = vadd.f32 %v3633, %v3634
      %3701 = vadd.xlane.f32.xlu0 %v3700
      %v3702 = vpop.xlane.xlu0 %3701
      %v3703 = vadd.f32 %v3635, %v3636
      %3704 = vadd.xlane.f32.xlu0 %v3703
      %v3705 = vpop.xlane.xlu0 %3704
      %v3706 = vadd.f32 %v3637, %v3638
      %3707 = vadd.xlane.f32.xlu0 %v3706
      %v3708 = vpop.xlane.xlu0 %3707
      %v3709 = vadd.f32 %v3639, %v3640
      %3710 = vadd.xlane.f32.xlu0 %v3709
      %v3711 = vpop.xlane.xlu0 %3710
      %v3712 = vadd.f32 %v3641, %v3642
      %3713 = vadd.xlane.f32.xlu0 %v3712
      %v3714 = vpop.xlane.xlu0 %3713
      %v3715 = vadd.f32 %v3643, %v3644
      %3716 = vadd.xlane.f32.xlu0 %v3715
      %v3717 = vpop.xlane.xlu0 %3716
      %v3718 = vadd.f32 %v3645, %v3646
      %3719 = vadd.xlane.f32.xlu0 %v3718
      %v3720 = vpop.xlane.xlu0 %3719
      %v3721 = vadd.f32 %v3647, %v3648
      %3722 = vadd.xlane.f32.xlu0 %v3721
      %v3723 = vpop.xlane.xlu0 %3722
      %v3724 = vadd.f32 %v3649, %v3650
      %3725 = vadd.xlane.f32.xlu0 %v3724
      %v3726 = vpop.xlane.xlu0 %3725
      %v3727 = vadd.f32 %v3651, %v3652
      %3728 = vadd.xlane.f32.xlu0 %v3727
      %v3729 = vpop.xlane.xlu0 %3728
      %v3730 = vadd.f32 %v3653, %v3654
      %3731 = vadd.xlane.f32.xlu0 %v3730
      %v3732 = vpop.xlane.xlu0 %3731
      %v3733 = vadd.f32 %v3655, %v3656
      %3734 = vadd.xlane.f32.xlu0 %v3733
      %v3735 = vpop.xlane.xlu0 %3734
      %v3736 = vadd.f32 %v3657, %v3658
      %3737 = vadd.xlane.f32.xlu0 %v3736
      %v3738 = vpop.xlane.xlu0 %3737
      %v3739 = vadd.f32 %v3659, %v3660
      %3740 = vadd.xlane.f32.xlu0 %v3739
      %v3741 = vpop.xlane.xlu0 %3740
      %v3742 = vadd.f32 %v3661, %v3662
      %3743 = vadd.xlane.f32.xlu0 %v3742
      %v3744 = vpop.xlane.xlu0 %3743
      %v3745 = vadd.f32 %v3663, %v3664
      %3746 = vadd.xlane.f32.xlu0 %v3745
      %v3747 = vpop.xlane.xlu0 %3746
      %v3748 = vadd.f32 %v3665, %v3666
      %3749 = vadd.xlane.f32.xlu0 %v3748
      %v3750 = vpop.xlane.xlu0 %3749
      %v3751 = vadd.f32 %v3667, %v3668
      %3752 = vadd.xlane.f32.xlu0 %v3751
      %v3753 = vpop.xlane.xlu0 %3752
      %v3754 = vadd.f32 %v3669, %v3670
      %3755 = vadd.xlane.f32.xlu0 %v3754
      %v3756 = vpop.xlane.xlu0 %3755
      %v3757 = vadd.f32 %v3671, %v3672
      %3758 = vadd.xlane.f32.xlu0 %v3757
      %v3759 = vpop.xlane.xlu0 %3758
      %v3760 = vadd.f32 %v3673, %v3674
      %3761 = vadd.xlane.f32.xlu0 %v3760
      %v3762 = vpop.xlane.xlu0 %3761
      %v3763 = vadd.f32 %v3675, %v3676
      %3764 = vadd.xlane.f32.xlu0 %v3763
      %v3765 = vpop.xlane.xlu0 %3764
      %v3766 = vadd.f32 %v3677, %v3678
      %3767 = vadd.xlane.f32.xlu0 %v3766
      %v3768 = vpop.xlane.xlu0 %3767
      %v3769 = vadd.f32 %v3679, %v3680
      %3770 = vadd.xlane.f32.xlu0 %v3769
      %v3771 = vpop.xlane.xlu0 %3770
      %v3772 = vadd.f32 %v3681, %v3682
      %3773 = vadd.xlane.f32.xlu0 %v3772
      %v3774 = vpop.xlane.xlu0 %3773
      %v3775 = vadd.f32 %v3683, %v3684
      %3776 = vadd.xlane.f32.xlu0 %v3775
      %v3777 = vpop.xlane.xlu0 %3776
      %v3778 = vadd.f32 %v3685, %v3686
      %3779 = vadd.xlane.f32.xlu0 %v3778
      %v3780 = vpop.xlane.xlu0 %3779
      %v3781 = vadd.f32 %v3687, %v3688
      %3782 = vadd.xlane.f32.xlu0 %v3781
      %v3783 = vpop.xlane.xlu0 %3782
      %v3784 = vadd.f32 %v3689, %v3690
      %3785 = vadd.xlane.f32.xlu0 %v3784
      %v3786 = vpop.xlane.xlu0 %3785
      %v3787 = vmul.f32 %v3533, 0.00390625
      %v3788 = vmul.f32 %v3536, 0.00390625
      %v3789 = vmul.f32 %v3539, 0.00390625
      %v3790 = vmul.f32 %v3542, 0.00390625
      %v3791 = vmul.f32 %v3545, 0.00390625
      %v3792 = vmul.f32 %v3548, 0.00390625
      %v3793 = vmul.f32 %v3551, 0.00390625
      %v3794 = vmul.f32 %v3554, 0.00390625
      %v3795 = vmul.f32 %v3557, 0.00390625
      %v3796 = vmul.f32 %v3560, 0.00390625
      %v3797 = vmul.f32 %v3563, 0.00390625
      %v3798 = vmul.f32 %v3566, 0.00390625
      %v3799 = vmul.f32 %v3569, 0.00390625
      %v3800 = vmul.f32 %v3572, 0.00390625
      %v3801 = vmul.f32 %v3575, 0.00390625
      %v3802 = vmul.f32 %v3578, 0.00390625
      %v3803 = vmul.f32 %v3581, 0.00390625
      %v3804 = vmul.f32 %v3584, 0.00390625
      %v3805 = vmul.f32 %v3587, 0.00390625
      %v3806 = vmul.f32 %v3590, 0.00390625
      %v3807 = vmul.f32 %v3593, 0.00390625
      %v3808 = vmul.f32 %v3596, 0.00390625
      %v3809 = vmul.f32 %v3599, 0.00390625
      %v3810 = vmul.f32 %v3602, 0.00390625
      %v3811 = vmul.f32 %v3605, 0.00390625
      %v3812 = vmul.f32 %v3608, 0.00390625
      %v3813 = vmul.f32 %v3611, 0.00390625
      %v3814 = vmul.f32 %v3614, 0.00390625
      %v3815 = vmul.f32 %v3617, 0.00390625
      %v3816 = vmul.f32 %v3620, 0.00390625
      %v3817 = vmul.f32 %v3623, 0.00390625
      %v3818 = vmul.f32 %v3626, 0.00390625
      %v3819 = vmul.f32 %v3693, 0.00390625
      %v3820 = vmul.f32 %v3696, 0.00390625
      %v3821 = vmul.f32 %v3699, 0.00390625
      %v3822 = vmul.f32 %v3702, 0.00390625
      %v3823 = vmul.f32 %v3705, 0.00390625
      %v3824 = vmul.f32 %v3708, 0.00390625
      %v3825 = vmul.f32 %v3711, 0.00390625
      %v3826 = vmul.f32 %v3714, 0.00390625
      %v3827 = vmul.f32 %v3717, 0.00390625
      %v3828 = vmul.f32 %v3720, 0.00390625
      %v3829 = vmul.f32 %v3723, 0.00390625
      %v3830 = vmul.f32 %v3726, 0.00390625
      %v3831 = vmul.f32 %v3729, 0.00390625
      %v3832 = vmul.f32 %v3732, 0.00390625
      %v3833 = vmul.f32 %v3735, 0.00390625
      %v3834 = vmul.f32 %v3738, 0.00390625
      %v3835 = vmul.f32 %v3741, 0.00390625
      %v3836 = vmul.f32 %v3744, 0.00390625
      %v3837 = vmul.f32 %v3747, 0.00390625
      %v3838 = vmul.f32 %v3750, 0.00390625
      %v3839 = vmul.f32 %v3753, 0.00390625
      %v3840 = vmul.f32 %v3756, 0.00390625
      %v3841 = vmul.f32 %v3759, 0.00390625
      %v3842 = vmul.f32 %v3762, 0.00390625
      %v3843 = vmul.f32 %v3765, 0.00390625
      %v3844 = vmul.f32 %v3768, 0.00390625
      %v3845 = vmul.f32 %v3771, 0.00390625
      %v3846 = vmul.f32 %v3774, 0.00390625
      %v3847 = vmul.f32 %v3777, 0.00390625
      %v3848 = vmul.f32 %v3780, 0.00390625
      %v3849 = vmul.f32 %v3783, 0.00390625
      %v3850 = vmul.f32 %v3786, 0.00390625
      %v3851 = vmul.f32 %v3787, %v3787
      %v3852 = vmul.f32 %v3788, %v3788
      %v3853 = vmul.f32 %v3789, %v3789
      %v3854 = vmul.f32 %v3790, %v3790
      %v3855 = vmul.f32 %v3791, %v3791
      %v3856 = vmul.f32 %v3792, %v3792
      %v3857 = vmul.f32 %v3793, %v3793
      %v3858 = vmul.f32 %v3794, %v3794
      %v3859 = vmul.f32 %v3795, %v3795
      %v3860 = vmul.f32 %v3796, %v3796
      %v3861 = vmul.f32 %v3797, %v3797
      %v3862 = vmul.f32 %v3798, %v3798
      %v3863 = vmul.f32 %v3799, %v3799
      %v3864 = vmul.f32 %v3800, %v3800
      %v3865 = vmul.f32 %v3801, %v3801
      %v3866 = vmul.f32 %v3802, %v3802
      %v3867 = vmul.f32 %v3803, %v3803
      %v3868 = vmul.f32 %v3804, %v3804
      %v3869 = vmul.f32 %v3805, %v3805
      %v3870 = vmul.f32 %v3806, %v3806
      %v3871 = vmul.f32 %v3807, %v3807
      %v3872 = vmul.f32 %v3808, %v3808
      %v3873 = vmul.f32 %v3809, %v3809
      %v3874 = vmul.f32 %v3810, %v3810
      %v3875 = vmul.f32 %v3811, %v3811
      %v3876 = vmul.f32 %v3812, %v3812
      %v3877 = vmul.f32 %v3813, %v3813
      %v3878 = vmul.f32 %v3814, %v3814
      %v3879 = vmul.f32 %v3815, %v3815
      %v3880 = vmul.f32 %v3816, %v3816
      %v3881 = vmul.f32 %v3817, %v3817
      %v3882 = vmul.f32 %v3818, %v3818
      %v3883 = vsub.f32 %v3819, %v3851
      %v3884 = vsub.f32 %v3820, %v3852
      %v3885 = vsub.f32 %v3821, %v3853
      %v3886 = vsub.f32 %v3822, %v3854
      %v3887 = vsub.f32 %v3823, %v3855
      %v3888 = vsub.f32 %v3824, %v3856
      %v3889 = vsub.f32 %v3825, %v3857
      %v3890 = vsub.f32 %v3826, %v3858
      %v3891 = vsub.f32 %v3827, %v3859
      %v3892 = vsub.f32 %v3828, %v3860
      %v3893 = vsub.f32 %v3829, %v3861
      %v3894 = vsub.f32 %v3830, %v3862
      %v3895 = vsub.f32 %v3831, %v3863
      %v3896 = vsub.f32 %v3832, %v3864
      %v3897 = vsub.f32 %v3833, %v3865
      %v3898 = vsub.f32 %v3834, %v3866
      %v3899 = vsub.f32 %v3835, %v3867
      %v3900 = vsub.f32 %v3836, %v3868
      %v3901 = vsub.f32 %v3837, %v3869
      %v3902 = vsub.f32 %v3838, %v3870
      %v3903 = vsub.f32 %v3839, %v3871
      %v3904 = vsub.f32 %v3840, %v3872
      %v3905 = vsub.f32 %v3841, %v3873
      %v3906 = vsub.f32 %v3842, %v3874
      %v3907 = vsub.f32 %v3843, %v3875
      %v3908 = vsub.f32 %v3844, %v3876
      %v3909 = vsub.f32 %v3845, %v3877
      %v3910 = vsub.f32 %v3846, %v3878
      %v3911 = vsub.f32 %v3847, %v3879
      %v3912 = vsub.f32 %v3848, %v3880
      %v3913 = vsub.f32 %v3849, %v3881
      %v3914 = vsub.f32 %v3850, %v3882
      %v3915 = vadd.f32 %v3883, 1e-05
      %v3916 = vadd.f32 %v3884, 1e-05
      %v3917 = vadd.f32 %v3885, 1e-05
      %v3918 = vadd.f32 %v3886, 1e-05
      %v3919 = vadd.f32 %v3887, 1e-05
      %v3920 = vadd.f32 %v3888, 1e-05
      %v3921 = vadd.f32 %v3889, 1e-05
      %v3922 = vadd.f32 %v3890, 1e-05
      %v3923 = vadd.f32 %v3891, 1e-05
      %v3924 = vadd.f32 %v3892, 1e-05
      %v3925 = vadd.f32 %v3893, 1e-05
      %v3926 = vadd.f32 %v3894, 1e-05
      %v3927 = vadd.f32 %v3895, 1e-05
      %v3928 = vadd.f32 %v3896, 1e-05
      %v3929 = vadd.f32 %v3897, 1e-05
      %v3930 = vadd.f32 %v3898, 1e-05
      %v3931 = vadd.f32 %v3899, 1e-05
      %v3932 = vadd.f32 %v3900, 1e-05
      %v3933 = vadd.f32 %v3901, 1e-05
      %v3934 = vadd.f32 %v3902, 1e-05
      %v3935 = vadd.f32 %v3903, 1e-05
      %v3936 = vadd.f32 %v3904, 1e-05
      %v3937 = vadd.f32 %v3905, 1e-05
      %v3938 = vadd.f32 %v3906, 1e-05
      %v3939 = vadd.f32 %v3907, 1e-05
      %v3940 = vadd.f32 %v3908, 1e-05
      %v3941 = vadd.f32 %v3909, 1e-05
      %v3942 = vadd.f32 %v3910, 1e-05
      %v3943 = vadd.f32 %v3911, 1e-05
      %v3944 = vadd.f32 %v3912, 1e-05
      %v3945 = vadd.f32 %v3913, 1e-05
      %v3946 = vadd.f32 %v3914, 1e-05
      %v3947 = vrsqrt.pop %v3915
      %v3948 = vrsqrt.pop %v3916
      %v3949 = vrsqrt.pop %v3917
      %v3950 = vrsqrt.pop %v3918
      %v3951 = vrsqrt.pop %v3919
      %v3952 = vrsqrt.pop %v3920
      %v3953 = vrsqrt.pop %v3921
      %v3954 = vrsqrt.pop %v3922
      %v3955 = vrsqrt.pop %v3923
      %v3956 = vrsqrt.pop %v3924
      %v3957 = vrsqrt.pop %v3925
      %v3958 = vrsqrt.pop %v3926
      %v3959 = vrsqrt.pop %v3927
      %v3960 = vrsqrt.pop %v3928
      %v3961 = vrsqrt.pop %v3929
      %v3962 = vrsqrt.pop %v3930
      %v3963 = vrsqrt.pop %v3931
      %v3964 = vrsqrt.pop %v3932
      %v3965 = vrsqrt.pop %v3933
      %v3966 = vrsqrt.pop %v3934
      %v3967 = vrsqrt.pop %v3935
      %v3968 = vrsqrt.pop %v3936
      %v3969 = vrsqrt.pop %v3937
      %v3970 = vrsqrt.pop %v3938
      %v3971 = vrsqrt.pop %v3939
      %v3972 = vrsqrt.pop %v3940
      %v3973 = vrsqrt.pop %v3941
      %v3974 = vrsqrt.pop %v3942
      %v3975 = vrsqrt.pop %v3943
      %v3976 = vrsqrt.pop %v3944
      %v3977 = vrsqrt.pop %v3945
      %v3978 = vrsqrt.pop %v3946
      %v3979 = vsub.f32 %v3465, %v3787
      %v3980 = vsub.f32 %v3466, %v3787
      %v3981 = vsub.f32 %v3467, %v3788
      %v3982 = vsub.f32 %v3468, %v3788
      %v3983 = vsub.f32 %v3469, %v3789
      %v3984 = vsub.f32 %v3470, %v3789
      %v3985 = vsub.f32 %v3471, %v3790
      %v3986 = vsub.f32 %v3472, %v3790
      %v3987 = vsub.f32 %v3473, %v3791
      %v3988 = vsub.f32 %v3474, %v3791
      %v3989 = vsub.f32 %v3475, %v3792
      %v3990 = vsub.f32 %v3476, %v3792
      %v3991 = vsub.f32 %v3477, %v3793
      %v3992 = vsub.f32 %v3478, %v3793
      %v3993 = vsub.f32 %v3479, %v3794
      %v3994 = vsub.f32 %v3480, %v3794
      %v3995 = vsub.f32 %v3481, %v3795
      %v3996 = vsub.f32 %v3482, %v3795
      %v3997 = vsub.f32 %v3483, %v3796
      %v3998 = vsub.f32 %v3484, %v3796
      %v3999 = vsub.f32 %v3485, %v3797
      %v4000 = vsub.f32 %v3486, %v3797
      %v4001 = vsub.f32 %v3487, %v3798
      %v4002 = vsub.f32 %v3488, %v3798
      %v4003 = vsub.f32 %v3489, %v3799
      %v4004 = vsub.f32 %v3490, %v3799
      %v4005 = vsub.f32 %v3491, %v3800
      %v4006 = vsub.f32 %v3492, %v3800
      %v4007 = vsub.f32 %v3493, %v3801
      %v4008 = vsub.f32 %v3494, %v3801
      %v4009 = vsub.f32 %v3495, %v3802
      %v4010 = vsub.f32 %v3496, %v3802
      %v4011 = vsub.f32 %v3497, %v3803
      %v4012 = vsub.f32 %v3498, %v3803
      %v4013 = vsub.f32 %v3499, %v3804
      %v4014 = vsub.f32 %v3500, %v3804
      %v4015 = vsub.f32 %v3501, %v3805
      %v4016 = vsub.f32 %v3502, %v3805
      %v4017 = vsub.f32 %v3503, %v3806
      %v4018 = vsub.f32 %v3504, %v3806
      %v4019 = vsub.f32 %v3505, %v3807
      %v4020 = vsub.f32 %v3506, %v3807
      %v4021 = vsub.f32 %v3507, %v3808
      %v4022 = vsub.f32 %v3508, %v3808
      %v4023 = vsub.f32 %v3509, %v3809
      %v4024 = vsub.f32 %v3510, %v3809
      %v4025 = vsub.f32 %v3511, %v3810
      %v4026 = vsub.f32 %v3512, %v3810
      %v4027 = vsub.f32 %v3513, %v3811
      %v4028 = vsub.f32 %v3514, %v3811
      %v4029 = vsub.f32 %v3515, %v3812
      %v4030 = vsub.f32 %v3516, %v3812
      %v4031 = vsub.f32 %v3517, %v3813
      %v4032 = vsub.f32 %v3518, %v3813
      %v4033 = vsub.f32 %v3519, %v3814
      %v4034 = vsub.f32 %v3520, %v3814
      %v4035 = vsub.f32 %v3521, %v3815
      %v4036 = vsub.f32 %v3522, %v3815
      %v4037 = vsub.f32 %v3523, %v3816
      %v4038 = vsub.f32 %v3524, %v3816
      %v4039 = vsub.f32 %v3525, %v3817
      %v4040 = vsub.f32 %v3526, %v3817
      %v4041 = vsub.f32 %v3527, %v3818
      %v4042 = vsub.f32 %v3528, %v3818
      %v4044 = vlaneseq
      %v4045 = vshrl.u32 %v4044, 7
      %v4046 = vsub.s32 0, %v4045
      %v4047 = vrot.slane %v3529, %v4046
      %v4048 = vlaneseq
      %v4049 = vshrl.u32 %v4048, 7
      %v4050 = vsub.s32 1, %v4049
      %v4051 = vrot.slane %v3529, %v4050
      %v4054 = vmul.f32 %v3947, %v4047
      %v4055 = vmul.f32 %v3947, %v4051
      %v4056 = vmul.f32 %v3948, %v4047
      %v4057 = vmul.f32 %v3948, %v4051
      %v4058 = vmul.f32 %v3949, %v4047
      %v4059 = vmul.f32 %v3949, %v4051
      %v4060 = vmul.f32 %v3950, %v4047
      %v4061 = vmul.f32 %v3950, %v4051
      %v4062 = vmul.f32 %v3951, %v4047
      %v4063 = vmul.f32 %v3951, %v4051
      %v4064 = vmul.f32 %v3952, %v4047
      %v4065 = vmul.f32 %v3952, %v4051
      %v4066 = vmul.f32 %v3953, %v4047
      %v4067 = vmul.f32 %v3953, %v4051
      %v4068 = vmul.f32 %v3954, %v4047
      %v4069 = vmul.f32 %v3954, %v4051
      %v4070 = vmul.f32 %v3955, %v4047
      %v4071 = vmul.f32 %v3955, %v4051
      %v4072 = vmul.f32 %v3956, %v4047
      %v4073 = vmul.f32 %v3956, %v4051
      %v4074 = vmul.f32 %v3957, %v4047
      %v4075 = vmul.f32 %v3957, %v4051
      %v4076 = vmul.f32 %v3958, %v4047
      %v4077 = vmul.f32 %v3958, %v4051
      %v4078 = vmul.f32 %v3959, %v4047
      %v4079 = vmul.f32 %v3959, %v4051
      %v4080 = vmul.f32 %v3960, %v4047
      %v4081 = vmul.f32 %v3960, %v4051
      %v4082 = vmul.f32 %v3961, %v4047
      %v4083 = vmul.f32 %v3961, %v4051
      %v4084 = vmul.f32 %v3962, %v4047
      %v4085 = vmul.f32 %v3962, %v4051
      %v4086 = vmul.f32 %v3963, %v4047
      %v4087 = vmul.f32 %v3963, %v4051
      %v4088 = vmul.f32 %v3964, %v4047
      %v4089 = vmul.f32 %v3964, %v4051
      %v4090 = vmul.f32 %v3965, %v4047
      %v4091 = vmul.f32 %v3965, %v4051
      %v4092 = vmul.f32 %v3966, %v4047
      %v4093 = vmul.f32 %v3966, %v4051
      %v4094 = vmul.f32 %v3967, %v4047
      %v4095 = vmul.f32 %v3967, %v4051
      %v4096 = vmul.f32 %v3968, %v4047
      %v4097 = vmul.f32 %v3968, %v4051
      %v4098 = vmul.f32 %v3969, %v4047
      %v4099 = vmul.f32 %v3969, %v4051
      %v4100 = vmul.f32 %v3970, %v4047
      %v4101 = vmul.f32 %v3970, %v4051
      %v4102 = vmul.f32 %v3971, %v4047
      %v4103 = vmul.f32 %v3971, %v4051
      %v4104 = vmul.f32 %v3972, %v4047
      %v4105 = vmul.f32 %v3972, %v4051
      %v4106 = vmul.f32 %v3973, %v4047
      %v4107 = vmul.f32 %v3973, %v4051
      %v4108 = vmul.f32 %v3974, %v4047
      %v4109 = vmul.f32 %v3974, %v4051
      %v4110 = vmul.f32 %v3975, %v4047
      %v4111 = vmul.f32 %v3975, %v4051
      %v4112 = vmul.f32 %v3976, %v4047
      %v4113 = vmul.f32 %v3976, %v4051
      %v4114 = vmul.f32 %v3977, %v4047
      %v4115 = vmul.f32 %v3977, %v4051
      %v4116 = vmul.f32 %v3978, %v4047
      %v4117 = vmul.f32 %v3978, %v4051
      %v4118 = vmul.f32 %v3979, %v4054
      %v4119 = vmul.f32 %v3980, %v4055
      %v4120 = vmul.f32 %v3981, %v4056
      %v4121 = vmul.f32 %v3982, %v4057
      %v4122 = vmul.f32 %v3983, %v4058
      %v4123 = vmul.f32 %v3984, %v4059
      %v4124 = vmul.f32 %v3985, %v4060
      %v4125 = vmul.f32 %v3986, %v4061
      %v4126 = vmul.f32 %v3987, %v4062
      %v4127 = vmul.f32 %v3988, %v4063
      %v4128 = vmul.f32 %v3989, %v4064
      %v4129 = vmul.f32 %v3990, %v4065
      %v4130 = vmul.f32 %v3991, %v4066
      %v4131 = vmul.f32 %v3992, %v4067
      %v4132 = vmul.f32 %v3993, %v4068
      %v4133 = vmul.f32 %v3994, %v4069
      %v4134 = vmul.f32 %v3995, %v4070
      %v4135 = vmul.f32 %v3996, %v4071
      %v4136 = vmul.f32 %v3997, %v4072
      %v4137 = vmul.f32 %v3998, %v4073
      %v4138 = vmul.f32 %v3999, %v4074
      %v4139 = vmul.f32 %v4000, %v4075
      %v4140 = vmul.f32 %v4001, %v4076
      %v4141 = vmul.f32 %v4002, %v4077
      %v4142 = vmul.f32 %v4003, %v4078
      %v4143 = vmul.f32 %v4004, %v4079
      %v4144 = vmul.f32 %v4005, %v4080
      %v4145 = vmul.f32 %v4006, %v4081
      %v4146 = vmul.f32 %v4007, %v4082
      %v4147 = vmul.f32 %v4008, %v4083
      %v4148 = vmul.f32 %v4009, %v4084
      %v4149 = vmul.f32 %v4010, %v4085
      %v4150 = vmul.f32 %v4011, %v4086
      %v4151 = vmul.f32 %v4012, %v4087
      %v4152 = vmul.f32 %v4013, %v4088
      %v4153 = vmul.f32 %v4014, %v4089
      %v4154 = vmul.f32 %v4015, %v4090
      %v4155 = vmul.f32 %v4016, %v4091
      %v4156 = vmul.f32 %v4017, %v4092
      %v4157 = vmul.f32 %v4018, %v4093
      %v4158 = vmul.f32 %v4019, %v4094
      %v4159 = vmul.f32 %v4020, %v4095
      %v4160 = vmul.f32 %v4021, %v4096
      %v4161 = vmul.f32 %v4022, %v4097
      %v4162 = vmul.f32 %v4023, %v4098
      %v4163 = vmul.f32 %v4024, %v4099
      %v4164 = vmul.f32 %v4025, %v4100
      %v4165 = vmul.f32 %v4026, %v4101
      %v4166 = vmul.f32 %v4027, %v4102
      %v4167 = vmul.f32 %v4028, %v4103
      %v4168 = vmul.f32 %v4029, %v4104
      %v4169 = vmul.f32 %v4030, %v4105
      %v4170 = vmul.f32 %v4031, %v4106
      %v4171 = vmul.f32 %v4032, %v4107
      %v4172 = vmul.f32 %v4033, %v4108
      %v4173 = vmul.f32 %v4034, %v4109
      %v4174 = vmul.f32 %v4035, %v4110
      %v4175 = vmul.f32 %v4036, %v4111
      %v4176 = vmul.f32 %v4037, %v4112
      %v4177 = vmul.f32 %v4038, %v4113
      %v4178 = vmul.f32 %v4039, %v4114
      %v4179 = vmul.f32 %v4040, %v4115
      %v4180 = vmul.f32 %v4041, %v4116
      %v4181 = vmul.f32 %v4042, %v4117
      %v4183 = vlaneseq
      %v4184 = vshrl.u32 %v4183, 7
      %v4185 = vsub.s32 0, %v4184
      %v4186 = vrot.slane %v3530, %v4185
      %v4187 = vlaneseq
      %v4188 = vshrl.u32 %v4187, 7
      %v4189 = vsub.s32 1, %v4188
      %v4190 = vrot.slane %v3530, %v4189
      %v4193 = vadd.f32 %v4118, %v4186
      %v4194 = vadd.f32 %v4119, %v4190
      %v4195 = vadd.f32 %v4120, %v4186
      %v4196 = vadd.f32 %v4121, %v4190
      %v4197 = vadd.f32 %v4122, %v4186
      %v4198 = vadd.f32 %v4123, %v4190
      %v4199 = vadd.f32 %v4124, %v4186
      %v4200 = vadd.f32 %v4125, %v4190
      %v4201 = vadd.f32 %v4126, %v4186
      %v4202 = vadd.f32 %v4127, %v4190
      %v4203 = vadd.f32 %v4128, %v4186
      %v4204 = vadd.f32 %v4129, %v4190
      %v4205 = vadd.f32 %v4130, %v4186
      %v4206 = vadd.f32 %v4131, %v4190
      %v4207 = vadd.f32 %v4132, %v4186
      %v4208 = vadd.f32 %v4133, %v4190
      %v4209 = vadd.f32 %v4134, %v4186
      %v4210 = vadd.f32 %v4135, %v4190
      %v4211 = vadd.f32 %v4136, %v4186
      %v4212 = vadd.f32 %v4137, %v4190
      %v4213 = vadd.f32 %v4138, %v4186
      %v4214 = vadd.f32 %v4139, %v4190
      %v4215 = vadd.f32 %v4140, %v4186
      %v4216 = vadd.f32 %v4141, %v4190
      %v4217 = vadd.f32 %v4142, %v4186
      %v4218 = vadd.f32 %v4143, %v4190
      %v4219 = vadd.f32 %v4144, %v4186
      %v4220 = vadd.f32 %v4145, %v4190
      %v4221 = vadd.f32 %v4146, %v4186
      %v4222 = vadd.f32 %v4147, %v4190
      %v4223 = vadd.f32 %v4148, %v4186
      %v4224 = vadd.f32 %v4149, %v4190
      %v4225 = vadd.f32 %v4150, %v4186
      %v4226 = vadd.f32 %v4151, %v4190
      %v4227 = vadd.f32 %v4152, %v4186
      %v4228 = vadd.f32 %v4153, %v4190
      %v4229 = vadd.f32 %v4154, %v4186
      %v4230 = vadd.f32 %v4155, %v4190
      %v4231 = vadd.f32 %v4156, %v4186
      %v4232 = vadd.f32 %v4157, %v4190
      %v4233 = vadd.f32 %v4158, %v4186
      %v4234 = vadd.f32 %v4159, %v4190
      %v4235 = vadd.f32 %v4160, %v4186
      %v4236 = vadd.f32 %v4161, %v4190
      %v4237 = vadd.f32 %v4162, %v4186
      %v4238 = vadd.f32 %v4163, %v4190
      %v4239 = vadd.f32 %v4164, %v4186
      %v4240 = vadd.f32 %v4165, %v4190
      %v4241 = vadd.f32 %v4166, %v4186
      %v4242 = vadd.f32 %v4167, %v4190
      %v4243 = vadd.f32 %v4168, %v4186
      %v4244 = vadd.f32 %v4169, %v4190
      %v4245 = vadd.f32 %v4170, %v4186
      %v4246 = vadd.f32 %v4171, %v4190
      %v4247 = vadd.f32 %v4172, %v4186
      %v4248 = vadd.f32 %v4173, %v4190
      %v4249 = vadd.f32 %v4174, %v4186
      %v4250 = vadd.f32 %v4175, %v4190
      %v4251 = vadd.f32 %v4176, %v4186
      %v4252 = vadd.f32 %v4177, %v4190
      %v4253 = vadd.f32 %v4178, %v4186
      %v4254 = vadd.f32 %v4179, %v4190
      %v4255 = vadd.f32 %v4180, %v4186
      %v4256 = vadd.f32 %v4181, %v4190
      %v4257 = vpack.c.bf16 %v4195, %v4193
      %v4258 = vpack.c.bf16 %v4196, %v4194
      %v4259 = vpack.c.bf16 %v4199, %v4197
      %v4260 = vpack.c.bf16 %v4200, %v4198
      %v4261 = vpack.c.bf16 %v4203, %v4201
      %v4262 = vpack.c.bf16 %v4204, %v4202
      %v4263 = vpack.c.bf16 %v4207, %v4205
      %v4264 = vpack.c.bf16 %v4208, %v4206
      %v4265 = vpack.c.bf16 %v4211, %v4209
      %v4266 = vpack.c.bf16 %v4212, %v4210
      %v4267 = vpack.c.bf16 %v4215, %v4213
      %v4268 = vpack.c.bf16 %v4216, %v4214
      %v4269 = vpack.c.bf16 %v4219, %v4217
      %v4270 = vpack.c.bf16 %v4220, %v4218
      %v4271 = vpack.c.bf16 %v4223, %v4221
      %v4272 = vpack.c.bf16 %v4224, %v4222
      %v4273 = vpack.c.bf16 %v4227, %v4225
      %v4274 = vpack.c.bf16 %v4228, %v4226
      %v4275 = vpack.c.bf16 %v4231, %v4229
      %v4276 = vpack.c.bf16 %v4232, %v4230
      %v4277 = vpack.c.bf16 %v4235, %v4233
      %v4278 = vpack.c.bf16 %v4236, %v4234
      %v4279 = vpack.c.bf16 %v4239, %v4237
      %v4280 = vpack.c.bf16 %v4240, %v4238
      %v4281 = vpack.c.bf16 %v4243, %v4241
      %v4282 = vpack.c.bf16 %v4244, %v4242
      %v4283 = vpack.c.bf16 %v4247, %v4245
      %v4284 = vpack.c.bf16 %v4248, %v4246
      %v4285 = vpack.c.bf16 %v4251, %v4249
      %v4286 = vpack.c.bf16 %v4252, %v4250
      %v4287 = vpack.c.bf16 %v4255, %v4253
      %v4288 = vpack.c.bf16 %v4256, %v4254
      %v4289 = vld [vmem:[%s15] sm:$0xf]
      %v4290 = vld [vmem:[%s15 + $0x4] sm:$0xf]
      %v4291 = vld [vmem:[%s15 + $0x8] sm:$0xf]
      %v4292 = vld [vmem:[%s15 + $0xc] sm:$0xf]
      %v4293 = vld [vmem:[%s15 + $0x10] sm:$0xf]
      %v4294 = vld [vmem:[%s15 + $0x14] sm:$0xf]
      %v4295 = vld [vmem:[%s15 + $0x18] sm:$0xf]
      %v4296 = vld [vmem:[%s15 + $0x1c] sm:$0xf]
      %v4297 = vld [vmem:[%s15 + $0x20] sm:$0xf]
      %v4298 = vld [vmem:[%s15 + $0x24] sm:$0xf]
      %v4299 = vld [vmem:[%s15 + $0x28] sm:$0xf]
      %v4300 = vld [vmem:[%s15 + $0x2c] sm:$0xf]
      %v4301 = vld [vmem:[%s15 + $0x30] sm:$0xf]
      %v4302 = vld [vmem:[%s15 + $0x34] sm:$0xf]
      %v4303 = vld [vmem:[%s15 + $0x38] sm:$0xf]
      %v4304 = vld [vmem:[%s15 + $0x3c] sm:$0xf]
      %v4305 = vld [vmem:[%s15 + $0x40] sm:$0xf]
      %v4306 = vld [vmem:[%s15 + $0x44] sm:$0xf]
      %v4307 = vld [vmem:[%s15 + $0x48] sm:$0xf]
      %v4308 = vld [vmem:[%s15 + $0x4c] sm:$0xf]
      %v4309 = vld [vmem:[%s15 + $0x50] sm:$0xf]
      %v4310 = vld [vmem:[%s15 + $0x54] sm:$0xf]
      %v4311 = vld [vmem:[%s15 + $0x58] sm:$0xf]
      %v4312 = vld [vmem:[%s15 + $0x5c] sm:$0xf]
      %v4313 = vld [vmem:[%s15 + $0x60] sm:$0xf]
      %v4314 = vld [vmem:[%s15 + $0x64] sm:$0xf]
      %v4315 = vld [vmem:[%s15 + $0x68] sm:$0xf]
      %v4316 = vld [vmem:[%s15 + $0x6c] sm:$0xf]
      %v4317 = vld [vmem:[%s15 + $0x70] sm:$0xf]
      %v4318 = vld [vmem:[%s15 + $0x74] sm:$0xf]
      %v4319 = vld [vmem:[%s15 + $0x78] sm:$0xf]
      %v4320 = vld [vmem:[%s15 + $0x7c] sm:$0xf]
      %v4321 = vld [vmem:[%s16] sm:$0x1]
      %v4323 = vlaneseq
      %v4324 = vshrl.u32 %v4323, 7
      %v4325 = vsub.s32 0, %v4324
      %v4326 = vrot.slane %v4321, %v4325
      %v4360 = vunpack.c.l.b16 %v4289
      %v4361 = vunpack.c.l.b16 %v4290
      %v4362 = vunpack.c.l.b16 %v4291
      %v4363 = vunpack.c.l.b16 %v4292
      %v4364 = vunpack.c.l.b16 %v4293
      %v4365 = vunpack.c.l.b16 %v4294
      %v4366 = vunpack.c.l.b16 %v4295
      %v4367 = vunpack.c.l.b16 %v4296
      %v4368 = vunpack.c.l.b16 %v4297
      %v4369 = vunpack.c.l.b16 %v4298
      %v4370 = vunpack.c.l.b16 %v4299
      %v4371 = vunpack.c.l.b16 %v4300
      %v4372 = vunpack.c.l.b16 %v4301
      %v4373 = vunpack.c.l.b16 %v4302
      %v4374 = vunpack.c.l.b16 %v4303
      %v4375 = vunpack.c.l.b16 %v4304
      %v4376 = vunpack.c.l.b16 %v4305
      %v4377 = vunpack.c.l.b16 %v4306
      %v4378 = vunpack.c.l.b16 %v4307
      %v4379 = vunpack.c.l.b16 %v4308
      %v4380 = vunpack.c.l.b16 %v4309
      %v4381 = vunpack.c.l.b16 %v4310
      %v4382 = vunpack.c.l.b16 %v4311
      %v4383 = vunpack.c.l.b16 %v4312
      %v4384 = vunpack.c.l.b16 %v4313
      %v4385 = vunpack.c.l.b16 %v4314
      %v4386 = vunpack.c.l.b16 %v4315
      %v4387 = vunpack.c.l.b16 %v4316
      %v4388 = vunpack.c.l.b16 %v4317
      %v4389 = vunpack.c.l.b16 %v4318
      %v4390 = vunpack.c.l.b16 %v4319
      %v4391 = vunpack.c.l.b16 %v4320
      %v4392 = vpack.c.b16 %v4361, %v4360
      %v4393 = vpack.c.b16 %v4363, %v4362
      %v4394 = vpack.c.b16 %v4365, %v4364
      %v4395 = vpack.c.b16 %v4367, %v4366
      %v4396 = vpack.c.b16 %v4369, %v4368
      %v4397 = vpack.c.b16 %v4371, %v4370
      %v4398 = vpack.c.b16 %v4373, %v4372
      %v4399 = vpack.c.b16 %v4375, %v4374
      %v4400 = vpack.c.b16 %v4377, %v4376
      %v4401 = vpack.c.b16 %v4379, %v4378
      %v4402 = vpack.c.b16 %v4381, %v4380
      %v4403 = vpack.c.b16 %v4383, %v4382
      %v4404 = vpack.c.b16 %v4385, %v4384
      %v4405 = vpack.c.b16 %v4387, %v4386
      %v4406 = vpack.c.b16 %v4389, %v4388
      %v4407 = vpack.c.b16 %v4391, %v4390
      %4424 = vmatprep.subr.bf16.mxu0 0
      %4425 = vmatpush1.bf16.msra.mxu0 %v4399
      %4426 = vmatprep.subr.bf16.mxu0 0
      %4427 = vmatpush1.bf16.msra.mxu0 %v4398
      %4428 = vmatprep.subr.bf16.mxu0 0
      %4429 = vmatpush1.bf16.msra.mxu0 %v4397
      %4430 = vmatprep.subr.bf16.mxu0 0
      %4431 = vmatpush1.bf16.msra.mxu0 %v4396
      %4432 = vmatprep.subr.bf16.mxu0 0
      %4433 = vmatpush1.bf16.msra.mxu0 %v4395
      %4434 = vmatprep.subr.bf16.mxu0 0
      %4435 = vmatpush1.bf16.msra.mxu0 %v4394
      %4436 = vmatprep.subr.bf16.mxu0 0
      %4437 = vmatpush1.bf16.msra.mxu0 %v4393
      %4438 = vmatprep.subr.bf16.mxu0 0
      %4439 = vmatpush1.bf16.msra.mxu0 %v4392
      %4440 = vmatprep.subr.bf16.mxu0 0
      %4441 = vmatpush2.bf16.msra.mxu0 %v4407
      %4442 = vmatprep.subr.bf16.mxu0 0
      %4443 = vmatpush2.bf16.msra.mxu0 %v4406
      %4444 = vmatprep.subr.bf16.mxu0 0
      %4445 = vmatpush2.bf16.msra.mxu0 %v4405
      %4446 = vmatprep.subr.bf16.mxu0 0
      %4447 = vmatpush2.bf16.msra.mxu0 %v4404
      %4448 = vmatprep.subr.bf16.mxu0 0
      %4449 = vmatpush2.bf16.msra.mxu0 %v4403
      %4450 = vmatprep.subr.bf16.mxu0 0
      %4451 = vmatpush2.bf16.msra.mxu0 %v4402
      %4452 = vmatprep.subr.bf16.mxu0 0
      %4453 = vmatpush2.bf16.msra.mxu0 %v4401
      %4454 = vmatprep.subr.bf16.mxu0 0
      %4455 = vmatpush2.bf16.msra.mxu0 %v4400
      %4456 = vmatprep.mubr.bf16.mxu0 %v4258
      %4457 = vmatmul.mubr.bf16.gmra.mxu0 %v4257
      %v4458 = vpop.f32.mrf.mxu0
      %v4459 = vadd.f32 %v4326, %v4458
      %v4460 = vpop.f32.mrf.mxu0
      %v4461 = vpop.f32.mrf.mxu0
      %v4462 = vadd.f32 %v4326, %v4461
      %v4463 = vpop.f32.mrf.mxu0
      %4464 = vmatprep.mubr.bf16.mxu0 %v4260
      %4465 = vmatmul.mubr.bf16.gmra.mxu0 %v4259
      %v4466 = vpop.f32.mrf.mxu0
      %v4467 = vadd.f32 %v4326, %v4466
      %v4468 = vpop.f32.mrf.mxu0
      %v4469 = vpop.f32.mrf.mxu0
      %v4470 = vadd.f32 %v4326, %v4469
      %v4471 = vpop.f32.mrf.mxu0
      %4472 = vmatprep.mubr.bf16.mxu0 %v4262
      %4473 = vmatmul.mubr.bf16.gmra.mxu0 %v4261
      %v4474 = vpop.f32.mrf.mxu0
      %v4475 = vadd.f32 %v4326, %v4474
      %v4476 = vpop.f32.mrf.mxu0
      %v4477 = vpop.f32.mrf.mxu0
      %v4478 = vadd.f32 %v4326, %v4477
      %v4479 = vpop.f32.mrf.mxu0
      %4480 = vmatprep.mubr.bf16.mxu0 %v4264
      %4481 = vmatmul.mubr.bf16.gmra.mxu0 %v4263
      %v4482 = vpop.f32.mrf.mxu0
      %v4483 = vadd.f32 %v4326, %v4482
      %v4484 = vpop.f32.mrf.mxu0
      %v4485 = vpop.f32.mrf.mxu0
      %v4486 = vadd.f32 %v4326, %v4485
      %v4487 = vpop.f32.mrf.mxu0
      %4488 = vmatprep.mubr.bf16.mxu0 %v4266
      %4489 = vmatmul.mubr.bf16.gmra.mxu0 %v4265
      %v4490 = vpop.f32.mrf.mxu0
      %v4491 = vadd.f32 %v4326, %v4490
      %v4492 = vpop.f32.mrf.mxu0
      %v4493 = vpop.f32.mrf.mxu0
      %v4494 = vadd.f32 %v4326, %v4493
      %v4495 = vpop.f32.mrf.mxu0
      %4496 = vmatprep.mubr.bf16.mxu0 %v4268
      %4497 = vmatmul.mubr.bf16.gmra.mxu0 %v4267
      %v4498 = vpop.f32.mrf.mxu0
      %v4499 = vadd.f32 %v4326, %v4498
      %v4500 = vpop.f32.mrf.mxu0
      %v4501 = vpop.f32.mrf.mxu0
      %v4502 = vadd.f32 %v4326, %v4501
      %v4503 = vpop.f32.mrf.mxu0
      %4504 = vmatprep.mubr.bf16.mxu0 %v4270
      %4505 = vmatmul.mubr.bf16.gmra.mxu0 %v4269
      %v4506 = vpop.f32.mrf.mxu0
      %v4507 = vadd.f32 %v4326, %v4506
      %v4508 = vpop.f32.mrf.mxu0
      %v4509 = vpop.f32.mrf.mxu0
      %v4510 = vadd.f32 %v4326, %v4509
      %v4511 = vpop.f32.mrf.mxu0
      %4512 = vmatprep.mubr.bf16.mxu0 %v4272
      %4513 = vmatmul.mubr.bf16.gmra.mxu0 %v4271
      %v4514 = vpop.f32.mrf.mxu0
      %v4515 = vadd.f32 %v4326, %v4514
      %v4516 = vpop.f32.mrf.mxu0
      %v4517 = vpop.f32.mrf.mxu0
      %v4518 = vadd.f32 %v4326, %v4517
      %v4519 = vpop.f32.mrf.mxu0
      %4520 = vmatprep.mubr.bf16.mxu0 %v4274
      %4521 = vmatmul.mubr.bf16.gmra.mxu0 %v4273
      %v4522 = vpop.f32.mrf.mxu0
      %v4523 = vadd.f32 %v4326, %v4522
      %v4524 = vpop.f32.mrf.mxu0
      %v4525 = vpop.f32.mrf.mxu0
      %v4526 = vadd.f32 %v4326, %v4525
      %v4527 = vpop.f32.mrf.mxu0
      %4528 = vmatprep.mubr.bf16.mxu0 %v4276
      %4529 = vmatmul.mubr.bf16.gmra.mxu0 %v4275
      %v4530 = vpop.f32.mrf.mxu0
      %v4531 = vadd.f32 %v4326, %v4530
      %v4532 = vpop.f32.mrf.mxu0
      %v4533 = vpop.f32.mrf.mxu0
      %v4534 = vadd.f32 %v4326, %v4533
      %v4535 = vpop.f32.mrf.mxu0
      %4536 = vmatprep.mubr.bf16.mxu0 %v4278
      %4537 = vmatmul.mubr.bf16.gmra.mxu0 %v4277
      %v4538 = vpop.f32.mrf.mxu0
      %v4539 = vadd.f32 %v4326, %v4538
      %v4540 = vpop.f32.mrf.mxu0
      %v4541 = vpop.f32.mrf.mxu0
      %v4542 = vadd.f32 %v4326, %v4541
      %v4543 = vpop.f32.mrf.mxu0
      %4544 = vmatprep.mubr.bf16.mxu0 %v4280
      %4545 = vmatmul.mubr.bf16.gmra.mxu0 %v4279
      %v4546 = vpop.f32.mrf.mxu0
      %v4547 = vadd.f32 %v4326, %v4546
      %v4548 = vpop.f32.mrf.mxu0
      %v4549 = vpop.f32.mrf.mxu0
      %v4550 = vadd.f32 %v4326, %v4549
      %v4551 = vpop.f32.mrf.mxu0
      %4552 = vmatprep.mubr.bf16.mxu0 %v4282
      %4553 = vmatmul.mubr.bf16.gmra.mxu0 %v4281
      %v4554 = vpop.f32.mrf.mxu0
      %v4555 = vadd.f32 %v4326, %v4554
      %v4556 = vpop.f32.mrf.mxu0
      %v4557 = vpop.f32.mrf.mxu0
      %v4558 = vadd.f32 %v4326, %v4557
      %v4559 = vpop.f32.mrf.mxu0
      %4560 = vmatprep.mubr.bf16.mxu0 %v4284
      %4561 = vmatmul.mubr.bf16.gmra.mxu0 %v4283
      %v4562 = vpop.f32.mrf.mxu0
      %v4563 = vadd.f32 %v4326, %v4562
      %v4564 = vpop.f32.mrf.mxu0
      %v4565 = vpop.f32.mrf.mxu0
      %v4566 = vadd.f32 %v4326, %v4565
      %v4567 = vpop.f32.mrf.mxu0
      %4568 = vmatprep.mubr.bf16.mxu0 %v4286
      %4569 = vmatmul.mubr.bf16.gmra.mxu0 %v4285
      %v4570 = vpop.f32.mrf.mxu0
      %v4571 = vadd.f32 %v4326, %v4570
      %v4572 = vpop.f32.mrf.mxu0
      %v4573 = vpop.f32.mrf.mxu0
      %v4574 = vadd.f32 %v4326, %v4573
      %v4575 = vpop.f32.mrf.mxu0
      %4576 = vmatprep.mubr.bf16.mxu0 %v4288
      %4577 = vmatmul.mubr.bf16.gmra.mxu0 %v4287
      %v4578 = vpop.f32.mrf.mxu0
      %v4579 = vadd.f32 %v4326, %v4578
      %v4580 = vpop.f32.mrf.mxu0
      %v4581 = vpop.f32.mrf.mxu0
      %v4582 = vadd.f32 %v4326, %v4581
      %v4583 = vpop.f32.mrf.mxu0
      %4584 = vdwg.mxu0
      %v4585 = vtanh.pop %v4459
      %v4586 = vtanh.pop %v4462
      %v4587 = vtanh.pop %v4467
      %v4588 = vtanh.pop %v4470
      %v4589 = vtanh.pop %v4475
      %v4590 = vtanh.pop %v4478
      %v4591 = vtanh.pop %v4483
      %v4592 = vtanh.pop %v4486
      %v4593 = vtanh.pop %v4491
      %v4594 = vtanh.pop %v4494
      %v4595 = vtanh.pop %v4499
      %v4596 = vtanh.pop %v4502
      %v4597 = vtanh.pop %v4507
      %v4598 = vtanh.pop %v4510
      %v4599 = vtanh.pop %v4515
      %v4600 = vtanh.pop %v4518
      %v4601 = vtanh.pop %v4523
      %v4602 = vtanh.pop %v4526
      %v4603 = vtanh.pop %v4531
      %v4604 = vtanh.pop %v4534
      %v4605 = vtanh.pop %v4539
      %v4606 = vtanh.pop %v4542
      %v4607 = vtanh.pop %v4547
      %v4608 = vtanh.pop %v4550
      %v4609 = vtanh.pop %v4555
      %v4610 = vtanh.pop %v4558
      %v4611 = vtanh.pop %v4563
      %v4612 = vtanh.pop %v4566
      %v4613 = vtanh.pop %v4571
      %v4614 = vtanh.pop %v4574
      %v4615 = vtanh.pop %v4579
      %v4616 = vtanh.pop %v4582
      %v4617 = vmul.f32 %v4585, 0.05
      %v4618 = vmul.f32 %v4586, 0.05
      %v4619 = vmul.f32 %v4587, 0.05
      %v4620 = vmul.f32 %v4588, 0.05
      %v4621 = vmul.f32 %v4589, 0.05
      %v4622 = vmul.f32 %v4590, 0.05
      %v4623 = vmul.f32 %v4591, 0.05
      %v4624 = vmul.f32 %v4592, 0.05
      %v4625 = vmul.f32 %v4593, 0.05
      %v4626 = vmul.f32 %v4594, 0.05
      %v4627 = vmul.f32 %v4595, 0.05
      %v4628 = vmul.f32 %v4596, 0.05
      %v4629 = vmul.f32 %v4597, 0.05
      %v4630 = vmul.f32 %v4598, 0.05
      %v4631 = vmul.f32 %v4599, 0.05
      %v4632 = vmul.f32 %v4600, 0.05
      %v4633 = vmul.f32 %v4601, 0.05
      %v4634 = vmul.f32 %v4602, 0.05
      %v4635 = vmul.f32 %v4603, 0.05
      %v4636 = vmul.f32 %v4604, 0.05
      %v4637 = vmul.f32 %v4605, 0.05
      %v4638 = vmul.f32 %v4606, 0.05
      %v4639 = vmul.f32 %v4607, 0.05
      %v4640 = vmul.f32 %v4608, 0.05
      %v4641 = vmul.f32 %v4609, 0.05
      %v4642 = vmul.f32 %v4610, 0.05
      %v4643 = vmul.f32 %v4611, 0.05
      %v4644 = vmul.f32 %v4612, 0.05
      %v4645 = vmul.f32 %v4613, 0.05
      %v4646 = vmul.f32 %v4614, 0.05
      %v4647 = vmul.f32 %v4615, 0.05
      %v4648 = vmul.f32 %v4616, 0.05
      %v4649 = vadd.f32 %v4617, %v607
      %v4650 = vadd.f32 %v4618, %v608
      %v4651 = vadd.f32 %v4619, %v609
      %v4652 = vadd.f32 %v4620, %v610
      %v4653 = vadd.f32 %v4621, %v611
      %v4654 = vadd.f32 %v4622, %v612
      %v4655 = vadd.f32 %v4623, %v613
      %v4656 = vadd.f32 %v4624, %v614
      %v4657 = vadd.f32 %v4625, %v615
      %v4658 = vadd.f32 %v4626, %v616
      %v4659 = vadd.f32 %v4627, %v617
      %v4660 = vadd.f32 %v4628, %v618
      %v4661 = vadd.f32 %v4629, %v619
      %v4662 = vadd.f32 %v4630, %v620
      %v4663 = vadd.f32 %v4631, %v621
      %v4664 = vadd.f32 %v4632, %v622
      %v4665 = vadd.f32 %v4633, %v623
      %v4666 = vadd.f32 %v4634, %v624
      %v4667 = vadd.f32 %v4635, %v625
      %v4668 = vadd.f32 %v4636, %v626
      %v4669 = vadd.f32 %v4637, %v627
      %v4670 = vadd.f32 %v4638, %v628
      %v4671 = vadd.f32 %v4639, %v629
      %v4672 = vadd.f32 %v4640, %v630
      %v4673 = vadd.f32 %v4641, %v631
      %v4674 = vadd.f32 %v4642, %v632
      %v4675 = vadd.f32 %v4643, %v633
      %v4676 = vadd.f32 %v4644, %v634
      %v4677 = vadd.f32 %v4645, %v635
      %v4678 = vadd.f32 %v4646, %v636
      %v4679 = vadd.f32 %v4647, %v637
      %v4680 = vadd.f32 %v4648, %v638
      %v4681 = vmax.f32 %v4649, -1.0
      %v4682 = vmax.f32 %v4650, -1.0
      %v4683 = vmax.f32 %v4651, -1.0
      %v4684 = vmax.f32 %v4652, -1.0
      %v4685 = vmax.f32 %v4653, -1.0
      %v4686 = vmax.f32 %v4654, -1.0
      %v4687 = vmax.f32 %v4655, -1.0
      %v4688 = vmax.f32 %v4656, -1.0
      %v4689 = vmax.f32 %v4657, -1.0
      %v4690 = vmax.f32 %v4658, -1.0
      %v4691 = vmax.f32 %v4659, -1.0
      %v4692 = vmax.f32 %v4660, -1.0
      %v4693 = vmax.f32 %v4661, -1.0
      %v4694 = vmax.f32 %v4662, -1.0
      %v4695 = vmax.f32 %v4663, -1.0
      %v4696 = vmax.f32 %v4664, -1.0
      %v4697 = vmax.f32 %v4665, -1.0
      %v4698 = vmax.f32 %v4666, -1.0
      %v4699 = vmax.f32 %v4667, -1.0
      %v4700 = vmax.f32 %v4668, -1.0
      %v4701 = vmax.f32 %v4669, -1.0
      %v4702 = vmax.f32 %v4670, -1.0
      %v4703 = vmax.f32 %v4671, -1.0
      %v4704 = vmax.f32 %v4672, -1.0
      %v4705 = vmax.f32 %v4673, -1.0
      %v4706 = vmax.f32 %v4674, -1.0
      %v4707 = vmax.f32 %v4675, -1.0
      %v4708 = vmax.f32 %v4676, -1.0
      %v4709 = vmax.f32 %v4677, -1.0
      %v4710 = vmax.f32 %v4678, -1.0
      %v4711 = vmax.f32 %v4679, -1.0
      %v4712 = vmax.f32 %v4680, -1.0
      %v4713 = vmin.f32 %v4681, 1.0
      %v4714 = vmin.f32 %v4682, 1.0
      %v4715 = vmin.f32 %v4683, 1.0
      %v4716 = vmin.f32 %v4684, 1.0
      %v4717 = vmin.f32 %v4685, 1.0
      %v4718 = vmin.f32 %v4686, 1.0
      %v4719 = vmin.f32 %v4687, 1.0
      %v4720 = vmin.f32 %v4688, 1.0
      %v4721 = vmin.f32 %v4689, 1.0
      %v4722 = vmin.f32 %v4690, 1.0
      %v4723 = vmin.f32 %v4691, 1.0
      %v4724 = vmin.f32 %v4692, 1.0
      %v4725 = vmin.f32 %v4693, 1.0
      %v4726 = vmin.f32 %v4694, 1.0
      %v4727 = vmin.f32 %v4695, 1.0
      %v4728 = vmin.f32 %v4696, 1.0
      %v4729 = vmin.f32 %v4697, 1.0
      %v4730 = vmin.f32 %v4698, 1.0
      %v4731 = vmin.f32 %v4699, 1.0
      %v4732 = vmin.f32 %v4700, 1.0
      %v4733 = vmin.f32 %v4701, 1.0
      %v4734 = vmin.f32 %v4702, 1.0
      %v4735 = vmin.f32 %v4703, 1.0
      %v4736 = vmin.f32 %v4704, 1.0
      %v4737 = vmin.f32 %v4705, 1.0
      %v4738 = vmin.f32 %v4706, 1.0
      %v4739 = vmin.f32 %v4707, 1.0
      %v4740 = vmin.f32 %v4708, 1.0
      %v4741 = vmin.f32 %v4709, 1.0
      %v4742 = vmin.f32 %v4710, 1.0
      %v4743 = vmin.f32 %v4711, 1.0
      %v4744 = vmin.f32 %v4712, 1.0
      %4745 = vst.msk [vmem:[%s572] sm:$0xff] %vm736, %v4713
      %4746 = vst.msk [vmem:[%s572 + $0x8] sm:$0xff] %vm736, %v4714
      %4747 = vst.msk [vmem:[%s572 + $0x10] sm:$0xff] %vm736, %v4715
      %4748 = vst.msk [vmem:[%s572 + $0x18] sm:$0xff] %vm736, %v4716
      %4749 = vst.msk [vmem:[%s572 + $0x20] sm:$0xff] %vm736, %v4717
      %4750 = vst.msk [vmem:[%s572 + $0x28] sm:$0xff] %vm736, %v4718
      %4751 = vst.msk [vmem:[%s572 + $0x30] sm:$0xff] %vm736, %v4719
      %4752 = vst.msk [vmem:[%s572 + $0x38] sm:$0xff] %vm736, %v4720
      %4753 = vst.msk [vmem:[%s572 + $0x40] sm:$0xff] %vm736, %v4721
      %4754 = vst.msk [vmem:[%s572 + $0x48] sm:$0xff] %vm736, %v4722
      %4755 = vst.msk [vmem:[%s572 + $0x50] sm:$0xff] %vm736, %v4723
      %4756 = vst.msk [vmem:[%s572 + $0x58] sm:$0xff] %vm736, %v4724
      %4757 = vst.msk [vmem:[%s572 + $0x60] sm:$0xff] %vm736, %v4725
      %4758 = vst.msk [vmem:[%s572 + $0x68] sm:$0xff] %vm736, %v4726
      %4759 = vst.msk [vmem:[%s572 + $0x70] sm:$0xff] %vm736, %v4727
      %4760 = vst.msk [vmem:[%s572 + $0x78] sm:$0xff] %vm736, %v4728
      %4761 = vst.msk [vmem:[%s572 + $0x80] sm:$0xff] %vm736, %v4729
      %4762 = vst.msk [vmem:[%s572 + $0x88] sm:$0xff] %vm736, %v4730
      %4763 = vst.msk [vmem:[%s572 + $0x90] sm:$0xff] %vm736, %v4731
      %4764 = vst.msk [vmem:[%s572 + $0x98] sm:$0xff] %vm736, %v4732
      %4765 = vst.msk [vmem:[%s572 + $0xa0] sm:$0xff] %vm736, %v4733
      %4766 = vst.msk [vmem:[%s572 + $0xa8] sm:$0xff] %vm736, %v4734
      %4767 = vst.msk [vmem:[%s572 + $0xb0] sm:$0xff] %vm736, %v4735
      %4768 = vst.msk [vmem:[%s572 + $0xb8] sm:$0xff] %vm736, %v4736
      %4769 = vst.msk [vmem:[%s572 + $0xc0] sm:$0xff] %vm736, %v4737
      %4770 = vst.msk [vmem:[%s572 + $0xc8] sm:$0xff] %vm736, %v4738
      %4771 = vst.msk [vmem:[%s572 + $0xd0] sm:$0xff] %vm736, %v4739
      %4772 = vst.msk [vmem:[%s572 + $0xd8] sm:$0xff] %vm736, %v4740
      %4773 = vst.msk [vmem:[%s572 + $0xe0] sm:$0xff] %vm736, %v4741
      %4774 = vst.msk [vmem:[%s572 + $0xe8] sm:$0xff] %vm736, %v4742
      %4775 = vst.msk [vmem:[%s572 + $0xf0] sm:$0xff] %vm736, %v4743
      %4776 = vst.msk [vmem:[%s572 + $0xf8] sm:$0xff] %vm736, %v4744
      %s4777 = smul.u32 32, %s28
      %p4778 = scmp.lt.s32.totalorder %s4777, 63
      %s4779 = scalar_select %p4778, %s4777, 63
      %s4780 = smul.addr %s4779, 8
      %s4781 = scalar_lea.vmem %s17, %s4780
      // Predicated region
      $region89: #{tpu_custom_call.1} parent=87 // pred_check
        %p4782 = pneg %p413
      $region90: #{tpu_custom_call.1} parent=87 // pred_check_branch
        %4784 = sbr.rel (%p4782) target = $region92
      $region91: #{tpu_custom_call.1} parent=87 // pred_region
        %s4785 = smul.u32 32, %s28
      $region92: #{tpu_custom_call.1} parent=87 // pred_fallthru
        _
    $region88: #{tpu_custom_call.1} parent=5 // pred_fallthru
      _
    %p4786 = scmp.le.s32.totalorder 2, %s23
    // Predicated region
    $region93: #{tpu_custom_call.1} parent=5 // pred_check
      %p4787 = pneg %p4786
    $region94: #{tpu_custom_call.1} parent=5 // pred_check_branch
      %4789 = sbr.rel (%p4787) target = $region96
    $region95: #{tpu_custom_call.1} parent=5 // pred_region
      %s4790 = ssub.s32 %s23, 2
      // Predicated region
      $region97: #{tpu_custom_call.1} parent=95 // pred_check
        %p4791 = pneg %p419
      $region98: #{tpu_custom_call.1} parent=95 // pred_check_branch
        %4793 = sbr.rel (%p4791) target = $region100
      $region99: #{tpu_custom_call.1} parent=95 // pred_region
        %s4794 = smul.u32 32, %s29
        %p4795 = scmp.lt.s32.totalorder %s4794, 63
        %s4796 = scalar_select %p4795, %s4794, 63
        %s4797 = smul.addr %s4796, 8
        %s4798 = scalar_lea.vmem %s17, %s4797
      $region100: #{tpu_custom_call.1} parent=95 // pred_fallthru
        _
    $region96: #{tpu_custom_call.1} parent=5 // pred_fallthru
      _
  $region6: #{tpu_custom_call.1} parent=0 // loop_footer
    %s27 = sadd.s32 1, %s23
  $region7: #{tpu_custom_call.1} parent=0 // loop_footer_branch
    %22 = sbr.rel target = $region3
  $region8: #{tpu_custom_call.1} parent=0 // loop_exit
    _

</llo_original>
